<compile_context>
chip_gen: v5e
topology: v5e:2x2
jax: 0.10.0
libtpu: 0.0.40
codegen_flags: <defaults>
</compile_context>

<pallas_src>
import functools
import math

import numpy as np
import jax
import jax.numpy as jnp
from jax import lax
from jax.experimental import pallas as pl
from jax.experimental.pallas import tpu as pltpu


WINDOW_SIZE = 11
SIGMA = 1.5

# HIGHEST ~= f32 accuracy via multiple bf16 MXU passes.  Precision.HIGH is
# ~2x faster on the MXU but risks the cancellation-prone sigma terms
# (E[x^2] - mu^2) for val_range=255-scale inputs; HIGHEST is the safe default.
MATMUL_PRECISION = jax.lax.Precision.HIGHEST

# The packed (whole-plane) path is only used while the dense-Toeplitz flop
# overhead stays bounded; bigger planes use the halo'd strip/tile path.
_SMALL_MAX_OH = 128
_SMALL_MAX_OW = 512
_STRIP_TILE_OW = 512


def _round_up(x, m):
    return (x + m - 1) // m * m


def _cdiv(a, b):
    return (a + b - 1) // b


def _divisors(n):
    return [d for d in range(1, n + 1) if n % d == 0]


def _gaussian_1d(window_size, sigma):
    g = np.array(
        [math.exp(-((i - window_size // 2) ** 2) / (2.0 * sigma ** 2))
         for i in range(window_size)],
        dtype=np.float64,
    )
    return (g / g.sum()).astype(np.float32)


def _toeplitz_cols(g1d, in_w, out_w, valid_w):
    """(in_w, out_w) T with (x @ T)[:, o] = VALID 1-D conv along lanes at
    output column o; columns o >= valid_w are zero (lane padding)."""
    ws = g1d.shape[0]
    t = np.zeros((in_w, out_w), dtype=np.float32)
    for o in range(min(out_w, valid_w)):
        t[o:o + ws, o] = g1d
    return t


def _toeplitz_rows(g1d, out_h, in_h):
    """(out_h, in_h) T with (T @ x)[o, :] = VALID 1-D conv along sublanes."""
    ws = g1d.shape[0]
    t = np.zeros((out_h, in_h), dtype=np.float32)
    for o in range(out_h):
        t[o, o:o + ws] = g1d
    return t


def _toeplitz_rows_blockdiag(g1d, H, OH, n_planes):
    th = _toeplitz_rows(g1d, OH, H)
    out = np.zeros((n_planes * OH, n_planes * H), dtype=np.float32)
    for p in range(n_planes):
        out[p * OH:(p + 1) * OH, p * H:(p + 1) * H] = th
    return out


def _dot(a, b):
    return jnp.dot(a, b, preferred_element_type=jnp.float32,
                   precision=MATMUL_PRECISION)


def _vmem_capacity_bytes():
    """Generation-aware VMEM capacity (v5e/v6e: 128 MiB, v7x: 64 MiB/core)."""
    try:
        cap = int(pltpu.get_tpu_info().vmem_capacity_bytes)
        if cap > 0:
            return cap
    except Exception:
        pass
    return 64 << 20  # conservative fallback (v7x per-core VMEM)


# ---------------------------------------------------------------------------
# Packed small-plane path: several (n, c) planes per grid step, whole plane in
# VMEM, both separable-conv passes as single MXU matmuls.
# ---------------------------------------------------------------------------

def _choose_packed_planes(P, H, W, OH, OW, OWp, budget_bytes):
    feas = []
    for np_ in _divisors(P):
        if np_ * H > 256:        # bound block-diag Th waste; keep K in 1 MXU pass
            continue
        R = np_ * H
        M = np_ * OH
        est = 4 * (
            2 * 2 * R * W        # img1/img2 blocks (double-buffered)
            + 3 * R * W          # x*x / y*y / x*y scratch slab
            + 2 * W * OWp        # Tw (double-buffered, constant index_map)
            + 2 * M * R          # block-diag Th (double-buffered)
            + 5 * R * OWp        # lane-pass results
            + 14 * M * OWp       # sublane outputs + SSIM temporaries
        )
        if est <= budget_bytes:
            feas.append(np_)
    if not feas:
        return None
    # Keep >= 2 (ideally an even number of) grid steps so v7x's second
    # TensorCore gets work under the "parallel" grid axis.
    even = [n for n in feas if (P // n) % 2 == 0]
    if even:
        return max(even)
    multi = [n for n in feas if (P // n) >= 2]
    if P >= 2 and multi:
        return max(multi)
    return max(feas)


def _make_packed_kernel(NP, H, W, OH, OW, OWp):
    R = NP * H
    M = NP * OH

    def kernel(c_ref, tw_ref, th_ref, img1_ref, img2_ref, out_ref, prod_ref):
        # c_ref: SMEM f32[2] = [C1, C2]
        # tw_ref: (W, OWp) lane-pass Toeplitz (columns >= OW are zero)
        # th_ref: (NP*OH, NP*H) block-diagonal sublane-pass Toeplitz
        c1 = c_ref[0]
        c2 = c_ref[1]
        tw = tw_ref[...]
        th = th_ref[...]

        x = img1_ref[...].astype(jnp.float32).reshape(R, W)
        y = img2_ref[...].astype(jnp.float32).reshape(R, W)

        # x / y feed the MXU directly; only the products go through scratch.
        prod_ref[0 * R:1 * R, :] = x * x
        prod_ref[1 * R:2 * R, :] = y * y
        prod_ref[2 * R:3 * R, :] = x * y

        lane_x = _dot(x, tw)                    # (R, OWp)
        lane_y = _dot(y, tw)
        lane_p = _dot(prod_ref[...], tw)        # (3*R, OWp)

        mu1 = _dot(th, lane_x)                  # (M, OWp)
        mu2 = _dot(th, lane_y)
        e11 = _dot(th, lane_p[0 * R:1 * R, :])
        e22 = _dot(th, lane_p[1 * R:2 * R, :])
        e12 = _dot(th, lane_p[2 * R:3 * R, :])

        mu1_sq = mu1 * mu1
        mu2_sq = mu2 * mu2
        mu1_mu2 = mu1 * mu2
        v1 = 2.0 * (e12 - mu1_mu2) + c2
        v2 = (e11 - mu1_sq) + (e22 - mu2_sq) + c2
        ssim_map = (2.0 * mu1_mu2 + c1) * v1 / ((mu1_sq + mu2_sq + c1) * v2)

        if OW < OWp:   # padded lane columns would contribute ssim == 1
            col = lax.broadcasted_iota(jnp.int32, (M, OWp), 1)
            ssim_map = jnp.where(col < OW, ssim_map, 0.0)

        out_ref[...] = jnp.sum(ssim_map, keepdims=True)

    return kernel


def _ssim_packed_path(c12, x_planes, y_planes, g1d, H, W, OH, OW, NP,
                      vmem_limit):
    P = x_planes.shape[0]
    OWp = _round_up(OW, 128)
    n_steps = P // NP

    tw = jnp.asarray(_toeplitz_cols(g1d, W, OWp, OW))                # (W, OWp)
    th_blk = jnp.asarray(_toeplitz_rows_blockdiag(g1d, H, OH, NP))   # (NP*OH, NP*H)

    kernel = _make_packed_kernel(NP, H, W, OH, OW, OWp)

    partial = pl.pallas_call(
        kernel,
        out_shape=jax.ShapeDtypeStruct((n_steps, 1, 1), jnp.float32),
        grid_spec=pltpu.PrefetchScalarGridSpec(
            num_scalar_prefetch=0,
            grid=(n_steps,),
            in_specs=[
                pl.BlockSpec(memory_space=pltpu.MemorySpace.SMEM),   # [C1, C2]
                pl.BlockSpec((W, OWp), lambda i: (0, 0)),            # Tw
                pl.BlockSpec((NP * OH, NP * H), lambda i: (0, 0)),   # Th blockdiag
                pl.BlockSpec((NP, H, W), lambda i: (i, 0, 0)),       # img1 planes
                pl.BlockSpec((NP, H, W), lambda i: (i, 0, 0)),       # img2 planes
            ],
            out_specs=pl.BlockSpec((None, 1, 1), lambda i: (i, 0, 0)),
            scratch_shapes=[pltpu.VMEM((3 * NP * H, W), jnp.float32)],
        ),
        compiler_params=pltpu.CompilerParams(
            dimension_semantics=("parallel",),
            vmem_limit_bytes=vmem_limit),
    )(c12, tw, th_blk, x_planes, y_planes)
    return jnp.sum(partial)


# ---------------------------------------------------------------------------
# Halo'd strip/tile path for large planes: grid = (plane, row_strip), manual
# double-buffered DMA of (TILE_OH + 10) input rows, lane pass tiled over
# TILE_OW output columns with a (TILE_OW + 10, TILE_OW) Tw band.
# ---------------------------------------------------------------------------

def _strip_plan(H, W, OH, OW, window_size, budget_bytes, tile_oh, tile_ow):
    halo = window_size - 1
    # --- column tiling (lane pass) ---
    want_tow = tile_ow if tile_ow is not None else _STRIP_TILE_OW
    want_tow = _round_up(max(128, want_tow), 128)
    if OW > want_tow:
        TOW, CT, KW = want_tow, _cdiv(OW, want_tow), want_tow + halo
    else:
        TOW, CT, KW = _round_up(OW, 128), 1, W
    # --- row strips (sublane pass) ---
    if tile_oh is not None:
        TILE_OH = max(1, min(tile_oh, OH))
    else:
        TILE_OH = None
        for cand in (128, 96, 64, 48, 32, 24, 16, 8):
            t = min(cand, OH)
            ih = t + halo
            est = 4 * (
                4 * ih * W                  # double-buffered x/y strip buffers
                + 2 * ih * W                # f32 loads of the active slot
                + 2 * (KW * TOW + t * ih)   # Tw / Th (double-buffered)
                + 2 * ih * KW               # per-tile x/y slices
                + 3 * ih * KW               # product temporaries
                + 5 * ih * TOW              # lane-pass results
                + 14 * t * TOW              # sublane outputs + SSIM temporaries
            )
            if est <= budget_bytes:
                TILE_OH = t
                break
        if TILE_OH is None:
            # TODO(synk): column-strip DMA so extremely wide planes don't force
            # tiny row strips.
            TILE_OH = min(8, OH)
    IH = TILE_OH + halo
    n_strips = _cdiv(OH, TILE_OH)
    return TILE_OH, IH, n_strips, CT, TOW, KW


def _make_strip_kernel(OH, OW, TILE_OH, IH, CT, TOW, KW):
    def kernel(c_ref, tw_ref, th_ref, img1_hbm, img2_hbm, out_ref,
               xbuf, ybuf, sems):
        p = pl.program_id(0)
        s = pl.program_id(1)
        n_s = pl.num_programs(1)
        c1 = c_ref[0]
        c2 = c_ref[1]
        tw = tw_ref[...]        # (KW, TOW)
        th = th_ref[...]        # (TILE_OH, IH)

        def strip_copies(s_, slot_):
            r0 = jnp.minimum(s_ * TILE_OH, OH - TILE_OH)
            return (
                pltpu.make_async_copy(img1_hbm.at[p, pl.ds(r0, IH), :],
                                      xbuf.at[slot_], sems.at[0, slot_]),
                pltpu.make_async_copy(img2_hbm.at[p, pl.ds(r0, IH), :],
                                      ybuf.at[slot_], sems.at[1, slot_]),
            )

        slot = s % 2

        @pl.when(s == 0)                 # prime the per-plane pipeline
        def _():
            for cp in strip_copies(s, slot):
                cp.start()

        for cp in strip_copies(s, slot):  # wait for this strip's rows
            cp.wait()

        @pl.when(s + 1 < n_s)            # prefetch next strip of this plane
        def _():
            for cp in strip_copies(s + 1, 1 - slot):
                cp.start()

        x_full = xbuf[slot].astype(jnp.float32)   # (IH, W)
        y_full = ybuf[slot].astype(jnp.float32)

        # Drop rows already produced by the previous strip (only the clamped
        # last strip of a plane overlaps).
        r0 = jnp.minimum(s * TILE_OH, OH - TILE_OH)
        row_id = r0 + lax.broadcasted_iota(jnp.int32, (TILE_OH, TOW), 0)
        row_ok = row_id >= s * TILE_OH

        acc = jnp.zeros((), jnp.float32)
        for c in range(CT):
            c0 = min(c * TOW, OW - TOW) if CT > 1 else 0
            x_t = x_full[:, c0:c0 + KW]           # (IH, KW)
            y_t = y_full[:, c0:c0 + KW]

            lane_x = _dot(x_t, tw)                # (IH, TOW)
            lane_y = _dot(y_t, tw)
            lane_xx = _dot(x_t * x_t, tw)
            lane_yy = _dot(y_t * y_t, tw)
            lane_xy = _dot(x_t * y_t, tw)

            mu1 = _dot(th, lane_x)                # (TILE_OH, TOW)
            mu2 = _dot(th, lane_y)
            e11 = _dot(th, lane_xx)
            e22 = _dot(th, lane_yy)
            e12 = _dot(th, lane_xy)

            mu1_sq = mu1 * mu1
            mu2_sq = mu2 * mu2
            mu1_mu2 = mu1 * mu2
            v1 = 2.0 * (e12 - mu1_mu2) + c2
            v2 = (e11 - mu1_sq) + (e22 - mu2_sq) + c2
            ssim_map = (2.0 * mu1_mu2 + c1) * v1 / ((mu1_sq + mu2_sq + c1) * v2)

            ok = row_ok
            lo, hi = c * TOW - c0, OW - c0        # static per column tile
            if lo > 0 or hi < TOW:
                col = lax.broadcasted_iota(jnp.int32, (TILE_OH, TOW), 1)
                ok = ok & (col >= lo) & (col < hi)
            acc = acc + jnp.sum(jnp.where(ok, ssim_map, 0.0))

        out_ref[...] = acc.reshape(1, 1)

    return kernel


def _ssim_strip_path(c12, x_planes, y_planes, g1d, H, W, OH, OW, window_size,
                     budget_bytes, vmem_limit, tile_oh, tile_ow):
    P = x_planes.shape[0]
    TILE_OH, IH, n_strips, CT, TOW, KW = _strip_plan(
        H, W, OH, OW, window_size, budget_bytes, tile_oh, tile_ow)

    tw = jnp.asarray(_toeplitz_cols(g1d, KW, TOW, TOW if CT > 1 else OW))
    th = jnp.asarray(_toeplitz_rows(g1d, TILE_OH, IH))

    kernel = _make_strip_kernel(OH, OW, TILE_OH, IH, CT, TOW, KW)

    partial = pl.pallas_call(
        kernel,
        out_shape=jax.ShapeDtypeStruct((P * n_strips, 1, 1), jnp.float32),
        grid_spec=pltpu.PrefetchScalarGridSpec(
            num_scalar_prefetch=0,
            grid=(P, n_strips),
            in_specs=[
                pl.BlockSpec(memory_space=pltpu.MemorySpace.SMEM),    # [C1, C2]
                pl.BlockSpec((KW, TOW), lambda p, s: (0, 0)),         # Tw tile
                pl.BlockSpec((TILE_OH, IH), lambda p, s: (0, 0)),     # Th strip
                pl.BlockSpec(memory_space=pl.ANY),                    # img1 (HBM)
                pl.BlockSpec(memory_space=pl.ANY),                    # img2 (HBM)
            ],
            out_specs=pl.BlockSpec((None, 1, 1),
                                   lambda p, s: (p * n_strips + s, 0, 0)),
            scratch_shapes=[
                pltpu.VMEM((2, IH, W), x_planes.dtype),
                pltpu.VMEM((2, IH, W), y_planes.dtype),
                pltpu.SemaphoreType.DMA((2, 2)),
            ],
        ),
        compiler_params=pltpu.CompilerParams(
            dimension_semantics=("parallel", "arbitrary"),
            vmem_limit_bytes=vmem_limit),
    )(c12, tw, th, x_planes, y_planes)
    return jnp.sum(partial)


# ---------------------------------------------------------------------------
# Public entry point (matches SSIM(window_size=11, size_average=True).forward)
# ---------------------------------------------------------------------------

def ssim_pallas(img1, img2, window_size=WINDOW_SIZE, val_range=None, *,
                tile_oh=None, tile_ow=None, force_strip=False):
    B, C, H, W = img1.shape
    assert H >= window_size and W >= window_size, "plane smaller than window"
    ws = window_size
    P = B * C
    OH = H - ws + 1
    OW = W - ws + 1

    # Data-dependent dynamic range L (same thresholds as the PyTorch code).
    # NOTE: this is an extra HBM pass over img1 before the kernel can start;
    # pass `val_range` explicitly when the dynamic range is known to skip it.
    if val_range is None:
        max_v = jnp.where(jnp.max(img1) > 128, 255.0, 1.0)
        min_v = jnp.where(jnp.min(img1) < -0.5, -1.0, 0.0)
        L = max_v - min_v
    else:
        L = jnp.float32(val_range)
    c1 = (0.01 * L) ** 2
    c2 = (0.03 * L) ** 2
    c12 = jnp.stack([c1, c2]).astype(jnp.float32)

    g1d = _gaussian_1d(ws, SIGMA)
    x_planes = img1.reshape(P, H, W)
    y_planes = img2.reshape(P, H, W)

    # Generation-aware VMEM budgeting (v5e/v6e: 128 MiB, v7x: 64 MiB/core).
    vmem_cap = _vmem_capacity_bytes()
    budget = max(6 << 20, vmem_cap // 4)
    vmem_limit = int(min(max(vmem_cap * 3 // 4, 32 << 20), 112 << 20))

    NP = None
    if (not force_strip) and OH <= _SMALL_MAX_OH and OW <= _SMALL_MAX_OW:
        NP = _choose_packed_planes(P, H, W, OH, OW, _round_up(OW, 128), budget)

    if NP is not None:
        total = _ssim_packed_path(c12, x_planes, y_planes, g1d, H, W, OH, OW,
                                  NP, vmem_limit)
    else:
        total = _ssim_strip_path(c12, x_planes, y_planes, g1d, H, W, OH, OW,
                                 ws, budget, vmem_limit, tile_oh, tile_ow)

    # size_average=True -> mean over all N*C*OH*OW ssim_map elements.
    return total / (P * OH * OW)


# ---------------------------------------------------------------------------
# Pure-JAX reference mirroring the PyTorch grouped-conv implementation.
# ---------------------------------------------------------------------------

def ssim_reference(img1, img2, window_size=WINDOW_SIZE):
    B, C, H, W = img1.shape
    g1d = _gaussian_1d(window_size, SIGMA)
    w2d = np.outer(g1d, g1d).astype(np.float32)
    window = jnp.asarray(
        np.broadcast_to(w2d, (C, 1, window_size, window_size)).copy())

    def conv(x):
        return jax.lax.conv_general_dilated(
            x, window, (1, 1), "VALID",
            dimension_numbers=("NCHW", "OIHW", "NCHW"),
            feature_group_count=C,
            precision=jax.lax.Precision.HIGHEST)

    max_v = jnp.where(jnp.max(img1) > 128, 255.0, 1.0)
    min_v = jnp.where(jnp.min(img1) < -0.5, -1.0, 0.0)
    L = max_v - min_v
    c1 = (0.01 * L) ** 2
    c2 = (0.03 * L) ** 2

    mu1 = conv(img1)
    mu2 = conv(img2)
    mu1_sq, mu2_sq, mu1_mu2 = mu1 * mu1, mu2 * mu2, mu1 * mu2
    s1 = conv(img1 * img1) - mu1_sq
    s2 = conv(img2 * img2) - mu2_sq
    s12 = conv(img1 * img2) - mu1_mu2
    v1 = 2.0 * s12 + c2
    v2 = s1 + s2 + c2
    ssim_map = (2.0 * mu1_mu2 + c1) * v1 / ((mu1_sq + mu2_sq + c1) * v2)
    return jnp.mean(ssim_map)


if __name__ == "__main__":
    key = jax.random.PRNGKey(0)
    k1, k2, k3, k4 = jax.random.split(key, 4)

    # Test 1: packed small-plane path (matches the module's example scale).
    shape = (2, 4, 16, 16)  # N, C, H, W
    a1 = jax.random.normal(k1, shape, dtype=jnp.float32)
    a2 = a1 + 0.1 * jax.random.normal(k2, shape, dtype=jnp.float32)
    out1 = jax.block_until_ready(jax.jit(ssim_pallas)(a1, a2))
    ref1 = ssim_reference(a1, a2)
    assert jnp.allclose(out1, ref1, atol=1e-4, rtol=1e-3), (out1, ref1)

    # Test 2: exercise the halo'd row-strip + column-tile path (forced tiny
    # tiles so the strip DMA, clamped last strip and last column tile masks
    # are all covered at a small, fast shape).
    shape2 = (1, 2, 48, 176)
    b1 = jax.random.normal(k3, shape2, dtype=jnp.float32)
    b2 = b1 + 0.05 * jax.random.normal(k4, shape2, dtype=jnp.float32)
    strip_fn = jax.jit(functools.partial(
        ssim_pallas, force_strip=True, tile_oh=16, tile_ow=128))
    out2 = jax.block_until_ready(strip_fn(b1, b2))
    ref2 = ssim_reference(b1, b2)
    assert jnp.allclose(out2, ref2, atol=1e-4, rtol=1e-3), (out2, ref2)

    print("KERNEL_OK")
</pallas_src>

<mosaic_0001>
module attributes {stable_mosaic.version = 11 : i64} {
  func.func @kernel(%arg0: i32, %arg1: memref<2xf32, #tpu.memory_space<smem>>, %arg2: memref<16x128xf32, #tpu.memory_space<vmem>>, %arg3: memref<24x64xf32, #tpu.memory_space<vmem>>, %arg4: memref<4x16x16xf32, #tpu.memory_space<vmem>>, %arg5: memref<4x16x16xf32, #tpu.memory_space<vmem>>, %arg6: memref<1x1x1xf32, #tpu.memory_space<vmem>>, %arg7: memref<192x16xf32, #tpu.memory_space<vmem>>) attributes {dimension_semantics = [#tpu.dimension_semantics<parallel>], iteration_bounds = array<i64: 2>, scalar_prefetch = 0 : i64, scratch_operands = 1 : i64, tpu.core_type = #tpu.core_type<tc>, window_params = [{transform_indices = @transform_0, window_bounds = array<i64: 2>}, {pipeline_mode = #tpu.pipeline_mode<synchronous>, transform_indices = @transform_1, window_bounds = array<i64: 16, 128>}, {pipeline_mode = #tpu.pipeline_mode<synchronous>, transform_indices = @transform_2, window_bounds = array<i64: 24, 64>}, {transform_indices = @transform_3, window_bounds = array<i64: 4, 16, 16>}, {transform_indices = @transform_4, window_bounds = array<i64: 4, 16, 16>}, {transform_indices = @transform_5, window_bounds = array<i64: 1, 1, 1>}]} {
    %c0 = arith.constant 0 : index
    %0 = memref.load %arg1[%c0] : memref<2xf32, #tpu.memory_space<smem>>
    %c1 = arith.constant 1 : index
    %1 = memref.load %arg1[%c1] : memref<2xf32, #tpu.memory_space<smem>>
    %c0_0 = arith.constant 0 : index
    %c0_1 = arith.constant 0 : index
    %2 = vector.load %arg2[%c0_0, %c0_1] : memref<16x128xf32, #tpu.memory_space<vmem>>, vector<16x128xf32>
    %c0_2 = arith.constant 0 : index
    %c0_3 = arith.constant 0 : index
    %3 = vector.load %arg3[%c0_2, %c0_3] : memref<24x64xf32, #tpu.memory_space<vmem>>, vector<24x64xf32>
    %c0_4 = arith.constant 0 : index
    %c0_5 = arith.constant 0 : index
    %c0_6 = arith.constant 0 : index
    %4 = vector.load %arg4[%c0_4, %c0_5, %c0_6] : memref<4x16x16xf32, #tpu.memory_space<vmem>>, vector<4x16x16xf32>
    %5 = vector.shape_cast %4 : vector<4x16x16xf32> to vector<64x16xf32>
    %c0_7 = arith.constant 0 : index
    %c0_8 = arith.constant 0 : index
    %c0_9 = arith.constant 0 : index
    %6 = vector.load %arg5[%c0_7, %c0_8, %c0_9] : memref<4x16x16xf32, #tpu.memory_space<vmem>>, vector<4x16x16xf32>
    %7 = vector.shape_cast %6 : vector<4x16x16xf32> to vector<64x16xf32>
    %8 = arith.mulf %5, %5 : vector<64x16xf32>
    %c0_10 = arith.constant 0 : index
    %c0_11 = arith.constant 0 : index
    %9 = vector.load %arg7[%c0_10, %c0_11] : memref<192x16xf32, #tpu.memory_space<vmem>>, vector<64x16xf32>
    tpu.vector_store %arg7[%c0_10, %c0_11], %8 {strides = array<i32>} : memref<192x16xf32, #tpu.memory_space<vmem>>, vector<64x16xf32>,
    %10 = arith.mulf %7, %7 : vector<64x16xf32>
    %c64 = arith.constant 64 : index
    %c0_12 = arith.constant 0 : index
    %11 = vector.load %arg7[%c64, %c0_12] : memref<192x16xf32, #tpu.memory_space<vmem>>, vector<64x16xf32>
    tpu.vector_store %arg7[%c64, %c0_12], %10 {strides = array<i32>} : memref<192x16xf32, #tpu.memory_space<vmem>>, vector<64x16xf32>,
    %12 = arith.mulf %5, %7 : vector<64x16xf32>
    %c128 = arith.constant 128 : index
    %c0_13 = arith.constant 0 : index
    %13 = vector.load %arg7[%c128, %c0_13] : memref<192x16xf32, #tpu.memory_space<vmem>>, vector<64x16xf32>
    tpu.vector_store %arg7[%c128, %c0_13], %12 {strides = array<i32>} : memref<192x16xf32, #tpu.memory_space<vmem>>, vector<64x16xf32>,
    %cst = arith.constant dense<0.000000e+00> : vector<64x128xf32>
    %14 = tpu.matmul %5, %2, %cst {dimension_numbers = #tpu.dot_dimension_numbers<[1], [0], [0], [1], [0, 0, 1, 1], [], []>, precision = #tpu.contract_precision<fp32>} : vector<64x16xf32>, vector<16x128xf32>, vector<64x128xf32> -> vector<64x128xf32>
    %cst_14 = arith.constant dense<0.000000e+00> : vector<64x128xf32>
    %15 = tpu.matmul %7, %2, %cst_14 {dimension_numbers = #tpu.dot_dimension_numbers<[1], [0], [0], [1], [0, 0, 1, 1], [], []>, precision = #tpu.contract_precision<fp32>} : vector<64x16xf32>, vector<16x128xf32>, vector<64x128xf32> -> vector<64x128xf32>
    %c0_15 = arith.constant 0 : index
    %c0_16 = arith.constant 0 : index
    %16 = vector.load %arg7[%c0_15, %c0_16] : memref<192x16xf32, #tpu.memory_space<vmem>>, vector<192x16xf32>
    %cst_17 = arith.constant dense<0.000000e+00> : vector<192x128xf32>
    %17 = tpu.matmul %16, %2, %cst_17 {dimension_numbers = #tpu.dot_dimension_numbers<[1], [0], [0], [1], [0, 0, 1, 1], [], []>, precision = #tpu.contract_precision<fp32>} : vector<192x16xf32>, vector<16x128xf32>, vector<192x128xf32> -> vector<192x128xf32>
    %cst_18 = arith.constant dense<0.000000e+00> : vector<24x128xf32>
    %18 = tpu.matmul %3, %14, %cst_18 {dimension_numbers = #tpu.dot_dimension_numbers<[1], [0], [0], [1], [0, 0, 1, 1], [], []>, precision = #tpu.contract_precision<fp32>} : vector<24x64xf32>, vector<64x128xf32>, vector<24x128xf32> -> vector<24x128xf32>
    %cst_19 = arith.constant dense<0.000000e+00> : vector<24x128xf32>
    %19 = tpu.matmul %3, %15, %cst_19 {dimension_numbers = #tpu.dot_dimension_numbers<[1], [0], [0], [1], [0, 0, 1, 1], [], []>, precision = #tpu.contract_precision<fp32>} : vector<24x64xf32>, vector<64x128xf32>, vector<24x128xf32> -> vector<24x128xf32>
    %20 = vector.extract_strided_slice %17 {offsets = [0, 0], sizes = [64, 128], strides = [1, 1]} : vector<192x128xf32> to vector<64x128xf32>
    %cst_20 = arith.constant dense<0.000000e+00> : vector<24x128xf32>
    %21 = tpu.matmul %3, %20, %cst_20 {dimension_numbers = #tpu.dot_dimension_numbers<[1], [0], [0], [1], [0, 0, 1, 1], [], []>, precision = #tpu.contract_precision<fp32>} : vector<24x64xf32>, vector<64x128xf32>, vector<24x128xf32> -> vector<24x128xf32>
    %22 = vector.extract_strided_slice %17 {offsets = [64, 0], sizes = [64, 128], strides = [1, 1]} : vector<192x128xf32> to vector<64x128xf32>
    %cst_21 = arith.constant dense<0.000000e+00> : vector<24x128xf32>
    %23 = tpu.matmul %3, %22, %cst_21 {dimension_numbers = #tpu.dot_dimension_numbers<[1], [0], [0], [1], [0, 0, 1, 1], [], []>, precision = #tpu.contract_precision<fp32>} : vector<24x64xf32>, vector<64x128xf32>, vector<24x128xf32> -> vector<24x128xf32>
    %24 = vector.extract_strided_slice %17 {offsets = [128, 0], sizes = [64, 128], strides = [1, 1]} : vector<192x128xf32> to vector<64x128xf32>
    %cst_22 = arith.constant dense<0.000000e+00> : vector<24x128xf32>
    %25 = tpu.matmul %3, %24, %cst_22 {dimension_numbers = #tpu.dot_dimension_numbers<[1], [0], [0], [1], [0, 0, 1, 1], [], []>, precision = #tpu.contract_precision<fp32>} : vector<24x64xf32>, vector<64x128xf32>, vector<24x128xf32> -> vector<24x128xf32>
    %26 = arith.mulf %18, %18 : vector<24x128xf32>
    %27 = arith.mulf %19, %19 : vector<24x128xf32>
    %28 = arith.mulf %18, %19 : vector<24x128xf32>
    %29 = arith.subf %25, %28 : vector<24x128xf32>
    %cst_23 = arith.constant 2.000000e+00 : f32
    %30 = vector.broadcast %cst_23 : f32 to vector<24x128xf32>
    %31 = arith.mulf %30, %29 : vector<24x128xf32>
    %32 = vector.broadcast %1 : f32 to vector<24x128xf32>
    %33 = arith.addf %31, %32 : vector<24x128xf32>
    %34 = arith.subf %21, %26 : vector<24x128xf32>
    %35 = arith.subf %23, %27 : vector<24x128xf32>
    %36 = arith.addf %34, %35 : vector<24x128xf32>
    %37 = vector.broadcast %1 : f32 to vector<24x128xf32>
    %38 = arith.addf %36, %37 : vector<24x128xf32>
    %cst_24 = arith.constant 2.000000e+00 : f32
    %39 = vector.broadcast %cst_24 : f32 to vector<24x128xf32>
    %40 = arith.mulf %39, %28 : vector<24x128xf32>
    %41 = vector.broadcast %0 : f32 to vector<24x128xf32>
    %42 = arith.addf %40, %41 : vector<24x128xf32>
    %43 = arith.mulf %42, %33 : vector<24x128xf32>
    %44 = arith.addf %26, %27 : vector<24x128xf32>
    %45 = vector.broadcast %0 : f32 to vector<24x128xf32>
    %46 = arith.addf %44, %45 : vector<24x128xf32>
    %47 = arith.mulf %46, %38 : vector<24x128xf32>
    %48 = arith.divf %43, %47 : vector<24x128xf32>
    %49 = tpu.iota {dimensions = array<i32: 1>} : vector<24x128xi32>
    %c6_i32 = arith.constant 6 : i32
    %50 = vector.broadcast %c6_i32 : i32 to vector<24x128xi32>
    %51 = arith.cmpi slt, %49, %50 : vector<24x128xi32>
    %cst_25 = arith.constant 0.000000e+00 : f32
    %52 = vector.broadcast %cst_25 : f32 to vector<24x128xf32>
    %53 = arith.select %51, %48, %52 : vector<24x128xi1>, vector<24x128xf32>
    %54 = vector.shape_cast %53 : vector<24x128xf32> to vector<1x24x128xf32>
    %cst_26 = arith.constant dense<0.000000e+00> : vector<1xf32>
    %55 = vector.multi_reduction <add>, %54, %cst_26 [1, 2] : vector<1x24x128xf32> to vector<1xf32>
    %56 = vector.shape_cast %55 : vector<1xf32> to vector<1x1x1xf32>
    %57 = vector.extract %56[0, 0, 0] : f32 from vector<1x1x1xf32>
    %58 = vector.broadcast %57 : f32 to vector<1x1xf32>
    %c0_27 = arith.constant 0 : index
    %c0_28 = arith.constant 0 : index
    %c0_29 = arith.constant 0 : index
    %59 = vector.load %arg6[%c0_27, %c0_28, %c0_29] : memref<1x1x1xf32, #tpu.memory_space<vmem>>, vector<1x1x1xf32>
    %60 = vector.shape_cast %59 : vector<1x1x1xf32> to vector<1x1xf32>
    %61 = vector.shape_cast %58 : vector<1x1xf32> to vector<1x1x1xf32>
    tpu.vector_store %arg6[%c0_27, %c0_28, %c0_29], %61 {strides = array<i32>} : memref<1x1x1xf32, #tpu.memory_space<vmem>>, vector<1x1x1xf32>,
    return
  }
  func.func @transform_0(%arg0: i32) -> i32 {
    %c0_i32 = arith.constant 0 : i32
    %c0_i32_0 = arith.constant 0 : i32
    return %c0_i32 : i32
  }
  func.func @transform_1(%arg0: i32) -> (i32, i32) {
    %c0_i32 = arith.constant 0 : i32
    %c0_i32_0 = arith.constant 0 : i32
    %c0_i32_1 = arith.constant 0 : i32
    return %c0_i32, %c0_i32_0 : i32, i32
  }
  func.func @transform_2(%arg0: i32) -> (i32, i32) {
    %c0_i32 = arith.constant 0 : i32
    %c0_i32_0 = arith.constant 0 : i32
    %c0_i32_1 = arith.constant 0 : i32
    return %c0_i32, %c0_i32_0 : i32, i32
  }
  func.func @transform_3(%arg0: i32) -> (i32, i32, i32) {
    %c0_i32 = arith.constant 0 : i32
    %c0_i32_0 = arith.constant 0 : i32
    %c0_i32_1 = arith.constant 0 : i32
    return %arg0, %c0_i32, %c0_i32_0 : i32, i32, i32
  }
  func.func @transform_4(%arg0: i32) -> (i32, i32, i32) {
    %c0_i32 = arith.constant 0 : i32
    %c0_i32_0 = arith.constant 0 : i32
    %c0_i32_1 = arith.constant 0 : i32
    return %arg0, %c0_i32, %c0_i32_0 : i32, i32, i32
  }
  func.func @transform_5(%arg0: i32) -> (i32, i32, i32) {
    %c0_i32 = arith.constant 0 : i32
    %c0_i32_0 = arith.constant 0 : i32
    %c0_i32_1 = arith.constant 0 : i32
    return %arg0, %c0_i32, %c0_i32_0 : i32, i32, i32
  }
}

</mosaic_0001>

<llo_original>
// kernel: ssim_pallas.1
$region0: #{ssim_pallas.1}
  #allocation0 [shape = 'u32[]', space=smem, size = 0x4, offset = 0x4, fixed_abs, tag = 'smem constant byte address 0x4 - core index']
  #allocation1 [shape = 'u32[72,128]{1,0:T(1,128)}', space=vmem, size = 0x9000, scoped, tag = 'internal scratch']
  #allocation2 [shape = 'f32[192,16]{1,0:T(8,128)}', space=vmem, size = 0x18000, scoped, tag = 'scratch operand']
  %s0 = inlined_call_operand.vmem [shape: f32[2], index: 0, kind: input, shape index: {}]
  %s1 = inlined_call_operand.hbm [shape: f32[16,128], index: 1, kind: input, shape index: {}]
  %s2 = inlined_call_operand.vmem [shape: f32[24,64], index: 2, kind: input, shape index: {}]
  %s3 = inlined_call_operand.vmem [shape: f32[8,16,16], index: 3, kind: input, shape index: {}]
  %s4 = inlined_call_operand.hbm [shape: f32[8,16,16], index: 4, kind: input, shape index: {}]
  %s5 = inlined_call_operand.vmem [shape: f32[2,1,1], index: 5, kind: output, shape index: {}]
  %s6 = sld [smem:[#allocation0]]
  $region65: #{ssim_pallas.1} parent=0
    _
  %s8 = ssub.s32 1, %s6
  %s9 = scalar_select 0, %s8, %s6
  $region1: #{ssim_pallas.1} parent=0
    #allocation3 [shape = 'u8[512]{0}', space=smem, size = 0x200, scoped, tag = 'input window, operand 0, single buffered']
    #allocation4 [shape = 's32[2]{0}', space=sflag, size = 0x8, scoped, tag = 'scoped memory for ssim_pallas.1']
    #allocation5 [shape = 's32[2]{0}', space=sflag, size = 0x8, scoped, tag = 'scoped memory for ssim_pallas.1']
    #allocation6 [shape = 'u8[8192]{0}', space=vmem, size = 0x2000, scoped, tag = 'input window, operand 1, single buffered']
    #allocation7 [shape = 'u8[65536]{0}', space=vmem, size = 0x10000, scoped, tag = 'input window, operand 4']
    #allocation8 [shape = 's32[2]{0}', space=sflag, size = 0x8, scoped, tag = 'scoped memory for ssim_pallas.1']
    %10 = vsyncpa [#allocation5], 0
    %11 = vsyncpa [#allocation4], 0
    %12 = vsyncpa [#allocation8], 0
    %s13 = scalar_lea.sflag [#allocation8], 1
    %14 = vsyncpa %s13, 0
    loop: start=0, step=1, limit=4
    $region2: #{ssim_pallas.1} parent=1 // loop_pre_header
      _
    $region3: #{ssim_pallas.1} parent=1 // loop_header
      %s16 = sphi 0, %s20
      %p17 = scmp.ge.s32.totalorder %s16, 4
      %s24 = sphi 0, %s24
      %s26 = sphi 0, %s24
      %s27 = sphi 0, %s26
      %s41 = sphi 0, %s27
      %s45 = sphi 0, %s45
      %s47 = sphi 0, %s45
      %s48 = sphi 0, %s47
      %s62 = sphi 0, %s48
      %s66 = sphi 0, %s66
      %s68 = sphi 0, %s66
      %s69 = sphi 0, %s68
      %s83 = sphi 0, %s69
      %s89 = sphi 0, %s91
      %s92 = sphi 0, %s89
      %s93 = sphi 0, %s92
      %s109 = sphi 0, %s93
      %s115 = sphi 0, %s117
      %s118 = sphi 0, %s115
      %s119 = sphi 0, %s118
      %s135 = sphi 0, %s119
      %s141 = sphi 0, %s143
      %s144 = sphi 0, %s141
      %s145 = sphi 0, %s144
      %s161 = sphi 0, %s145
    $region4: #{ssim_pallas.1} parent=1 // loop_header_branch
      %19 = sbr.rel (%p17) target = $region8
    $region5: #{ssim_pallas.1} parent=1 // loop_body
      %s21 = ssub.s32 %s16, 1
      %s22 = ssub.s32 %s16, 2
      %s23 = sadd.s32 %s16, 1
      %s25 = sadd.s32 %s24, 1
      %p28 = scmp.eq.s32.totalorder %s16, 1
      %p29 = scmp.ne.s32.totalorder %s24, %s26
      %p30 = scmp.eq.s32.totalorder %s16, 0
      %p31 = por %p29, %p30
      %p32 = scmp.ne.s32.totalorder %s24, %s26
      %p33 = scmp.eq.s32.totalorder %s21, 1
      %p34 = por %p32, %p33
      %p35 = scmp.ne.s32.totalorder %s26, %s27
      %p36 = scmp.eq.s32.totalorder %s21, 0
      %p37 = por %p35, %p36
      %p38 = scmp.ne.s32.totalorder %s26, %s27
      %p39 = scmp.eq.s32.totalorder %s22, 1
      %p40 = por %p38, %p39
      %p42 = scmp.ne.s32.totalorder %s27, %s41
      %p43 = scmp.eq.s32.totalorder %s22, 0
      %p44 = por %p42, %p43
      %s46 = sadd.s32 %s45, 1
      %p49 = scmp.eq.s32.totalorder %s16, 1
      %p50 = scmp.ne.s32.totalorder %s45, %s47
      %p51 = scmp.eq.s32.totalorder %s16, 0
      %p52 = por %p50, %p51
      %p53 = scmp.ne.s32.totalorder %s45, %s47
      %p54 = scmp.eq.s32.totalorder %s21, 1
      %p55 = por %p53, %p54
      %p56 = scmp.ne.s32.totalorder %s47, %s48
      %p57 = scmp.eq.s32.totalorder %s21, 0
      %p58 = por %p56, %p57
      %p59 = scmp.ne.s32.totalorder %s47, %s48
      %p60 = scmp.eq.s32.totalorder %s22, 1
      %p61 = por %p59, %p60
      %p63 = scmp.ne.s32.totalorder %s48, %s62
      %p64 = scmp.eq.s32.totalorder %s22, 0
      %p65 = por %p63, %p64
      %s67 = sadd.s32 %s66, 1
      %p70 = scmp.eq.s32.totalorder %s16, 1
      %p71 = scmp.ne.s32.totalorder %s66, %s68
      %p72 = scmp.eq.s32.totalorder %s16, 0
      %p73 = por %p71, %p72
      %p74 = scmp.ne.s32.totalorder %s66, %s68
      %p75 = scmp.eq.s32.totalorder %s21, 1
      %p76 = por %p74, %p75
      %p77 = scmp.ne.s32.totalorder %s68, %s69
      %p78 = scmp.eq.s32.totalorder %s21, 0
      %p79 = por %p77, %p78
      %p80 = scmp.ne.s32.totalorder %s68, %s69
      %p81 = scmp.eq.s32.totalorder %s22, 1
      %p82 = por %p80, %p81
      %p84 = scmp.ne.s32.totalorder %s69, %s83
      %p85 = scmp.eq.s32.totalorder %s22, 0
      %p86 = por %p84, %p85
      %s87 = ssub.s32 %s16, %s23
      %p88 = scmp.eq.s32.totalorder %s87, 0
      %s90 = sadd.s32 %s89, 1
      %s91 = scalar_select %p88, %s89, %s90
      %p94 = pneg %p88
      %p95 = scmp.eq.s32.totalorder %s16, 1
      %p96 = por %p94, %p95
      %p97 = scmp.ne.s32.totalorder %s89, %s92
      %p98 = scmp.eq.s32.totalorder %s16, 0
      %p99 = por %p97, %p98
      %p100 = scmp.ne.s32.totalorder %s89, %s92
      %p101 = scmp.eq.s32.totalorder %s21, 1
      %p102 = por %p100, %p101
      %p103 = scmp.ne.s32.totalorder %s92, %s93
      %p104 = scmp.eq.s32.totalorder %s21, 0
      %p105 = por %p103, %p104
      %p106 = scmp.ne.s32.totalorder %s92, %s93
      %p107 = scmp.eq.s32.totalorder %s22, 1
      %p108 = por %p106, %p107
      %p110 = scmp.ne.s32.totalorder %s93, %s109
      %p111 = scmp.eq.s32.totalorder %s22, 0
      %p112 = por %p110, %p111
      %s113 = ssub.s32 %s16, %s23
      %p114 = scmp.eq.s32.totalorder %s113, 0
      %s116 = sadd.s32 %s115, 1
      %s117 = scalar_select %p114, %s115, %s116
      %p120 = pneg %p114
      %p121 = scmp.eq.s32.totalorder %s16, 1
      %p122 = por %p120, %p121
      %p123 = scmp.ne.s32.totalorder %s115, %s118
      %p124 = scmp.eq.s32.totalorder %s16, 0
      %p125 = por %p123, %p124
      %p126 = scmp.ne.s32.totalorder %s115, %s118
      %p127 = scmp.eq.s32.totalorder %s21, 1
      %p128 = por %p126, %p127
      %p129 = scmp.ne.s32.totalorder %s118, %s119
      %p130 = scmp.eq.s32.totalorder %s21, 0
      %p131 = por %p129, %p130
      %p132 = scmp.ne.s32.totalorder %s118, %s119
      %p133 = scmp.eq.s32.totalorder %s22, 1
      %p134 = por %p132, %p133
      %p136 = scmp.ne.s32.totalorder %s119, %s135
      %p137 = scmp.eq.s32.totalorder %s22, 0
      %p138 = por %p136, %p137
      %s139 = ssub.s32 %s16, %s23
      %p140 = scmp.eq.s32.totalorder %s139, 0
      %s142 = sadd.s32 %s141, 1
      %s143 = scalar_select %p140, %s141, %s142
      %p146 = pneg %p140
      %p147 = scmp.eq.s32.totalorder %s16, 1
      %p148 = por %p146, %p147
      %p149 = scmp.ne.s32.totalorder %s141, %s144
      %p150 = scmp.eq.s32.totalorder %s16, 0
      %p151 = por %p149, %p150
      %p152 = scmp.ne.s32.totalorder %s141, %s144
      %p153 = scmp.eq.s32.totalorder %s21, 1
      %p154 = por %p152, %p153
      %p155 = scmp.ne.s32.totalorder %s144, %s145
      %p156 = scmp.eq.s32.totalorder %s21, 0
      %p157 = por %p155, %p156
      %p158 = scmp.ne.s32.totalorder %s144, %s145
      %p159 = scmp.eq.s32.totalorder %s22, 1
      %p160 = por %p158, %p159
      %p162 = scmp.ne.s32.totalorder %s145, %s161
      %p163 = scmp.eq.s32.totalorder %s22, 0
      %p164 = por %p162, %p163
      %p165 = scmp.le.s32.totalorder 1, %s16
      %p166 = scmp.lt.s32.totalorder %s16, 3
      %p167 = pnand %p165, %p166
      %p168 = pneg %p167
      // Predicated region
      $region9: #{ssim_pallas.1} parent=5 // pred_check
        _
      $region10: #{ssim_pallas.1} parent=5 // pred_check_branch
        %170 = sbr.rel (%p167) target = $region12
      $region11: #{ssim_pallas.1} parent=5 // pred_region
        %s171 = ssub.s32 %s16, 1
        // Predicated region
        $region13: #{ssim_pallas.1} parent=11 // pred_check
          %p172 = pneg %p37
        $region14: #{ssim_pallas.1} parent=11 // pred_check_branch
          %174 = sbr.rel (%p172) target = $region16
        $region15: #{ssim_pallas.1} parent=11 // pred_region
          %176 = vsyncadd [#allocation5], 0
          %s178 = sshll.u32 %s0, 4
          %s179 = int_to_ptr.vmem [resolvable:$true] %s178
          %181 = dma.vmem_to_smem %s179, 16, [#allocation3], [#allocation5]
        $region16: #{ssim_pallas.1} parent=11 // pred_fallthru
          _
        // Predicated region
        $region17: #{ssim_pallas.1} parent=11 // pred_check
          %p182 = pneg %p58
        $region18: #{ssim_pallas.1} parent=11 // pred_check_branch
          %184 = sbr.rel (%p182) target = $region20
        $region19: #{ssim_pallas.1} parent=11 // pred_region
          %186 = vsyncadd [#allocation4], 0
          %s187 = sshll.u32 %s1, 4
          %s188 = int_to_ptr.hbm [resolvable:$true] %s187
          %s189 = sshll.u32 [#allocation6], 4
          %s190 = int_to_ptr.vmem [resolvable:$true] %s189
          %195 = dma.hbm_to_vmem [thread:$0]  %s188, 256, %s190, [#allocation4], 128, 128, 8
        $region20: #{ssim_pallas.1} parent=11 // pred_fallthru
          _
        // Predicated region
        $region21: #{ssim_pallas.1} parent=11 // pred_check
          %p196 = pneg %p79
        $region22: #{ssim_pallas.1} parent=11 // pred_check_branch
          %198 = sbr.rel (%p196) target = $region24
        $region23: #{ssim_pallas.1} parent=11 // pred_region
          _
        $region24: #{ssim_pallas.1} parent=11 // pred_fallthru
          _
      $region12: #{ssim_pallas.1} parent=5 // pred_fallthru
        _
      %p199 = scmp.lt.s32.totalorder %s16, 2
      // Predicated region
      $region25: #{ssim_pallas.1} parent=5 // pred_check
        %p200 = pneg %p199
      $region26: #{ssim_pallas.1} parent=5 // pred_check_branch
        %202 = sbr.rel (%p200) target = $region28
      $region27: #{ssim_pallas.1} parent=5 // pred_region
        // Predicated region
        $region29: #{ssim_pallas.1} parent=27 // pred_check
          %p203 = pneg %p99
        $region30: #{ssim_pallas.1} parent=27 // pred_check_branch
          %205 = sbr.rel (%p203) target = $region32
        $region31: #{ssim_pallas.1} parent=27 // pred_region
          %s206 = smul.u32 4, %s16
          %p207 = scmp.lt.s32.totalorder %s206, 7
          %s208 = scalar_select %p207, %s206, 7
          %s209 = smul.addr %s208, 2
          %s210 = smul.addr %s209, 8
          %s211 = scalar_lea.vmem %s3, %s210
          %s212 = smul.u32 4, %s16
        $region32: #{ssim_pallas.1} parent=27 // pred_fallthru
          _
        // Predicated region
        $region33: #{ssim_pallas.1} parent=27 // pred_check
          %p213 = pneg %p125
        $region34: #{ssim_pallas.1} parent=27 // pred_check_branch
          %215 = sbr.rel (%p213) target = $region36
        $region35: #{ssim_pallas.1} parent=27 // pred_region
          %s216 = sand.u32 %s115, 1
          %s217 = scalar_lea.sflag [#allocation8], %s216
          %s218 = sand.u32 %s115, 1
          %s219 = smul.addr %s218, 64
          %s220 = scalar_lea.vmem [#allocation7], %s219
          %s221 = smul.u32 4, %s16
          %223 = vsyncadd %s217, 0
          %s224 = smul.addr %s221, 2
          %s225 = smul.addr %s224, 8
          %s226 = scalar_lea.hbm %s4, %s225
          %s227 = sshll.u32 %s226, 4
          %s228 = int_to_ptr.hbm [resolvable:$true] %s227
          %s229 = sshll.u32 %s220, 4
          %s230 = int_to_ptr.vmem [resolvable:$true] %s229
          %235 = dma.hbm_to_vmem [thread:$0]  %s228, 1024, %s230, %s217, 128, 128, 8
        $region36: #{ssim_pallas.1} parent=27 // pred_fallthru
          _
      $region28: #{ssim_pallas.1} parent=5 // pred_fallthru
        _
      %p236 = scmp.le.s32.totalorder 1, %s16
      %p237 = scmp.lt.s32.totalorder %s16, 3
      %p238 = pnand %p236, %p237
      %p239 = pneg %p238
      // Predicated region
      $region37: #{ssim_pallas.1} parent=5 // pred_check
        _
      $region38: #{ssim_pallas.1} parent=5 // pred_check_branch
        %241 = sbr.rel (%p238) target = $region40
      $region39: #{ssim_pallas.1} parent=5 // pred_region
        %s242 = ssub.s32 %s16, 1
        // Predicated region
        $region41: #{ssim_pallas.1} parent=39 // pred_check
          %p243 = pneg %p37
        $region42: #{ssim_pallas.1} parent=39 // pred_check_branch
          %245 = sbr.rel (%p243) target = $region44
        $region43: #{ssim_pallas.1} parent=39 // pred_region
          %247 = dma.done [#allocation5], 16
        $region44: #{ssim_pallas.1} parent=39 // pred_fallthru
          _
        // Predicated region
        $region45: #{ssim_pallas.1} parent=39 // pred_check
          %p248 = pneg %p58
        $region46: #{ssim_pallas.1} parent=39 // pred_check_branch
          %250 = sbr.rel (%p248) target = $region48
        $region47: #{ssim_pallas.1} parent=39 // pred_region
          %252 = dma.done [#allocation4], 256
        $region48: #{ssim_pallas.1} parent=39 // pred_fallthru
          _
        %s253 = sand.u32 %s118, 1
        %s254 = scalar_lea.sflag [#allocation8], %s253
        %s255 = sand.u32 %s118, 1
        %s256 = smul.addr %s255, 64
        %s257 = scalar_lea.vmem [#allocation7], %s256
        // Predicated region
        $region49: #{ssim_pallas.1} parent=39 // pred_check
          %p258 = pneg %p131
        $region50: #{ssim_pallas.1} parent=39 // pred_check_branch
          %260 = sbr.rel (%p258) target = $region52
        $region51: #{ssim_pallas.1} parent=39 // pred_region
          %262 = dma.done %s254, 1024
        $region52: #{ssim_pallas.1} parent=39 // pred_fallthru
          _
        %263 = sfence
        %p264 = pneg %p37
        %p265 = pneg %p34
        %p266 = pneg %p58
        %p267 = pneg %p55
        %p268 = pneg %p79
        %p269 = pneg %p76
        %s270 = smul.u32 4, %s21
        %p271 = scmp.lt.s32.totalorder %s270, 7
        %s272 = scalar_select %p271, %s270, 7
        %s273 = smul.addr %s272, 2
        %s274 = smul.addr %s273, 8
        %s275 = scalar_lea.vmem %s3, %s274
        %p276 = pneg %p105
        %p277 = pneg %p102
        %s278 = sand.u32 %s118, 1
        %s279 = scalar_lea.sflag [#allocation8], %s278
        %s280 = sand.u32 %s118, 1
        %s281 = smul.addr %s280, 64
        %s282 = scalar_lea.vmem [#allocation7], %s281
        %p283 = pneg %p131
        %p284 = pneg %p128
        %p285 = pneg %p157
        %p286 = pneg %p154
        %p287 = scmp.lt.s32.totalorder %s21, 1
        %s288 = scalar_select %p287, %s21, 1
        %s289 = scalar_lea.vmem %s5, %s288
        %s290 = smul.u32 4, %s21
        %p291 = scmp.lt.s32.totalorder %s290, 7
        %s292 = scalar_select %p291, %s290, 7
        %s293 = smul.addr %s292, 2
        %s294 = smul.addr %s293, 8
        %s295 = scalar_lea.vmem %s3, %s294
        %s296 = smul.u32 4, %s21
        %s297 = smul.u32 4, %s21
        %p298 = scmp.lt.s32.totalorder %s21, 1
        %s299 = scalar_select %p298, %s21, 1
        %s300 = scalar_lea.vmem %s5, %s299
        %s301 = sld [smem:[#allocation3]]
        %s302 = sld [smem:[#allocation3 + $0x1]]
        %v303 = vld [vmem:[#allocation6] sm:$0xff]
        %v304 = vld [vmem:[#allocation6 + $0x8] sm:$0xff]
        %v305 = vld [vmem:[%s2] sm:$0xff]
        %v306 = vld [vmem:[%s2 + $0x8] sm:$0xff]
        %v307 = vld [vmem:[%s2 + $0x10] sm:$0xff]
        %v308 = vld [vmem:[%s295] sm:$0xff]
        %v309 = vld [vmem:[%s295 + $0x8] sm:$0xff]
        %v310 = vld [vmem:[%s295 + $0x10] sm:$0xff]
        %v311 = vld [vmem:[%s295 + $0x18] sm:$0xff]
        %v312 = vld [vmem:[%s295 + $0x20] sm:$0xff]
        %v313 = vld [vmem:[%s295 + $0x28] sm:$0xff]
        %v314 = vld [vmem:[%s295 + $0x30] sm:$0xff]
        %v315 = vld [vmem:[%s295 + $0x38] sm:$0xff]
        %v316 = vld [vmem:[%s257] sm:$0xff]
        %v317 = vld [vmem:[%s257 + $0x8] sm:$0xff]
        %v318 = vld [vmem:[%s257 + $0x10] sm:$0xff]
        %v319 = vld [vmem:[%s257 + $0x18] sm:$0xff]
        %v320 = vld [vmem:[%s257 + $0x20] sm:$0xff]
        %v321 = vld [vmem:[%s257 + $0x28] sm:$0xff]
        %v322 = vld [vmem:[%s257 + $0x30] sm:$0xff]
        %v323 = vld [vmem:[%s257 + $0x38] sm:$0xff]
        %v324 = vmul.f32 %v308, %v308
        %v325 = vmul.f32 %v309, %v309
        %v326 = vmul.f32 %v310, %v310
        %v327 = vmul.f32 %v311, %v311
        %v328 = vmul.f32 %v312, %v312
        %v329 = vmul.f32 %v313, %v313
        %v330 = vmul.f32 %v314, %v314
        %v331 = vmul.f32 %v315, %v315
        %vm332 = vcmask 130048
        %333 = vst.msk [vmem:[#allocation2] sm:$0xff] %vm332, %v324
        %334 = vst.msk [vmem:[#allocation2 + $0x8] sm:$0xff] %vm332, %v325
        %335 = vst.msk [vmem:[#allocation2 + $0x10] sm:$0xff] %vm332, %v326
        %336 = vst.msk [vmem:[#allocation2 + $0x18] sm:$0xff] %vm332, %v327
        %337 = vst.msk [vmem:[#allocation2 + $0x20] sm:$0xff] %vm332, %v328
        %338 = vst.msk [vmem:[#allocation2 + $0x28] sm:$0xff] %vm332, %v329
        %339 = vst.msk [vmem:[#allocation2 + $0x30] sm:$0xff] %vm332, %v330
        %340 = vst.msk [vmem:[#allocation2 + $0x38] sm:$0xff] %vm332, %v331
        %v341 = vmul.f32 %v316, %v316
        %v342 = vmul.f32 %v317, %v317
        %v343 = vmul.f32 %v318, %v318
        %v344 = vmul.f32 %v319, %v319
        %v345 = vmul.f32 %v320, %v320
        %v346 = vmul.f32 %v321, %v321
        %v347 = vmul.f32 %v322, %v322
        %v348 = vmul.f32 %v323, %v323
        %349 = vst.msk [vmem:[#allocation2 + $0x40] sm:$0xff] %vm332, %v341
        %350 = vst.msk [vmem:[#allocation2 + $0x48] sm:$0xff] %vm332, %v342
        %351 = vst.msk [vmem:[#allocation2 + $0x50] sm:$0xff] %vm332, %v343
        %352 = vst.msk [vmem:[#allocation2 + $0x58] sm:$0xff] %vm332, %v344
        %353 = vst.msk [vmem:[#allocation2 + $0x60] sm:$0xff] %vm332, %v345
        %354 = vst.msk [vmem:[#allocation2 + $0x68] sm:$0xff] %vm332, %v346
        %355 = vst.msk [vmem:[#allocation2 + $0x70] sm:$0xff] %vm332, %v347
        %356 = vst.msk [vmem:[#allocation2 + $0x78] sm:$0xff] %vm332, %v348
        %v357 = vmul.f32 %v308, %v316
        %v358 = vmul.f32 %v309, %v317
        %v359 = vmul.f32 %v310, %v318
        %v360 = vmul.f32 %v311, %v319
        %v361 = vmul.f32 %v312, %v320
        %v362 = vmul.f32 %v313, %v321
        %v363 = vmul.f32 %v314, %v322
        %v364 = vmul.f32 %v315, %v323
        %365 = vst.msk [vmem:[#allocation2 + $0x80] sm:$0xff] %vm332, %v357
        %366 = vst.msk [vmem:[#allocation2 + $0x88] sm:$0xff] %vm332, %v358
        %367 = vst.msk [vmem:[#allocation2 + $0x90] sm:$0xff] %vm332, %v359
        %368 = vst.msk [vmem:[#allocation2 + $0x98] sm:$0xff] %vm332, %v360
        %369 = vst.msk [vmem:[#allocation2 + $0xa0] sm:$0xff] %vm332, %v361
        %370 = vst.msk [vmem:[#allocation2 + $0xa8] sm:$0xff] %vm332, %v362
        %371 = vst.msk [vmem:[#allocation2 + $0xb0] sm:$0xff] %vm332, %v363
        %372 = vst.msk [vmem:[#allocation2 + $0xb8] sm:$0xff] %vm332, %v364
        %v374 = vsel %vm332, %v308, 0
        %v377 = vsel %vm332, %v309, 0
        %v380 = vsel %vm332, %v310, 0
        %v383 = vsel %vm332, %v311, 0
        %v386 = vsel %vm332, %v312, 0
        %v389 = vsel %vm332, %v313, 0
        %v392 = vsel %vm332, %v314, 0
        %v395 = vsel %vm332, %v315, 0
        %397 = vmatpush.msra.mxu0 0.0
        %398 = vmatpush.msra.mxu0 0.0
        %399 = vmatpush.msra.mxu0 0.0
        %400 = vmatpush.msra.mxu0 0.0
        %401 = vmatpush.msra.mxu0 0.0
        %402 = vmatpush.msra.mxu0 0.0
        %403 = vmatpush.msra.mxu0 0.0
        %404 = vmatpush.msra.mxu0 0.0
        %405 = vmatpush.msra.mxu0 0.0
        %406 = vmatpush.msra.mxu0 0.0
        %407 = vmatpush.msra.mxu0 0.0
        %408 = vmatpush.msra.mxu0 0.0
        %409 = vmatpush.msra.mxu0 0.0
        %410 = vmatpush.msra.mxu0 0.0
        %v411 = vand.u32 %v304, 4294901760
        %412 = vmatpush.msra.mxu0 %v411
        %v413 = vand.u32 %v303, 4294901760
        %414 = vmatpush.msra.mxu0 %v413
        %v415 = vand.u32 %v374, 4294901760
        %v416 = vsub.f32 %v374, %v415
        %v417 = vand.u32 %v416, 4294901760
        %v418 = vsub.f32 %v416, %v417
        %v419 = vand.u32 %v418, 4294901760
        %420 = vmatmul.f32.gmra.mxu0 %v419
        %v421 = vpop.f32.mrf.mxu0
        %v422 = vadd.f32 0.0, %v421
        %v423 = vand.u32 %v377, 4294901760
        %v424 = vsub.f32 %v377, %v423
        %v425 = vand.u32 %v424, 4294901760
        %v426 = vsub.f32 %v424, %v425
        %v427 = vand.u32 %v426, 4294901760
        %428 = vmatmul.f32.gmra.mxu0 %v427
        %v429 = vpop.f32.mrf.mxu0
        %v430 = vadd.f32 0.0, %v429
        %v431 = vand.u32 %v380, 4294901760
        %v432 = vsub.f32 %v380, %v431
        %v433 = vand.u32 %v432, 4294901760
        %v434 = vsub.f32 %v432, %v433
        %v435 = vand.u32 %v434, 4294901760
        %436 = vmatmul.f32.gmra.mxu0 %v435
        %v437 = vpop.f32.mrf.mxu0
        %v438 = vadd.f32 0.0, %v437
        %v439 = vand.u32 %v383, 4294901760
        %v440 = vsub.f32 %v383, %v439
        %v441 = vand.u32 %v440, 4294901760
        %v442 = vsub.f32 %v440, %v441
        %v443 = vand.u32 %v442, 4294901760
        %444 = vmatmul.f32.gmra.mxu0 %v443
        %v445 = vpop.f32.mrf.mxu0
        %v446 = vadd.f32 0.0, %v445
        %v447 = vand.u32 %v386, 4294901760
        %v448 = vsub.f32 %v386, %v447
        %v449 = vand.u32 %v448, 4294901760
        %v450 = vsub.f32 %v448, %v449
        %v451 = vand.u32 %v450, 4294901760
        %452 = vmatmul.f32.gmra.mxu0 %v451
        %v453 = vpop.f32.mrf.mxu0
        %v454 = vadd.f32 0.0, %v453
        %v455 = vand.u32 %v389, 4294901760
        %v456 = vsub.f32 %v389, %v455
        %v457 = vand.u32 %v456, 4294901760
        %v458 = vsub.f32 %v456, %v457
        %v459 = vand.u32 %v458, 4294901760
        %460 = vmatmul.f32.gmra.mxu0 %v459
        %v461 = vpop.f32.mrf.mxu0
        %v462 = vadd.f32 0.0, %v461
        %v463 = vand.u32 %v392, 4294901760
        %v464 = vsub.f32 %v392, %v463
        %v465 = vand.u32 %v464, 4294901760
        %v466 = vsub.f32 %v464, %v465
        %v467 = vand.u32 %v466, 4294901760
        %468 = vmatmul.f32.gmra.mxu0 %v467
        %v469 = vpop.f32.mrf.mxu0
        %v470 = vadd.f32 0.0, %v469
        %v471 = vand.u32 %v395, 4294901760
        %v472 = vsub.f32 %v395, %v471
        %v473 = vand.u32 %v472, 4294901760
        %v474 = vsub.f32 %v472, %v473
        %v475 = vand.u32 %v474, 4294901760
        %476 = vmatmul.f32.gmra.mxu0 %v475
        %v477 = vpop.f32.mrf.mxu0
        %v478 = vadd.f32 0.0, %v477
        %479 = vdwg.mxu0
        %480 = vmatpush.msra.mxu0 0.0
        %481 = vmatpush.msra.mxu0 0.0
        %482 = vmatpush.msra.mxu0 0.0
        %483 = vmatpush.msra.mxu0 0.0
        %484 = vmatpush.msra.mxu0 0.0
        %485 = vmatpush.msra.mxu0 0.0
        %486 = vmatpush.msra.mxu0 0.0
        %487 = vmatpush.msra.mxu0 0.0
        %488 = vmatpush.msra.mxu0 0.0
        %489 = vmatpush.msra.mxu0 0.0
        %490 = vmatpush.msra.mxu0 0.0
        %491 = vmatpush.msra.mxu0 0.0
        %492 = vmatpush.msra.mxu0 0.0
        %493 = vmatpush.msra.mxu0 0.0
        %v494 = vand.u32 %v304, 4294901760
        %v495 = vsub.f32 %v304, %v494
        %v496 = vand.u32 %v495, 4294901760
        %v497 = vsub.f32 %v495, %v496
        %v498 = vand.u32 %v497, 4294901760
        %499 = vmatpush.msra.mxu0 %v498
        %v500 = vand.u32 %v303, 4294901760
        %v501 = vsub.f32 %v303, %v500
        %v502 = vand.u32 %v501, 4294901760
        %v503 = vsub.f32 %v501, %v502
        %v504 = vand.u32 %v503, 4294901760
        %505 = vmatpush.msra.mxu0 %v504
        %v506 = vand.u32 %v374, 4294901760
        %507 = vmatmul.f32.gmra.mxu0 %v506
        %v508 = vpop.f32.mrf.mxu0
        %v509 = vadd.f32 %v422, %v508
        %v510 = vand.u32 %v377, 4294901760
        %511 = vmatmul.f32.gmra.mxu0 %v510
        %v512 = vpop.f32.mrf.mxu0
        %v513 = vadd.f32 %v430, %v512
        %v514 = vand.u32 %v380, 4294901760
        %515 = vmatmul.f32.gmra.mxu0 %v514
        %v516 = vpop.f32.mrf.mxu0
        %v517 = vadd.f32 %v438, %v516
        %v518 = vand.u32 %v383, 4294901760
        %519 = vmatmul.f32.gmra.mxu0 %v518
        %v520 = vpop.f32.mrf.mxu0
        %v521 = vadd.f32 %v446, %v520
        %v522 = vand.u32 %v386, 4294901760
        %523 = vmatmul.f32.gmra.mxu0 %v522
        %v524 = vpop.f32.mrf.mxu0
        %v525 = vadd.f32 %v454, %v524
        %v526 = vand.u32 %v389, 4294901760
        %527 = vmatmul.f32.gmra.mxu0 %v526
        %v528 = vpop.f32.mrf.mxu0
        %v529 = vadd.f32 %v462, %v528
        %v530 = vand.u32 %v392, 4294901760
        %531 = vmatmul.f32.gmra.mxu0 %v530
        %v532 = vpop.f32.mrf.mxu0
        %v533 = vadd.f32 %v470, %v532
        %v534 = vand.u32 %v395, 4294901760
        %535 = vmatmul.f32.gmra.mxu0 %v534
        %v536 = vpop.f32.mrf.mxu0
        %v537 = vadd.f32 %v478, %v536
        %538 = vdwg.mxu0
        %539 = vmatpush.msra.mxu0 0.0
        %540 = vmatpush.msra.mxu0 0.0
        %541 = vmatpush.msra.mxu0 0.0
        %542 = vmatpush.msra.mxu0 0.0
        %543 = vmatpush.msra.mxu0 0.0
        %544 = vmatpush.msra.mxu0 0.0
        %545 = vmatpush.msra.mxu0 0.0
        %546 = vmatpush.msra.mxu0 0.0
        %547 = vmatpush.msra.mxu0 0.0
        %548 = vmatpush.msra.mxu0 0.0
        %549 = vmatpush.msra.mxu0 0.0
        %550 = vmatpush.msra.mxu0 0.0
        %551 = vmatpush.msra.mxu0 0.0
        %552 = vmatpush.msra.mxu0 0.0
        %v553 = vand.u32 %v304, 4294901760
        %v554 = vsub.f32 %v304, %v553
        %555 = vmatpush.msra.mxu0 %v554
        %v556 = vand.u32 %v303, 4294901760
        %v557 = vsub.f32 %v303, %v556
        %558 = vmatpush.msra.mxu0 %v557
        %v559 = vand.u32 %v374, 4294901760
        %v560 = vsub.f32 %v374, %v559
        %561 = vmatmul.f32.gmra.mxu0 %v560
        %v562 = vpop.f32.mrf.mxu0
        %v563 = vadd.f32 %v509, %v562
        %v564 = vand.u32 %v377, 4294901760
        %v565 = vsub.f32 %v377, %v564
        %566 = vmatmul.f32.gmra.mxu0 %v565
        %v567 = vpop.f32.mrf.mxu0
        %v568 = vadd.f32 %v513, %v567
        %v569 = vand.u32 %v380, 4294901760
        %v570 = vsub.f32 %v380, %v569
        %571 = vmatmul.f32.gmra.mxu0 %v570
        %v572 = vpop.f32.mrf.mxu0
        %v573 = vadd.f32 %v517, %v572
        %v574 = vand.u32 %v383, 4294901760
        %v575 = vsub.f32 %v383, %v574
        %576 = vmatmul.f32.gmra.mxu0 %v575
        %v577 = vpop.f32.mrf.mxu0
        %v578 = vadd.f32 %v521, %v577
        %v579 = vand.u32 %v386, 4294901760
        %v580 = vsub.f32 %v386, %v579
        %581 = vmatmul.f32.gmra.mxu0 %v580
        %v582 = vpop.f32.mrf.mxu0
        %v583 = vadd.f32 %v525, %v582
        %v584 = vand.u32 %v389, 4294901760
        %v585 = vsub.f32 %v389, %v584
        %586 = vmatmul.f32.gmra.mxu0 %v585
        %v587 = vpop.f32.mrf.mxu0
        %v588 = vadd.f32 %v529, %v587
        %v589 = vand.u32 %v392, 4294901760
        %v590 = vsub.f32 %v392, %v589
        %591 = vmatmul.f32.gmra.mxu0 %v590
        %v592 = vpop.f32.mrf.mxu0
        %v593 = vadd.f32 %v533, %v592
        %v594 = vand.u32 %v395, 4294901760
        %v595 = vsub.f32 %v395, %v594
        %596 = vmatmul.f32.gmra.mxu0 %v595
        %v597 = vpop.f32.mrf.mxu0
        %v598 = vadd.f32 %v537, %v597
        %599 = vdwg.mxu0
        %600 = vmatpush.msra.mxu0 0.0
        %601 = vmatpush.msra.mxu0 0.0
        %602 = vmatpush.msra.mxu0 0.0
        %603 = vmatpush.msra.mxu0 0.0
        %604 = vmatpush.msra.mxu0 0.0
        %605 = vmatpush.msra.mxu0 0.0
        %606 = vmatpush.msra.mxu0 0.0
        %607 = vmatpush.msra.mxu0 0.0
        %608 = vmatpush.msra.mxu0 0.0
        %609 = vmatpush.msra.mxu0 0.0
        %610 = vmatpush.msra.mxu0 0.0
        %611 = vmatpush.msra.mxu0 0.0
        %612 = vmatpush.msra.mxu0 0.0
        %613 = vmatpush.msra.mxu0 0.0
        %v614 = vand.u32 %v304, 4294901760
        %615 = vmatpush.msra.mxu0 %v614
        %v616 = vand.u32 %v303, 4294901760
        %617 = vmatpush.msra.mxu0 %v616
        %v618 = vand.u32 %v374, 4294901760
        %v619 = vsub.f32 %v374, %v618
        %v620 = vand.u32 %v619, 4294901760
        %621 = vmatmul.f32.gmra.mxu0 %v620
        %v622 = vpop.f32.mrf.mxu0
        %v623 = vadd.f32 %v563, %v622
        %v624 = vand.u32 %v377, 4294901760
        %v625 = vsub.f32 %v377, %v624
        %v626 = vand.u32 %v625, 4294901760
        %627 = vmatmul.f32.gmra.mxu0 %v626
        %v628 = vpop.f32.mrf.mxu0
        %v629 = vadd.f32 %v568, %v628
        %v630 = vand.u32 %v380, 4294901760
        %v631 = vsub.f32 %v380, %v630
        %v632 = vand.u32 %v631, 4294901760
        %633 = vmatmul.f32.gmra.mxu0 %v632
        %v634 = vpop.f32.mrf.mxu0
        %v635 = vadd.f32 %v573, %v634
        %v636 = vand.u32 %v383, 4294901760
        %v637 = vsub.f32 %v383, %v636
        %v638 = vand.u32 %v637, 4294901760
        %639 = vmatmul.f32.gmra.mxu0 %v638
        %v640 = vpop.f32.mrf.mxu0
        %v641 = vadd.f32 %v578, %v640
        %v642 = vand.u32 %v386, 4294901760
        %v643 = vsub.f32 %v386, %v642
        %v644 = vand.u32 %v643, 4294901760
        %645 = vmatmul.f32.gmra.mxu0 %v644
        %v646 = vpop.f32.mrf.mxu0
        %v647 = vadd.f32 %v583, %v646
        %v648 = vand.u32 %v389, 4294901760
        %v649 = vsub.f32 %v389, %v648
        %v650 = vand.u32 %v649, 4294901760
        %651 = vmatmul.f32.gmra.mxu0 %v650
        %v652 = vpop.f32.mrf.mxu0
        %v653 = vadd.f32 %v588, %v652
        %v654 = vand.u32 %v392, 4294901760
        %v655 = vsub.f32 %v392, %v654
        %v656 = vand.u32 %v655, 4294901760
        %657 = vmatmul.f32.gmra.mxu0 %v656
        %v658 = vpop.f32.mrf.mxu0
        %v659 = vadd.f32 %v593, %v658
        %v660 = vand.u32 %v395, 4294901760
        %v661 = vsub.f32 %v395, %v660
        %v662 = vand.u32 %v661, 4294901760
        %663 = vmatmul.f32.gmra.mxu0 %v662
        %v664 = vpop.f32.mrf.mxu0
        %v665 = vadd.f32 %v598, %v664
        %666 = vdwg.mxu0
        %667 = vmatpush.msra.mxu0 0.0
        %668 = vmatpush.msra.mxu0 0.0
        %669 = vmatpush.msra.mxu0 0.0
        %670 = vmatpush.msra.mxu0 0.0
        %671 = vmatpush.msra.mxu0 0.0
        %672 = vmatpush.msra.mxu0 0.0
        %673 = vmatpush.msra.mxu0 0.0
        %674 = vmatpush.msra.mxu0 0.0
        %675 = vmatpush.msra.mxu0 0.0
        %676 = vmatpush.msra.mxu0 0.0
        %677 = vmatpush.msra.mxu0 0.0
        %678 = vmatpush.msra.mxu0 0.0
        %679 = vmatpush.msra.mxu0 0.0
        %680 = vmatpush.msra.mxu0 0.0
        %v681 = vand.u32 %v304, 4294901760
        %v682 = vsub.f32 %v304, %v681
        %v683 = vand.u32 %v682, 4294901760
        %684 = vmatpush.msra.mxu0 %v683
        %v685 = vand.u32 %v303, 4294901760
        %v686 = vsub.f32 %v303, %v685
        %v687 = vand.u32 %v686, 4294901760
        %688 = vmatpush.msra.mxu0 %v687
        %v689 = vand.u32 %v374, 4294901760
        %690 = vmatmul.f32.gmra.mxu0 %v689
        %v691 = vpop.f32.mrf.mxu0
        %v692 = vadd.f32 %v623, %v691
        %v693 = vand.u32 %v377, 4294901760
        %694 = vmatmul.f32.gmra.mxu0 %v693
        %v695 = vpop.f32.mrf.mxu0
        %v696 = vadd.f32 %v629, %v695
        %v697 = vand.u32 %v380, 4294901760
        %698 = vmatmul.f32.gmra.mxu0 %v697
        %v699 = vpop.f32.mrf.mxu0
        %v700 = vadd.f32 %v635, %v699
        %v701 = vand.u32 %v383, 4294901760
        %702 = vmatmul.f32.gmra.mxu0 %v701
        %v703 = vpop.f32.mrf.mxu0
        %v704 = vadd.f32 %v641, %v703
        %v705 = vand.u32 %v386, 4294901760
        %706 = vmatmul.f32.gmra.mxu0 %v705
        %v707 = vpop.f32.mrf.mxu0
        %v708 = vadd.f32 %v647, %v707
        %v709 = vand.u32 %v389, 4294901760
        %710 = vmatmul.f32.gmra.mxu0 %v709
        %v711 = vpop.f32.mrf.mxu0
        %v712 = vadd.f32 %v653, %v711
        %v713 = vand.u32 %v392, 4294901760
        %714 = vmatmul.f32.gmra.mxu0 %v713
        %v715 = vpop.f32.mrf.mxu0
        %v716 = vadd.f32 %v659, %v715
        %v717 = vand.u32 %v395, 4294901760
        %718 = vmatmul.f32.gmra.mxu0 %v717
        %v719 = vpop.f32.mrf.mxu0
        %v720 = vadd.f32 %v665, %v719
        %721 = vdwg.mxu0
        %722 = vmatpush.msra.mxu0 0.0
        %723 = vmatpush.msra.mxu0 0.0
        %724 = vmatpush.msra.mxu0 0.0
        %725 = vmatpush.msra.mxu0 0.0
        %726 = vmatpush.msra.mxu0 0.0
        %727 = vmatpush.msra.mxu0 0.0
        %728 = vmatpush.msra.mxu0 0.0
        %729 = vmatpush.msra.mxu0 0.0
        %730 = vmatpush.msra.mxu0 0.0
        %731 = vmatpush.msra.mxu0 0.0
        %732 = vmatpush.msra.mxu0 0.0
        %733 = vmatpush.msra.mxu0 0.0
        %734 = vmatpush.msra.mxu0 0.0
        %735 = vmatpush.msra.mxu0 0.0
        %v736 = vand.u32 %v304, 4294901760
        %737 = vmatpush.msra.mxu0 %v736
        %v738 = vand.u32 %v303, 4294901760
        %739 = vmatpush.msra.mxu0 %v738
        %v740 = vand.u32 %v374, 4294901760
        %741 = vmatmul.f32.gmra.mxu0 %v740
        %v742 = vpop.f32.mrf.mxu0
        %v743 = vadd.f32 %v692, %v742
        %v744 = vand.u32 %v377, 4294901760
        %745 = vmatmul.f32.gmra.mxu0 %v744
        %v746 = vpop.f32.mrf.mxu0
        %v747 = vadd.f32 %v696, %v746
        %v748 = vand.u32 %v380, 4294901760
        %749 = vmatmul.f32.gmra.mxu0 %v748
        %v750 = vpop.f32.mrf.mxu0
        %v751 = vadd.f32 %v700, %v750
        %v752 = vand.u32 %v383, 4294901760
        %753 = vmatmul.f32.gmra.mxu0 %v752
        %v754 = vpop.f32.mrf.mxu0
        %v755 = vadd.f32 %v704, %v754
        %v756 = vand.u32 %v386, 4294901760
        %757 = vmatmul.f32.gmra.mxu0 %v756
        %v758 = vpop.f32.mrf.mxu0
        %v759 = vadd.f32 %v708, %v758
        %v760 = vand.u32 %v389, 4294901760
        %761 = vmatmul.f32.gmra.mxu0 %v760
        %v762 = vpop.f32.mrf.mxu0
        %v763 = vadd.f32 %v712, %v762
        %v764 = vand.u32 %v392, 4294901760
        %765 = vmatmul.f32.gmra.mxu0 %v764
        %v766 = vpop.f32.mrf.mxu0
        %v767 = vadd.f32 %v716, %v766
        %v768 = vand.u32 %v395, 4294901760
        %769 = vmatmul.f32.gmra.mxu0 %v768
        %v770 = vpop.f32.mrf.mxu0
        %v771 = vadd.f32 %v720, %v770
        %772 = vdwg.mxu0
        %v774 = vsel %vm332, %v316, 0
        %v777 = vsel %vm332, %v317, 0
        %v780 = vsel %vm332, %v318, 0
        %v783 = vsel %vm332, %v319, 0
        %v786 = vsel %vm332, %v320, 0
        %v789 = vsel %vm332, %v321, 0
        %v792 = vsel %vm332, %v322, 0
        %v795 = vsel %vm332, %v323, 0
        %797 = vmatpush.msra.mxu0 0.0
        %798 = vmatpush.msra.mxu0 0.0
        %799 = vmatpush.msra.mxu0 0.0
        %800 = vmatpush.msra.mxu0 0.0
        %801 = vmatpush.msra.mxu0 0.0
        %802 = vmatpush.msra.mxu0 0.0
        %803 = vmatpush.msra.mxu0 0.0
        %804 = vmatpush.msra.mxu0 0.0
        %805 = vmatpush.msra.mxu0 0.0
        %806 = vmatpush.msra.mxu0 0.0
        %807 = vmatpush.msra.mxu0 0.0
        %808 = vmatpush.msra.mxu0 0.0
        %809 = vmatpush.msra.mxu0 0.0
        %810 = vmatpush.msra.mxu0 0.0
        %v811 = vand.u32 %v304, 4294901760
        %812 = vmatpush.msra.mxu0 %v811
        %v813 = vand.u32 %v303, 4294901760
        %814 = vmatpush.msra.mxu0 %v813
        %v815 = vand.u32 %v774, 4294901760
        %v816 = vsub.f32 %v774, %v815
        %v817 = vand.u32 %v816, 4294901760
        %v818 = vsub.f32 %v816, %v817
        %v819 = vand.u32 %v818, 4294901760
        %820 = vmatmul.f32.gmra.mxu0 %v819
        %v821 = vpop.f32.mrf.mxu0
        %v822 = vadd.f32 0.0, %v821
        %v823 = vand.u32 %v777, 4294901760
        %v824 = vsub.f32 %v777, %v823
        %v825 = vand.u32 %v824, 4294901760
        %v826 = vsub.f32 %v824, %v825
        %v827 = vand.u32 %v826, 4294901760
        %828 = vmatmul.f32.gmra.mxu0 %v827
        %v829 = vpop.f32.mrf.mxu0
        %v830 = vadd.f32 0.0, %v829
        %v831 = vand.u32 %v780, 4294901760
        %v832 = vsub.f32 %v780, %v831
        %v833 = vand.u32 %v832, 4294901760
        %v834 = vsub.f32 %v832, %v833
        %v835 = vand.u32 %v834, 4294901760
        %836 = vmatmul.f32.gmra.mxu0 %v835
        %v837 = vpop.f32.mrf.mxu0
        %v838 = vadd.f32 0.0, %v837
        %v839 = vand.u32 %v783, 4294901760
        %v840 = vsub.f32 %v783, %v839
        %v841 = vand.u32 %v840, 4294901760
        %v842 = vsub.f32 %v840, %v841
        %v843 = vand.u32 %v842, 4294901760
        %844 = vmatmul.f32.gmra.mxu0 %v843
        %v845 = vpop.f32.mrf.mxu0
        %v846 = vadd.f32 0.0, %v845
        %v847 = vand.u32 %v786, 4294901760
        %v848 = vsub.f32 %v786, %v847
        %v849 = vand.u32 %v848, 4294901760
        %v850 = vsub.f32 %v848, %v849
        %v851 = vand.u32 %v850, 4294901760
        %852 = vmatmul.f32.gmra.mxu0 %v851
        %v853 = vpop.f32.mrf.mxu0
        %v854 = vadd.f32 0.0, %v853
        %v855 = vand.u32 %v789, 4294901760
        %v856 = vsub.f32 %v789, %v855
        %v857 = vand.u32 %v856, 4294901760
        %v858 = vsub.f32 %v856, %v857
        %v859 = vand.u32 %v858, 4294901760
        %860 = vmatmul.f32.gmra.mxu0 %v859
        %v861 = vpop.f32.mrf.mxu0
        %v862 = vadd.f32 0.0, %v861
        %v863 = vand.u32 %v792, 4294901760
        %v864 = vsub.f32 %v792, %v863
        %v865 = vand.u32 %v864, 4294901760
        %v866 = vsub.f32 %v864, %v865
        %v867 = vand.u32 %v866, 4294901760
        %868 = vmatmul.f32.gmra.mxu0 %v867
        %v869 = vpop.f32.mrf.mxu0
        %v870 = vadd.f32 0.0, %v869
        %v871 = vand.u32 %v795, 4294901760
        %v872 = vsub.f32 %v795, %v871
        %v873 = vand.u32 %v872, 4294901760
        %v874 = vsub.f32 %v872, %v873
        %v875 = vand.u32 %v874, 4294901760
        %876 = vmatmul.f32.gmra.mxu0 %v875
        %v877 = vpop.f32.mrf.mxu0
        %v878 = vadd.f32 0.0, %v877
        %879 = vdwg.mxu0
        %880 = vmatpush.msra.mxu0 0.0
        %881 = vmatpush.msra.mxu0 0.0
        %882 = vmatpush.msra.mxu0 0.0
        %883 = vmatpush.msra.mxu0 0.0
        %884 = vmatpush.msra.mxu0 0.0
        %885 = vmatpush.msra.mxu0 0.0
        %886 = vmatpush.msra.mxu0 0.0
        %887 = vmatpush.msra.mxu0 0.0
        %888 = vmatpush.msra.mxu0 0.0
        %889 = vmatpush.msra.mxu0 0.0
        %890 = vmatpush.msra.mxu0 0.0
        %891 = vmatpush.msra.mxu0 0.0
        %892 = vmatpush.msra.mxu0 0.0
        %893 = vmatpush.msra.mxu0 0.0
        %v894 = vand.u32 %v304, 4294901760
        %v895 = vsub.f32 %v304, %v894
        %v896 = vand.u32 %v895, 4294901760
        %v897 = vsub.f32 %v895, %v896
        %v898 = vand.u32 %v897, 4294901760
        %899 = vmatpush.msra.mxu0 %v898
        %v900 = vand.u32 %v303, 4294901760
        %v901 = vsub.f32 %v303, %v900
        %v902 = vand.u32 %v901, 4294901760
        %v903 = vsub.f32 %v901, %v902
        %v904 = vand.u32 %v903, 4294901760
        %905 = vmatpush.msra.mxu0 %v904
        %v906 = vand.u32 %v774, 4294901760
        %907 = vmatmul.f32.gmra.mxu0 %v906
        %v908 = vpop.f32.mrf.mxu0
        %v909 = vadd.f32 %v822, %v908
        %v910 = vand.u32 %v777, 4294901760
        %911 = vmatmul.f32.gmra.mxu0 %v910
        %v912 = vpop.f32.mrf.mxu0
        %v913 = vadd.f32 %v830, %v912
        %v914 = vand.u32 %v780, 4294901760
        %915 = vmatmul.f32.gmra.mxu0 %v914
        %v916 = vpop.f32.mrf.mxu0
        %v917 = vadd.f32 %v838, %v916
        %v918 = vand.u32 %v783, 4294901760
        %919 = vmatmul.f32.gmra.mxu0 %v918
        %v920 = vpop.f32.mrf.mxu0
        %v921 = vadd.f32 %v846, %v920
        %v922 = vand.u32 %v786, 4294901760
        %923 = vmatmul.f32.gmra.mxu0 %v922
        %v924 = vpop.f32.mrf.mxu0
        %v925 = vadd.f32 %v854, %v924
        %v926 = vand.u32 %v789, 4294901760
        %927 = vmatmul.f32.gmra.mxu0 %v926
        %v928 = vpop.f32.mrf.mxu0
        %v929 = vadd.f32 %v862, %v928
        %v930 = vand.u32 %v792, 4294901760
        %931 = vmatmul.f32.gmra.mxu0 %v930
        %v932 = vpop.f32.mrf.mxu0
        %v933 = vadd.f32 %v870, %v932
        %v934 = vand.u32 %v795, 4294901760
        %935 = vmatmul.f32.gmra.mxu0 %v934
        %v936 = vpop.f32.mrf.mxu0
        %v937 = vadd.f32 %v878, %v936
        %938 = vdwg.mxu0
        %939 = vmatpush.msra.mxu0 0.0
        %940 = vmatpush.msra.mxu0 0.0
        %941 = vmatpush.msra.mxu0 0.0
        %942 = vmatpush.msra.mxu0 0.0
        %943 = vmatpush.msra.mxu0 0.0
        %944 = vmatpush.msra.mxu0 0.0
        %945 = vmatpush.msra.mxu0 0.0
        %946 = vmatpush.msra.mxu0 0.0
        %947 = vmatpush.msra.mxu0 0.0
        %948 = vmatpush.msra.mxu0 0.0
        %949 = vmatpush.msra.mxu0 0.0
        %950 = vmatpush.msra.mxu0 0.0
        %951 = vmatpush.msra.mxu0 0.0
        %952 = vmatpush.msra.mxu0 0.0
        %v953 = vand.u32 %v304, 4294901760
        %v954 = vsub.f32 %v304, %v953
        %955 = vmatpush.msra.mxu0 %v954
        %v956 = vand.u32 %v303, 4294901760
        %v957 = vsub.f32 %v303, %v956
        %958 = vmatpush.msra.mxu0 %v957
        %v959 = vand.u32 %v774, 4294901760
        %v960 = vsub.f32 %v774, %v959
        %961 = vmatmul.f32.gmra.mxu0 %v960
        %v962 = vpop.f32.mrf.mxu0
        %v963 = vadd.f32 %v909, %v962
        %v964 = vand.u32 %v777, 4294901760
        %v965 = vsub.f32 %v777, %v964
        %966 = vmatmul.f32.gmra.mxu0 %v965
        %v967 = vpop.f32.mrf.mxu0
        %v968 = vadd.f32 %v913, %v967
        %v969 = vand.u32 %v780, 4294901760
        %v970 = vsub.f32 %v780, %v969
        %971 = vmatmul.f32.gmra.mxu0 %v970
        %v972 = vpop.f32.mrf.mxu0
        %v973 = vadd.f32 %v917, %v972
        %v974 = vand.u32 %v783, 4294901760
        %v975 = vsub.f32 %v783, %v974
        %976 = vmatmul.f32.gmra.mxu0 %v975
        %v977 = vpop.f32.mrf.mxu0
        %v978 = vadd.f32 %v921, %v977
        %v979 = vand.u32 %v786, 4294901760
        %v980 = vsub.f32 %v786, %v979
        %981 = vmatmul.f32.gmra.mxu0 %v980
        %v982 = vpop.f32.mrf.mxu0
        %v983 = vadd.f32 %v925, %v982
        %v984 = vand.u32 %v789, 4294901760
        %v985 = vsub.f32 %v789, %v984
        %986 = vmatmul.f32.gmra.mxu0 %v985
        %v987 = vpop.f32.mrf.mxu0
        %v988 = vadd.f32 %v929, %v987
        %v989 = vand.u32 %v792, 4294901760
        %v990 = vsub.f32 %v792, %v989
        %991 = vmatmul.f32.gmra.mxu0 %v990
        %v992 = vpop.f32.mrf.mxu0
        %v993 = vadd.f32 %v933, %v992
        %v994 = vand.u32 %v795, 4294901760
        %v995 = vsub.f32 %v795, %v994
        %996 = vmatmul.f32.gmra.mxu0 %v995
        %v997 = vpop.f32.mrf.mxu0
        %v998 = vadd.f32 %v937, %v997
        %999 = vdwg.mxu0
        %1000 = vmatpush.msra.mxu0 0.0
        %1001 = vmatpush.msra.mxu0 0.0
        %1002 = vmatpush.msra.mxu0 0.0
        %1003 = vmatpush.msra.mxu0 0.0
        %1004 = vmatpush.msra.mxu0 0.0
        %1005 = vmatpush.msra.mxu0 0.0
        %1006 = vmatpush.msra.mxu0 0.0
        %1007 = vmatpush.msra.mxu0 0.0
        %1008 = vmatpush.msra.mxu0 0.0
        %1009 = vmatpush.msra.mxu0 0.0
        %1010 = vmatpush.msra.mxu0 0.0
        %1011 = vmatpush.msra.mxu0 0.0
        %1012 = vmatpush.msra.mxu0 0.0
        %1013 = vmatpush.msra.mxu0 0.0
        %v1014 = vand.u32 %v304, 4294901760
        %1015 = vmatpush.msra.mxu0 %v1014
        %v1016 = vand.u32 %v303, 4294901760
        %1017 = vmatpush.msra.mxu0 %v1016
        %v1018 = vand.u32 %v774, 4294901760
        %v1019 = vsub.f32 %v774, %v1018
        %v1020 = vand.u32 %v1019, 4294901760
        %1021 = vmatmul.f32.gmra.mxu0 %v1020
        %v1022 = vpop.f32.mrf.mxu0
        %v1023 = vadd.f32 %v963, %v1022
        %v1024 = vand.u32 %v777, 4294901760
        %v1025 = vsub.f32 %v777, %v1024
        %v1026 = vand.u32 %v1025, 4294901760
        %1027 = vmatmul.f32.gmra.mxu0 %v1026
        %v1028 = vpop.f32.mrf.mxu0
        %v1029 = vadd.f32 %v968, %v1028
        %v1030 = vand.u32 %v780, 4294901760
        %v1031 = vsub.f32 %v780, %v1030
        %v1032 = vand.u32 %v1031, 4294901760
        %1033 = vmatmul.f32.gmra.mxu0 %v1032
        %v1034 = vpop.f32.mrf.mxu0
        %v1035 = vadd.f32 %v973, %v1034
        %v1036 = vand.u32 %v783, 4294901760
        %v1037 = vsub.f32 %v783, %v1036
        %v1038 = vand.u32 %v1037, 4294901760
        %1039 = vmatmul.f32.gmra.mxu0 %v1038
        %v1040 = vpop.f32.mrf.mxu0
        %v1041 = vadd.f32 %v978, %v1040
        %v1042 = vand.u32 %v786, 4294901760
        %v1043 = vsub.f32 %v786, %v1042
        %v1044 = vand.u32 %v1043, 4294901760
        %1045 = vmatmul.f32.gmra.mxu0 %v1044
        %v1046 = vpop.f32.mrf.mxu0
        %v1047 = vadd.f32 %v983, %v1046
        %v1048 = vand.u32 %v789, 4294901760
        %v1049 = vsub.f32 %v789, %v1048
        %v1050 = vand.u32 %v1049, 4294901760
        %1051 = vmatmul.f32.gmra.mxu0 %v1050
        %v1052 = vpop.f32.mrf.mxu0
        %v1053 = vadd.f32 %v988, %v1052
        %v1054 = vand.u32 %v792, 4294901760
        %v1055 = vsub.f32 %v792, %v1054
        %v1056 = vand.u32 %v1055, 4294901760
        %1057 = vmatmul.f32.gmra.mxu0 %v1056
        %v1058 = vpop.f32.mrf.mxu0
        %v1059 = vadd.f32 %v993, %v1058
        %v1060 = vand.u32 %v795, 4294901760
        %v1061 = vsub.f32 %v795, %v1060
        %v1062 = vand.u32 %v1061, 4294901760
        %1063 = vmatmul.f32.gmra.mxu0 %v1062
        %v1064 = vpop.f32.mrf.mxu0
        %v1065 = vadd.f32 %v998, %v1064
        %1066 = vdwg.mxu0
        %1067 = vmatpush.msra.mxu0 0.0
        %1068 = vmatpush.msra.mxu0 0.0
        %1069 = vmatpush.msra.mxu0 0.0
        %1070 = vmatpush.msra.mxu0 0.0
        %1071 = vmatpush.msra.mxu0 0.0
        %1072 = vmatpush.msra.mxu0 0.0
        %1073 = vmatpush.msra.mxu0 0.0
        %1074 = vmatpush.msra.mxu0 0.0
        %1075 = vmatpush.msra.mxu0 0.0
        %1076 = vmatpush.msra.mxu0 0.0
        %1077 = vmatpush.msra.mxu0 0.0
        %1078 = vmatpush.msra.mxu0 0.0
        %1079 = vmatpush.msra.mxu0 0.0
        %1080 = vmatpush.msra.mxu0 0.0
        %v1081 = vand.u32 %v304, 4294901760
        %v1082 = vsub.f32 %v304, %v1081
        %v1083 = vand.u32 %v1082, 4294901760
        %1084 = vmatpush.msra.mxu0 %v1083
        %v1085 = vand.u32 %v303, 4294901760
        %v1086 = vsub.f32 %v303, %v1085
        %v1087 = vand.u32 %v1086, 4294901760
        %1088 = vmatpush.msra.mxu0 %v1087
        %v1089 = vand.u32 %v774, 4294901760
        %1090 = vmatmul.f32.gmra.mxu0 %v1089
        %v1091 = vpop.f32.mrf.mxu0
        %v1092 = vadd.f32 %v1023, %v1091
        %v1093 = vand.u32 %v777, 4294901760
        %1094 = vmatmul.f32.gmra.mxu0 %v1093
        %v1095 = vpop.f32.mrf.mxu0
        %v1096 = vadd.f32 %v1029, %v1095
        %v1097 = vand.u32 %v780, 4294901760
        %1098 = vmatmul.f32.gmra.mxu0 %v1097
        %v1099 = vpop.f32.mrf.mxu0
        %v1100 = vadd.f32 %v1035, %v1099
        %v1101 = vand.u32 %v783, 4294901760
        %1102 = vmatmul.f32.gmra.mxu0 %v1101
        %v1103 = vpop.f32.mrf.mxu0
        %v1104 = vadd.f32 %v1041, %v1103
        %v1105 = vand.u32 %v786, 4294901760
        %1106 = vmatmul.f32.gmra.mxu0 %v1105
        %v1107 = vpop.f32.mrf.mxu0
        %v1108 = vadd.f32 %v1047, %v1107
        %v1109 = vand.u32 %v789, 4294901760
        %1110 = vmatmul.f32.gmra.mxu0 %v1109
        %v1111 = vpop.f32.mrf.mxu0
        %v1112 = vadd.f32 %v1053, %v1111
        %v1113 = vand.u32 %v792, 4294901760
        %1114 = vmatmul.f32.gmra.mxu0 %v1113
        %v1115 = vpop.f32.mrf.mxu0
        %v1116 = vadd.f32 %v1059, %v1115
        %v1117 = vand.u32 %v795, 4294901760
        %1118 = vmatmul.f32.gmra.mxu0 %v1117
        %v1119 = vpop.f32.mrf.mxu0
        %v1120 = vadd.f32 %v1065, %v1119
        %1121 = vdwg.mxu0
        %1122 = vmatpush.msra.mxu0 0.0
        %1123 = vmatpush.msra.mxu0 0.0
        %1124 = vmatpush.msra.mxu0 0.0
        %1125 = vmatpush.msra.mxu0 0.0
        %1126 = vmatpush.msra.mxu0 0.0
        %1127 = vmatpush.msra.mxu0 0.0
        %1128 = vmatpush.msra.mxu0 0.0
        %1129 = vmatpush.msra.mxu0 0.0
        %1130 = vmatpush.msra.mxu0 0.0
        %1131 = vmatpush.msra.mxu0 0.0
        %1132 = vmatpush.msra.mxu0 0.0
        %1133 = vmatpush.msra.mxu0 0.0
        %1134 = vmatpush.msra.mxu0 0.0
        %1135 = vmatpush.msra.mxu0 0.0
        %v1136 = vand.u32 %v304, 4294901760
        %1137 = vmatpush.msra.mxu0 %v1136
        %v1138 = vand.u32 %v303, 4294901760
        %1139 = vmatpush.msra.mxu0 %v1138
        %v1140 = vand.u32 %v774, 4294901760
        %1141 = vmatmul.f32.gmra.mxu0 %v1140
        %v1142 = vpop.f32.mrf.mxu0
        %v1143 = vadd.f32 %v1092, %v1142
        %v1144 = vand.u32 %v777, 4294901760
        %1145 = vmatmul.f32.gmra.mxu0 %v1144
        %v1146 = vpop.f32.mrf.mxu0
        %v1147 = vadd.f32 %v1096, %v1146
        %v1148 = vand.u32 %v780, 4294901760
        %1149 = vmatmul.f32.gmra.mxu0 %v1148
        %v1150 = vpop.f32.mrf.mxu0
        %v1151 = vadd.f32 %v1100, %v1150
        %v1152 = vand.u32 %v783, 4294901760
        %1153 = vmatmul.f32.gmra.mxu0 %v1152
        %v1154 = vpop.f32.mrf.mxu0
        %v1155 = vadd.f32 %v1104, %v1154
        %v1156 = vand.u32 %v786, 4294901760
        %1157 = vmatmul.f32.gmra.mxu0 %v1156
        %v1158 = vpop.f32.mrf.mxu0
        %v1159 = vadd.f32 %v1108, %v1158
        %v1160 = vand.u32 %v789, 4294901760
        %1161 = vmatmul.f32.gmra.mxu0 %v1160
        %v1162 = vpop.f32.mrf.mxu0
        %v1163 = vadd.f32 %v1112, %v1162
        %v1164 = vand.u32 %v792, 4294901760
        %1165 = vmatmul.f32.gmra.mxu0 %v1164
        %v1166 = vpop.f32.mrf.mxu0
        %v1167 = vadd.f32 %v1116, %v1166
        %v1168 = vand.u32 %v795, 4294901760
        %1169 = vmatmul.f32.gmra.mxu0 %v1168
        %v1170 = vpop.f32.mrf.mxu0
        %v1171 = vadd.f32 %v1120, %v1170
        %1172 = vdwg.mxu0
        %v1173 = vld [vmem:[#allocation2] sm:$0xff]
        %v1174 = vld [vmem:[#allocation2 + $0x8] sm:$0xff]
        %v1175 = vld [vmem:[#allocation2 + $0x10] sm:$0xff]
        %v1176 = vld [vmem:[#allocation2 + $0x18] sm:$0xff]
        %v1177 = vld [vmem:[#allocation2 + $0x20] sm:$0xff]
        %v1178 = vld [vmem:[#allocation2 + $0x28] sm:$0xff]
        %v1179 = vld [vmem:[#allocation2 + $0x30] sm:$0xff]
        %v1180 = vld [vmem:[#allocation2 + $0x38] sm:$0xff]
        %v1181 = vld [vmem:[#allocation2 + $0x40] sm:$0xff]
        %v1182 = vld [vmem:[#allocation2 + $0x48] sm:$0xff]
        %v1183 = vld [vmem:[#allocation2 + $0x50] sm:$0xff]
        %v1184 = vld [vmem:[#allocation2 + $0x58] sm:$0xff]
        %v1185 = vld [vmem:[#allocation2 + $0x60] sm:$0xff]
        %v1186 = vld [vmem:[#allocation2 + $0x68] sm:$0xff]
        %v1187 = vld [vmem:[#allocation2 + $0x70] sm:$0xff]
        %v1188 = vld [vmem:[#allocation2 + $0x78] sm:$0xff]
        %v1189 = vld [vmem:[#allocation2 + $0x80] sm:$0xff]
        %v1190 = vld [vmem:[#allocation2 + $0x88] sm:$0xff]
        %v1191 = vld [vmem:[#allocation2 + $0x90] sm:$0xff]
        %v1192 = vld [vmem:[#allocation2 + $0x98] sm:$0xff]
        %v1193 = vld [vmem:[#allocation2 + $0xa0] sm:$0xff]
        %v1194 = vld [vmem:[#allocation2 + $0xa8] sm:$0xff]
        %v1195 = vld [vmem:[#allocation2 + $0xb0] sm:$0xff]
        %v1196 = vld [vmem:[#allocation2 + $0xb8] sm:$0xff]
        %v1198 = vsel %vm332, %v1173, 0
        %v1201 = vsel %vm332, %v1174, 0
        %v1204 = vsel %vm332, %v1175, 0
        %v1207 = vsel %vm332, %v1176, 0
        %v1210 = vsel %vm332, %v1177, 0
        %v1213 = vsel %vm332, %v1178, 0
        %v1216 = vsel %vm332, %v1179, 0
        %v1219 = vsel %vm332, %v1180, 0
        %v1222 = vsel %vm332, %v1181, 0
        %v1225 = vsel %vm332, %v1182, 0
        %v1228 = vsel %vm332, %v1183, 0
        %v1231 = vsel %vm332, %v1184, 0
        %v1234 = vsel %vm332, %v1185, 0
        %v1237 = vsel %vm332, %v1186, 0
        %v1240 = vsel %vm332, %v1187, 0
        %v1243 = vsel %vm332, %v1188, 0
        %v1246 = vsel %vm332, %v1189, 0
        %v1249 = vsel %vm332, %v1190, 0
        %v1252 = vsel %vm332, %v1191, 0
        %v1255 = vsel %vm332, %v1192, 0
        %v1258 = vsel %vm332, %v1193, 0
        %v1261 = vsel %vm332, %v1194, 0
        %v1264 = vsel %vm332, %v1195, 0
        %v1267 = vsel %vm332, %v1196, 0
        %1269 = vmatpush.msra.mxu0 0.0
        %1270 = vmatpush.msra.mxu0 0.0
        %1271 = vmatpush.msra.mxu0 0.0
        %1272 = vmatpush.msra.mxu0 0.0
        %1273 = vmatpush.msra.mxu0 0.0
        %1274 = vmatpush.msra.mxu0 0.0
        %1275 = vmatpush.msra.mxu0 0.0
        %1276 = vmatpush.msra.mxu0 0.0
        %1277 = vmatpush.msra.mxu0 0.0
        %1278 = vmatpush.msra.mxu0 0.0
        %1279 = vmatpush.msra.mxu0 0.0
        %1280 = vmatpush.msra.mxu0 0.0
        %1281 = vmatpush.msra.mxu0 0.0
        %1282 = vmatpush.msra.mxu0 0.0
        %v1283 = vand.u32 %v304, 4294901760
        %1284 = vmatpush.msra.mxu0 %v1283
        %v1285 = vand.u32 %v303, 4294901760
        %1286 = vmatpush.msra.mxu0 %v1285
        %v1287 = vand.u32 %v1198, 4294901760
        %v1288 = vsub.f32 %v1198, %v1287
        %v1289 = vand.u32 %v1288, 4294901760
        %v1290 = vsub.f32 %v1288, %v1289
        %v1291 = vand.u32 %v1290, 4294901760
        %1292 = vmatmul.f32.gmra.mxu0 %v1291
        %v1293 = vpop.f32.mrf.mxu0
        %v1294 = vadd.f32 0.0, %v1293
        %v1295 = vand.u32 %v1201, 4294901760
        %v1296 = vsub.f32 %v1201, %v1295
        %v1297 = vand.u32 %v1296, 4294901760
        %v1298 = vsub.f32 %v1296, %v1297
        %v1299 = vand.u32 %v1298, 4294901760
        %1300 = vmatmul.f32.gmra.mxu0 %v1299
        %v1301 = vpop.f32.mrf.mxu0
        %v1302 = vadd.f32 0.0, %v1301
        %v1303 = vand.u32 %v1204, 4294901760
        %v1304 = vsub.f32 %v1204, %v1303
        %v1305 = vand.u32 %v1304, 4294901760
        %v1306 = vsub.f32 %v1304, %v1305
        %v1307 = vand.u32 %v1306, 4294901760
        %1308 = vmatmul.f32.gmra.mxu0 %v1307
        %v1309 = vpop.f32.mrf.mxu0
        %v1310 = vadd.f32 0.0, %v1309
        %v1311 = vand.u32 %v1207, 4294901760
        %v1312 = vsub.f32 %v1207, %v1311
        %v1313 = vand.u32 %v1312, 4294901760
        %v1314 = vsub.f32 %v1312, %v1313
        %v1315 = vand.u32 %v1314, 4294901760
        %1316 = vmatmul.f32.gmra.mxu0 %v1315
        %v1317 = vpop.f32.mrf.mxu0
        %v1318 = vadd.f32 0.0, %v1317
        %v1319 = vand.u32 %v1210, 4294901760
        %v1320 = vsub.f32 %v1210, %v1319
        %v1321 = vand.u32 %v1320, 4294901760
        %v1322 = vsub.f32 %v1320, %v1321
        %v1323 = vand.u32 %v1322, 4294901760
        %1324 = vmatmul.f32.gmra.mxu0 %v1323
        %v1325 = vpop.f32.mrf.mxu0
        %v1326 = vadd.f32 0.0, %v1325
        %v1327 = vand.u32 %v1213, 4294901760
        %v1328 = vsub.f32 %v1213, %v1327
        %v1329 = vand.u32 %v1328, 4294901760
        %v1330 = vsub.f32 %v1328, %v1329
        %v1331 = vand.u32 %v1330, 4294901760
        %1332 = vmatmul.f32.gmra.mxu0 %v1331
        %v1333 = vpop.f32.mrf.mxu0
        %v1334 = vadd.f32 0.0, %v1333
        %v1335 = vand.u32 %v1216, 4294901760
        %v1336 = vsub.f32 %v1216, %v1335
        %v1337 = vand.u32 %v1336, 4294901760
        %v1338 = vsub.f32 %v1336, %v1337
        %v1339 = vand.u32 %v1338, 4294901760
        %1340 = vmatmul.f32.gmra.mxu0 %v1339
        %v1341 = vpop.f32.mrf.mxu0
        %v1342 = vadd.f32 0.0, %v1341
        %v1343 = vand.u32 %v1219, 4294901760
        %v1344 = vsub.f32 %v1219, %v1343
        %v1345 = vand.u32 %v1344, 4294901760
        %v1346 = vsub.f32 %v1344, %v1345
        %v1347 = vand.u32 %v1346, 4294901760
        %1348 = vmatmul.f32.gmra.mxu0 %v1347
        %v1349 = vpop.f32.mrf.mxu0
        %v1350 = vadd.f32 0.0, %v1349
        %v1351 = vand.u32 %v1222, 4294901760
        %v1352 = vsub.f32 %v1222, %v1351
        %v1353 = vand.u32 %v1352, 4294901760
        %v1354 = vsub.f32 %v1352, %v1353
        %v1355 = vand.u32 %v1354, 4294901760
        %1356 = vmatmul.f32.gmra.mxu0 %v1355
        %v1357 = vpop.f32.mrf.mxu0
        %v1358 = vadd.f32 0.0, %v1357
        %v1359 = vand.u32 %v1225, 4294901760
        %v1360 = vsub.f32 %v1225, %v1359
        %v1361 = vand.u32 %v1360, 4294901760
        %v1362 = vsub.f32 %v1360, %v1361
        %v1363 = vand.u32 %v1362, 4294901760
        %1364 = vmatmul.f32.gmra.mxu0 %v1363
        %v1365 = vpop.f32.mrf.mxu0
        %v1366 = vadd.f32 0.0, %v1365
        %v1367 = vand.u32 %v1228, 4294901760
        %v1368 = vsub.f32 %v1228, %v1367
        %v1369 = vand.u32 %v1368, 4294901760
        %v1370 = vsub.f32 %v1368, %v1369
        %v1371 = vand.u32 %v1370, 4294901760
        %1372 = vmatmul.f32.gmra.mxu0 %v1371
        %v1373 = vpop.f32.mrf.mxu0
        %v1374 = vadd.f32 0.0, %v1373
        %v1375 = vand.u32 %v1231, 4294901760
        %v1376 = vsub.f32 %v1231, %v1375
        %v1377 = vand.u32 %v1376, 4294901760
        %v1378 = vsub.f32 %v1376, %v1377
        %v1379 = vand.u32 %v1378, 4294901760
        %1380 = vmatmul.f32.gmra.mxu0 %v1379
        %v1381 = vpop.f32.mrf.mxu0
        %v1382 = vadd.f32 0.0, %v1381
        %v1383 = vand.u32 %v1234, 4294901760
        %v1384 = vsub.f32 %v1234, %v1383
        %v1385 = vand.u32 %v1384, 4294901760
        %v1386 = vsub.f32 %v1384, %v1385
        %v1387 = vand.u32 %v1386, 4294901760
        %1388 = vmatmul.f32.gmra.mxu0 %v1387
        %v1389 = vpop.f32.mrf.mxu0
        %v1390 = vadd.f32 0.0, %v1389
        %v1391 = vand.u32 %v1237, 4294901760
        %v1392 = vsub.f32 %v1237, %v1391
        %v1393 = vand.u32 %v1392, 4294901760
        %v1394 = vsub.f32 %v1392, %v1393
        %v1395 = vand.u32 %v1394, 4294901760
        %1396 = vmatmul.f32.gmra.mxu0 %v1395
        %v1397 = vpop.f32.mrf.mxu0
        %v1398 = vadd.f32 0.0, %v1397
        %v1399 = vand.u32 %v1240, 4294901760
        %v1400 = vsub.f32 %v1240, %v1399
        %v1401 = vand.u32 %v1400, 4294901760
        %v1402 = vsub.f32 %v1400, %v1401
        %v1403 = vand.u32 %v1402, 4294901760
        %1404 = vmatmul.f32.gmra.mxu0 %v1403
        %v1405 = vpop.f32.mrf.mxu0
        %v1406 = vadd.f32 0.0, %v1405
        %v1407 = vand.u32 %v1243, 4294901760
        %v1408 = vsub.f32 %v1243, %v1407
        %v1409 = vand.u32 %v1408, 4294901760
        %v1410 = vsub.f32 %v1408, %v1409
        %v1411 = vand.u32 %v1410, 4294901760
        %1412 = vmatmul.f32.gmra.mxu0 %v1411
        %v1413 = vpop.f32.mrf.mxu0
        %v1414 = vadd.f32 0.0, %v1413
        %v1415 = vand.u32 %v1246, 4294901760
        %v1416 = vsub.f32 %v1246, %v1415
        %v1417 = vand.u32 %v1416, 4294901760
        %v1418 = vsub.f32 %v1416, %v1417
        %v1419 = vand.u32 %v1418, 4294901760
        %1420 = vmatmul.f32.gmra.mxu0 %v1419
        %v1421 = vpop.f32.mrf.mxu0
        %v1422 = vadd.f32 0.0, %v1421
        %v1423 = vand.u32 %v1249, 4294901760
        %v1424 = vsub.f32 %v1249, %v1423
        %v1425 = vand.u32 %v1424, 4294901760
        %v1426 = vsub.f32 %v1424, %v1425
        %v1427 = vand.u32 %v1426, 4294901760
        %1428 = vmatmul.f32.gmra.mxu0 %v1427
        %v1429 = vpop.f32.mrf.mxu0
        %v1430 = vadd.f32 0.0, %v1429
        %v1431 = vand.u32 %v1252, 4294901760
        %v1432 = vsub.f32 %v1252, %v1431
        %v1433 = vand.u32 %v1432, 4294901760
        %v1434 = vsub.f32 %v1432, %v1433
        %v1435 = vand.u32 %v1434, 4294901760
        %1436 = vmatmul.f32.gmra.mxu0 %v1435
        %v1437 = vpop.f32.mrf.mxu0
        %v1438 = vadd.f32 0.0, %v1437
        %v1439 = vand.u32 %v1255, 4294901760
        %v1440 = vsub.f32 %v1255, %v1439
        %v1441 = vand.u32 %v1440, 4294901760
        %v1442 = vsub.f32 %v1440, %v1441
        %v1443 = vand.u32 %v1442, 4294901760
        %1444 = vmatmul.f32.gmra.mxu0 %v1443
        %v1445 = vpop.f32.mrf.mxu0
        %v1446 = vadd.f32 0.0, %v1445
        %v1447 = vand.u32 %v1258, 4294901760
        %v1448 = vsub.f32 %v1258, %v1447
        %v1449 = vand.u32 %v1448, 4294901760
        %v1450 = vsub.f32 %v1448, %v1449
        %v1451 = vand.u32 %v1450, 4294901760
        %1452 = vmatmul.f32.gmra.mxu0 %v1451
        %v1453 = vpop.f32.mrf.mxu0
        %v1454 = vadd.f32 0.0, %v1453
        %v1455 = vand.u32 %v1261, 4294901760
        %v1456 = vsub.f32 %v1261, %v1455
        %v1457 = vand.u32 %v1456, 4294901760
        %v1458 = vsub.f32 %v1456, %v1457
        %v1459 = vand.u32 %v1458, 4294901760
        %1460 = vmatmul.f32.gmra.mxu0 %v1459
        %v1461 = vpop.f32.mrf.mxu0
        %v1462 = vadd.f32 0.0, %v1461
        %v1463 = vand.u32 %v1264, 4294901760
        %v1464 = vsub.f32 %v1264, %v1463
        %v1465 = vand.u32 %v1464, 4294901760
        %v1466 = vsub.f32 %v1464, %v1465
        %v1467 = vand.u32 %v1466, 4294901760
        %1468 = vmatmul.f32.gmra.mxu0 %v1467
        %v1469 = vpop.f32.mrf.mxu0
        %v1470 = vadd.f32 0.0, %v1469
        %v1471 = vand.u32 %v1267, 4294901760
        %v1472 = vsub.f32 %v1267, %v1471
        %v1473 = vand.u32 %v1472, 4294901760
        %v1474 = vsub.f32 %v1472, %v1473
        %v1475 = vand.u32 %v1474, 4294901760
        %1476 = vmatmul.f32.gmra.mxu0 %v1475
        %v1477 = vpop.f32.mrf.mxu0
        %v1478 = vadd.f32 0.0, %v1477
        %1479 = vdwg.mxu0
        %1480 = vmatpush.msra.mxu0 0.0
        %1481 = vmatpush.msra.mxu0 0.0
        %1482 = vmatpush.msra.mxu0 0.0
        %1483 = vmatpush.msra.mxu0 0.0
        %1484 = vmatpush.msra.mxu0 0.0
        %1485 = vmatpush.msra.mxu0 0.0
        %1486 = vmatpush.msra.mxu0 0.0
        %1487 = vmatpush.msra.mxu0 0.0
        %1488 = vmatpush.msra.mxu0 0.0
        %1489 = vmatpush.msra.mxu0 0.0
        %1490 = vmatpush.msra.mxu0 0.0
        %1491 = vmatpush.msra.mxu0 0.0
        %1492 = vmatpush.msra.mxu0 0.0
        %1493 = vmatpush.msra.mxu0 0.0
        %v1494 = vand.u32 %v304, 4294901760
        %v1495 = vsub.f32 %v304, %v1494
        %v1496 = vand.u32 %v1495, 4294901760
        %v1497 = vsub.f32 %v1495, %v1496
        %v1498 = vand.u32 %v1497, 4294901760
        %1499 = vmatpush.msra.mxu0 %v1498
        %v1500 = vand.u32 %v303, 4294901760
        %v1501 = vsub.f32 %v303, %v1500
        %v1502 = vand.u32 %v1501, 4294901760
        %v1503 = vsub.f32 %v1501, %v1502
        %v1504 = vand.u32 %v1503, 4294901760
        %1505 = vmatpush.msra.mxu0 %v1504
        %v1506 = vand.u32 %v1198, 4294901760
        %1507 = vmatmul.f32.gmra.mxu0 %v1506
        %v1508 = vpop.f32.mrf.mxu0
        %v1509 = vadd.f32 %v1294, %v1508
        %v1510 = vand.u32 %v1201, 4294901760
        %1511 = vmatmul.f32.gmra.mxu0 %v1510
        %v1512 = vpop.f32.mrf.mxu0
        %v1513 = vadd.f32 %v1302, %v1512
        %v1514 = vand.u32 %v1204, 4294901760
        %1515 = vmatmul.f32.gmra.mxu0 %v1514
        %v1516 = vpop.f32.mrf.mxu0
        %v1517 = vadd.f32 %v1310, %v1516
        %v1518 = vand.u32 %v1207, 4294901760
        %1519 = vmatmul.f32.gmra.mxu0 %v1518
        %v1520 = vpop.f32.mrf.mxu0
        %v1521 = vadd.f32 %v1318, %v1520
        %v1522 = vand.u32 %v1210, 4294901760
        %1523 = vmatmul.f32.gmra.mxu0 %v1522
        %v1524 = vpop.f32.mrf.mxu0
        %v1525 = vadd.f32 %v1326, %v1524
        %v1526 = vand.u32 %v1213, 4294901760
        %1527 = vmatmul.f32.gmra.mxu0 %v1526
        %v1528 = vpop.f32.mrf.mxu0
        %v1529 = vadd.f32 %v1334, %v1528
        %v1530 = vand.u32 %v1216, 4294901760
        %1531 = vmatmul.f32.gmra.mxu0 %v1530
        %v1532 = vpop.f32.mrf.mxu0
        %v1533 = vadd.f32 %v1342, %v1532
        %v1534 = vand.u32 %v1219, 4294901760
        %1535 = vmatmul.f32.gmra.mxu0 %v1534
        %v1536 = vpop.f32.mrf.mxu0
        %v1537 = vadd.f32 %v1350, %v1536
        %v1538 = vand.u32 %v1222, 4294901760
        %1539 = vmatmul.f32.gmra.mxu0 %v1538
        %v1540 = vpop.f32.mrf.mxu0
        %v1541 = vadd.f32 %v1358, %v1540
        %v1542 = vand.u32 %v1225, 4294901760
        %1543 = vmatmul.f32.gmra.mxu0 %v1542
        %v1544 = vpop.f32.mrf.mxu0
        %v1545 = vadd.f32 %v1366, %v1544
        %v1546 = vand.u32 %v1228, 4294901760
        %1547 = vmatmul.f32.gmra.mxu0 %v1546
        %v1548 = vpop.f32.mrf.mxu0
        %v1549 = vadd.f32 %v1374, %v1548
        %v1550 = vand.u32 %v1231, 4294901760
        %1551 = vmatmul.f32.gmra.mxu0 %v1550
        %v1552 = vpop.f32.mrf.mxu0
        %v1553 = vadd.f32 %v1382, %v1552
        %v1554 = vand.u32 %v1234, 4294901760
        %1555 = vmatmul.f32.gmra.mxu0 %v1554
        %v1556 = vpop.f32.mrf.mxu0
        %v1557 = vadd.f32 %v1390, %v1556
        %v1558 = vand.u32 %v1237, 4294901760
        %1559 = vmatmul.f32.gmra.mxu0 %v1558
        %v1560 = vpop.f32.mrf.mxu0
        %v1561 = vadd.f32 %v1398, %v1560
        %v1562 = vand.u32 %v1240, 4294901760
        %1563 = vmatmul.f32.gmra.mxu0 %v1562
        %v1564 = vpop.f32.mrf.mxu0
        %v1565 = vadd.f32 %v1406, %v1564
        %v1566 = vand.u32 %v1243, 4294901760
        %1567 = vmatmul.f32.gmra.mxu0 %v1566
        %v1568 = vpop.f32.mrf.mxu0
        %v1569 = vadd.f32 %v1414, %v1568
        %v1570 = vand.u32 %v1246, 4294901760
        %1571 = vmatmul.f32.gmra.mxu0 %v1570
        %v1572 = vpop.f32.mrf.mxu0
        %v1573 = vadd.f32 %v1422, %v1572
        %v1574 = vand.u32 %v1249, 4294901760
        %1575 = vmatmul.f32.gmra.mxu0 %v1574
        %v1576 = vpop.f32.mrf.mxu0
        %v1577 = vadd.f32 %v1430, %v1576
        %v1578 = vand.u32 %v1252, 4294901760
        %1579 = vmatmul.f32.gmra.mxu0 %v1578
        %v1580 = vpop.f32.mrf.mxu0
        %v1581 = vadd.f32 %v1438, %v1580
        %v1582 = vand.u32 %v1255, 4294901760
        %1583 = vmatmul.f32.gmra.mxu0 %v1582
        %v1584 = vpop.f32.mrf.mxu0
        %v1585 = vadd.f32 %v1446, %v1584
        %v1586 = vand.u32 %v1258, 4294901760
        %1587 = vmatmul.f32.gmra.mxu0 %v1586
        %v1588 = vpop.f32.mrf.mxu0
        %v1589 = vadd.f32 %v1454, %v1588
        %v1590 = vand.u32 %v1261, 4294901760
        %1591 = vmatmul.f32.gmra.mxu0 %v1590
        %v1592 = vpop.f32.mrf.mxu0
        %v1593 = vadd.f32 %v1462, %v1592
        %v1594 = vand.u32 %v1264, 4294901760
        %1595 = vmatmul.f32.gmra.mxu0 %v1594
        %v1596 = vpop.f32.mrf.mxu0
        %v1597 = vadd.f32 %v1470, %v1596
        %v1598 = vand.u32 %v1267, 4294901760
        %1599 = vmatmul.f32.gmra.mxu0 %v1598
        %v1600 = vpop.f32.mrf.mxu0
        %v1601 = vadd.f32 %v1478, %v1600
        %1602 = vdwg.mxu0
        %1603 = vmatpush.msra.mxu0 0.0
        %1604 = vmatpush.msra.mxu0 0.0
        %1605 = vmatpush.msra.mxu0 0.0
        %1606 = vmatpush.msra.mxu0 0.0
        %1607 = vmatpush.msra.mxu0 0.0
        %1608 = vmatpush.msra.mxu0 0.0
        %1609 = vmatpush.msra.mxu0 0.0
        %1610 = vmatpush.msra.mxu0 0.0
        %1611 = vmatpush.msra.mxu0 0.0
        %1612 = vmatpush.msra.mxu0 0.0
        %1613 = vmatpush.msra.mxu0 0.0
        %1614 = vmatpush.msra.mxu0 0.0
        %1615 = vmatpush.msra.mxu0 0.0
        %1616 = vmatpush.msra.mxu0 0.0
        %v1617 = vand.u32 %v304, 4294901760
        %v1618 = vsub.f32 %v304, %v1617
        %1619 = vmatpush.msra.mxu0 %v1618
        %v1620 = vand.u32 %v303, 4294901760
        %v1621 = vsub.f32 %v303, %v1620
        %1622 = vmatpush.msra.mxu0 %v1621
        %v1623 = vand.u32 %v1198, 4294901760
        %v1624 = vsub.f32 %v1198, %v1623
        %1625 = vmatmul.f32.gmra.mxu0 %v1624
        %v1626 = vpop.f32.mrf.mxu0
        %v1627 = vadd.f32 %v1509, %v1626
        %v1628 = vand.u32 %v1201, 4294901760
        %v1629 = vsub.f32 %v1201, %v1628
        %1630 = vmatmul.f32.gmra.mxu0 %v1629
        %v1631 = vpop.f32.mrf.mxu0
        %v1632 = vadd.f32 %v1513, %v1631
        %v1633 = vand.u32 %v1204, 4294901760
        %v1634 = vsub.f32 %v1204, %v1633
        %1635 = vmatmul.f32.gmra.mxu0 %v1634
        %v1636 = vpop.f32.mrf.mxu0
        %v1637 = vadd.f32 %v1517, %v1636
        %v1638 = vand.u32 %v1207, 4294901760
        %v1639 = vsub.f32 %v1207, %v1638
        %1640 = vmatmul.f32.gmra.mxu0 %v1639
        %v1641 = vpop.f32.mrf.mxu0
        %v1642 = vadd.f32 %v1521, %v1641
        %v1643 = vand.u32 %v1210, 4294901760
        %v1644 = vsub.f32 %v1210, %v1643
        %1645 = vmatmul.f32.gmra.mxu0 %v1644
        %v1646 = vpop.f32.mrf.mxu0
        %v1647 = vadd.f32 %v1525, %v1646
        %v1648 = vand.u32 %v1213, 4294901760
        %v1649 = vsub.f32 %v1213, %v1648
        %1650 = vmatmul.f32.gmra.mxu0 %v1649
        %v1651 = vpop.f32.mrf.mxu0
        %v1652 = vadd.f32 %v1529, %v1651
        %v1653 = vand.u32 %v1216, 4294901760
        %v1654 = vsub.f32 %v1216, %v1653
        %1655 = vmatmul.f32.gmra.mxu0 %v1654
        %v1656 = vpop.f32.mrf.mxu0
        %v1657 = vadd.f32 %v1533, %v1656
        %v1658 = vand.u32 %v1219, 4294901760
        %v1659 = vsub.f32 %v1219, %v1658
        %1660 = vmatmul.f32.gmra.mxu0 %v1659
        %v1661 = vpop.f32.mrf.mxu0
        %v1662 = vadd.f32 %v1537, %v1661
        %v1663 = vand.u32 %v1222, 4294901760
        %v1664 = vsub.f32 %v1222, %v1663
        %1665 = vmatmul.f32.gmra.mxu0 %v1664
        %v1666 = vpop.f32.mrf.mxu0
        %v1667 = vadd.f32 %v1541, %v1666
        %v1668 = vand.u32 %v1225, 4294901760
        %v1669 = vsub.f32 %v1225, %v1668
        %1670 = vmatmul.f32.gmra.mxu0 %v1669
        %v1671 = vpop.f32.mrf.mxu0
        %v1672 = vadd.f32 %v1545, %v1671
        %v1673 = vand.u32 %v1228, 4294901760
        %v1674 = vsub.f32 %v1228, %v1673
        %1675 = vmatmul.f32.gmra.mxu0 %v1674
        %v1676 = vpop.f32.mrf.mxu0
        %v1677 = vadd.f32 %v1549, %v1676
        %v1678 = vand.u32 %v1231, 4294901760
        %v1679 = vsub.f32 %v1231, %v1678
        %1680 = vmatmul.f32.gmra.mxu0 %v1679
        %v1681 = vpop.f32.mrf.mxu0
        %v1682 = vadd.f32 %v1553, %v1681
        %v1683 = vand.u32 %v1234, 4294901760
        %v1684 = vsub.f32 %v1234, %v1683
        %1685 = vmatmul.f32.gmra.mxu0 %v1684
        %v1686 = vpop.f32.mrf.mxu0
        %v1687 = vadd.f32 %v1557, %v1686
        %v1688 = vand.u32 %v1237, 4294901760
        %v1689 = vsub.f32 %v1237, %v1688
        %1690 = vmatmul.f32.gmra.mxu0 %v1689
        %v1691 = vpop.f32.mrf.mxu0
        %v1692 = vadd.f32 %v1561, %v1691
        %v1693 = vand.u32 %v1240, 4294901760
        %v1694 = vsub.f32 %v1240, %v1693
        %1695 = vmatmul.f32.gmra.mxu0 %v1694
        %v1696 = vpop.f32.mrf.mxu0
        %v1697 = vadd.f32 %v1565, %v1696
        %v1698 = vand.u32 %v1243, 4294901760
        %v1699 = vsub.f32 %v1243, %v1698
        %1700 = vmatmul.f32.gmra.mxu0 %v1699
        %v1701 = vpop.f32.mrf.mxu0
        %v1702 = vadd.f32 %v1569, %v1701
        %v1703 = vand.u32 %v1246, 4294901760
        %v1704 = vsub.f32 %v1246, %v1703
        %1705 = vmatmul.f32.gmra.mxu0 %v1704
        %v1706 = vpop.f32.mrf.mxu0
        %v1707 = vadd.f32 %v1573, %v1706
        %v1708 = vand.u32 %v1249, 4294901760
        %v1709 = vsub.f32 %v1249, %v1708
        %1710 = vmatmul.f32.gmra.mxu0 %v1709
        %v1711 = vpop.f32.mrf.mxu0
        %v1712 = vadd.f32 %v1577, %v1711
        %v1713 = vand.u32 %v1252, 4294901760
        %v1714 = vsub.f32 %v1252, %v1713
        %1715 = vmatmul.f32.gmra.mxu0 %v1714
        %v1716 = vpop.f32.mrf.mxu0
        %v1717 = vadd.f32 %v1581, %v1716
        %v1718 = vand.u32 %v1255, 4294901760
        %v1719 = vsub.f32 %v1255, %v1718
        %1720 = vmatmul.f32.gmra.mxu0 %v1719
        %v1721 = vpop.f32.mrf.mxu0
        %v1722 = vadd.f32 %v1585, %v1721
        %v1723 = vand.u32 %v1258, 4294901760
        %v1724 = vsub.f32 %v1258, %v1723
        %1725 = vmatmul.f32.gmra.mxu0 %v1724
        %v1726 = vpop.f32.mrf.mxu0
        %v1727 = vadd.f32 %v1589, %v1726
        %v1728 = vand.u32 %v1261, 4294901760
        %v1729 = vsub.f32 %v1261, %v1728
        %1730 = vmatmul.f32.gmra.mxu0 %v1729
        %v1731 = vpop.f32.mrf.mxu0
        %v1732 = vadd.f32 %v1593, %v1731
        %v1733 = vand.u32 %v1264, 4294901760
        %v1734 = vsub.f32 %v1264, %v1733
        %1735 = vmatmul.f32.gmra.mxu0 %v1734
        %v1736 = vpop.f32.mrf.mxu0
        %v1737 = vadd.f32 %v1597, %v1736
        %v1738 = vand.u32 %v1267, 4294901760
        %v1739 = vsub.f32 %v1267, %v1738
        %1740 = vmatmul.f32.gmra.mxu0 %v1739
        %v1741 = vpop.f32.mrf.mxu0
        %v1742 = vadd.f32 %v1601, %v1741
        %1743 = vdwg.mxu0
        %1744 = vmatpush.msra.mxu0 0.0
        %1745 = vmatpush.msra.mxu0 0.0
        %1746 = vmatpush.msra.mxu0 0.0
        %1747 = vmatpush.msra.mxu0 0.0
        %1748 = vmatpush.msra.mxu0 0.0
        %1749 = vmatpush.msra.mxu0 0.0
        %1750 = vmatpush.msra.mxu0 0.0
        %1751 = vmatpush.msra.mxu0 0.0
        %1752 = vmatpush.msra.mxu0 0.0
        %1753 = vmatpush.msra.mxu0 0.0
        %1754 = vmatpush.msra.mxu0 0.0
        %1755 = vmatpush.msra.mxu0 0.0
        %1756 = vmatpush.msra.mxu0 0.0
        %1757 = vmatpush.msra.mxu0 0.0
        %v1758 = vand.u32 %v304, 4294901760
        %1759 = vmatpush.msra.mxu0 %v1758
        %v1760 = vand.u32 %v303, 4294901760
        %1761 = vmatpush.msra.mxu0 %v1760
        %v1762 = vand.u32 %v1198, 4294901760
        %v1763 = vsub.f32 %v1198, %v1762
        %v1764 = vand.u32 %v1763, 4294901760
        %1765 = vmatmul.f32.gmra.mxu0 %v1764
        %v1766 = vpop.f32.mrf.mxu0
        %v1767 = vadd.f32 %v1627, %v1766
        %v1768 = vand.u32 %v1201, 4294901760
        %v1769 = vsub.f32 %v1201, %v1768
        %v1770 = vand.u32 %v1769, 4294901760
        %1771 = vmatmul.f32.gmra.mxu0 %v1770
        %v1772 = vpop.f32.mrf.mxu0
        %v1773 = vadd.f32 %v1632, %v1772
        %v1774 = vand.u32 %v1204, 4294901760
        %v1775 = vsub.f32 %v1204, %v1774
        %v1776 = vand.u32 %v1775, 4294901760
        %1777 = vmatmul.f32.gmra.mxu0 %v1776
        %v1778 = vpop.f32.mrf.mxu0
        %v1779 = vadd.f32 %v1637, %v1778
        %v1780 = vand.u32 %v1207, 4294901760
        %v1781 = vsub.f32 %v1207, %v1780
        %v1782 = vand.u32 %v1781, 4294901760
        %1783 = vmatmul.f32.gmra.mxu0 %v1782
        %v1784 = vpop.f32.mrf.mxu0
        %v1785 = vadd.f32 %v1642, %v1784
        %v1786 = vand.u32 %v1210, 4294901760
        %v1787 = vsub.f32 %v1210, %v1786
        %v1788 = vand.u32 %v1787, 4294901760
        %1789 = vmatmul.f32.gmra.mxu0 %v1788
        %v1790 = vpop.f32.mrf.mxu0
        %v1791 = vadd.f32 %v1647, %v1790
        %v1792 = vand.u32 %v1213, 4294901760
        %v1793 = vsub.f32 %v1213, %v1792
        %v1794 = vand.u32 %v1793, 4294901760
        %1795 = vmatmul.f32.gmra.mxu0 %v1794
        %v1796 = vpop.f32.mrf.mxu0
        %v1797 = vadd.f32 %v1652, %v1796
        %v1798 = vand.u32 %v1216, 4294901760
        %v1799 = vsub.f32 %v1216, %v1798
        %v1800 = vand.u32 %v1799, 4294901760
        %1801 = vmatmul.f32.gmra.mxu0 %v1800
        %v1802 = vpop.f32.mrf.mxu0
        %v1803 = vadd.f32 %v1657, %v1802
        %v1804 = vand.u32 %v1219, 4294901760
        %v1805 = vsub.f32 %v1219, %v1804
        %v1806 = vand.u32 %v1805, 4294901760
        %1807 = vmatmul.f32.gmra.mxu0 %v1806
        %v1808 = vpop.f32.mrf.mxu0
        %v1809 = vadd.f32 %v1662, %v1808
        %v1810 = vand.u32 %v1222, 4294901760
        %v1811 = vsub.f32 %v1222, %v1810
        %v1812 = vand.u32 %v1811, 4294901760
        %1813 = vmatmul.f32.gmra.mxu0 %v1812
        %v1814 = vpop.f32.mrf.mxu0
        %v1815 = vadd.f32 %v1667, %v1814
        %v1816 = vand.u32 %v1225, 4294901760
        %v1817 = vsub.f32 %v1225, %v1816
        %v1818 = vand.u32 %v1817, 4294901760
        %1819 = vmatmul.f32.gmra.mxu0 %v1818
        %v1820 = vpop.f32.mrf.mxu0
        %v1821 = vadd.f32 %v1672, %v1820
        %v1822 = vand.u32 %v1228, 4294901760
        %v1823 = vsub.f32 %v1228, %v1822
        %v1824 = vand.u32 %v1823, 4294901760
        %1825 = vmatmul.f32.gmra.mxu0 %v1824
        %v1826 = vpop.f32.mrf.mxu0
        %v1827 = vadd.f32 %v1677, %v1826
        %v1828 = vand.u32 %v1231, 4294901760
        %v1829 = vsub.f32 %v1231, %v1828
        %v1830 = vand.u32 %v1829, 4294901760
        %1831 = vmatmul.f32.gmra.mxu0 %v1830
        %v1832 = vpop.f32.mrf.mxu0
        %v1833 = vadd.f32 %v1682, %v1832
        %v1834 = vand.u32 %v1234, 4294901760
        %v1835 = vsub.f32 %v1234, %v1834
        %v1836 = vand.u32 %v1835, 4294901760
        %1837 = vmatmul.f32.gmra.mxu0 %v1836
        %v1838 = vpop.f32.mrf.mxu0
        %v1839 = vadd.f32 %v1687, %v1838
        %v1840 = vand.u32 %v1237, 4294901760
        %v1841 = vsub.f32 %v1237, %v1840
        %v1842 = vand.u32 %v1841, 4294901760
        %1843 = vmatmul.f32.gmra.mxu0 %v1842
        %v1844 = vpop.f32.mrf.mxu0
        %v1845 = vadd.f32 %v1692, %v1844
        %v1846 = vand.u32 %v1240, 4294901760
        %v1847 = vsub.f32 %v1240, %v1846
        %v1848 = vand.u32 %v1847, 4294901760
        %1849 = vmatmul.f32.gmra.mxu0 %v1848
        %v1850 = vpop.f32.mrf.mxu0
        %v1851 = vadd.f32 %v1697, %v1850
        %v1852 = vand.u32 %v1243, 4294901760
        %v1853 = vsub.f32 %v1243, %v1852
        %v1854 = vand.u32 %v1853, 4294901760
        %1855 = vmatmul.f32.gmra.mxu0 %v1854
        %v1856 = vpop.f32.mrf.mxu0
        %v1857 = vadd.f32 %v1702, %v1856
        %v1858 = vand.u32 %v1246, 4294901760
        %v1859 = vsub.f32 %v1246, %v1858
        %v1860 = vand.u32 %v1859, 4294901760
        %1861 = vmatmul.f32.gmra.mxu0 %v1860
        %v1862 = vpop.f32.mrf.mxu0
        %v1863 = vadd.f32 %v1707, %v1862
        %v1864 = vand.u32 %v1249, 4294901760
        %v1865 = vsub.f32 %v1249, %v1864
        %v1866 = vand.u32 %v1865, 4294901760
        %1867 = vmatmul.f32.gmra.mxu0 %v1866
        %v1868 = vpop.f32.mrf.mxu0
        %v1869 = vadd.f32 %v1712, %v1868
        %v1870 = vand.u32 %v1252, 4294901760
        %v1871 = vsub.f32 %v1252, %v1870
        %v1872 = vand.u32 %v1871, 4294901760
        %1873 = vmatmul.f32.gmra.mxu0 %v1872
        %v1874 = vpop.f32.mrf.mxu0
        %v1875 = vadd.f32 %v1717, %v1874
        %v1876 = vand.u32 %v1255, 4294901760
        %v1877 = vsub.f32 %v1255, %v1876
        %v1878 = vand.u32 %v1877, 4294901760
        %1879 = vmatmul.f32.gmra.mxu0 %v1878
        %v1880 = vpop.f32.mrf.mxu0
        %v1881 = vadd.f32 %v1722, %v1880
        %v1882 = vand.u32 %v1258, 4294901760
        %v1883 = vsub.f32 %v1258, %v1882
        %v1884 = vand.u32 %v1883, 4294901760
        %1885 = vmatmul.f32.gmra.mxu0 %v1884
        %v1886 = vpop.f32.mrf.mxu0
        %v1887 = vadd.f32 %v1727, %v1886
        %v1888 = vand.u32 %v1261, 4294901760
        %v1889 = vsub.f32 %v1261, %v1888
        %v1890 = vand.u32 %v1889, 4294901760
        %1891 = vmatmul.f32.gmra.mxu0 %v1890
        %v1892 = vpop.f32.mrf.mxu0
        %v1893 = vadd.f32 %v1732, %v1892
        %v1894 = vand.u32 %v1264, 4294901760
        %v1895 = vsub.f32 %v1264, %v1894
        %v1896 = vand.u32 %v1895, 4294901760
        %1897 = vmatmul.f32.gmra.mxu0 %v1896
        %v1898 = vpop.f32.mrf.mxu0
        %v1899 = vadd.f32 %v1737, %v1898
        %v1900 = vand.u32 %v1267, 4294901760
        %v1901 = vsub.f32 %v1267, %v1900
        %v1902 = vand.u32 %v1901, 4294901760
        %1903 = vmatmul.f32.gmra.mxu0 %v1902
        %v1904 = vpop.f32.mrf.mxu0
        %v1905 = vadd.f32 %v1742, %v1904
        %1906 = vdwg.mxu0
        %1907 = vmatpush.msra.mxu0 0.0
        %1908 = vmatpush.msra.mxu0 0.0
        %1909 = vmatpush.msra.mxu0 0.0
        %1910 = vmatpush.msra.mxu0 0.0
        %1911 = vmatpush.msra.mxu0 0.0
        %1912 = vmatpush.msra.mxu0 0.0
        %1913 = vmatpush.msra.mxu0 0.0
        %1914 = vmatpush.msra.mxu0 0.0
        %1915 = vmatpush.msra.mxu0 0.0
        %1916 = vmatpush.msra.mxu0 0.0
        %1917 = vmatpush.msra.mxu0 0.0
        %1918 = vmatpush.msra.mxu0 0.0
        %1919 = vmatpush.msra.mxu0 0.0
        %1920 = vmatpush.msra.mxu0 0.0
        %v1921 = vand.u32 %v304, 4294901760
        %v1922 = vsub.f32 %v304, %v1921
        %v1923 = vand.u32 %v1922, 4294901760
        %1924 = vmatpush.msra.mxu0 %v1923
        %v1925 = vand.u32 %v303, 4294901760
        %v1926 = vsub.f32 %v303, %v1925
        %v1927 = vand.u32 %v1926, 4294901760
        %1928 = vmatpush.msra.mxu0 %v1927
        %v1929 = vand.u32 %v1198, 4294901760
        %1930 = vmatmul.f32.gmra.mxu0 %v1929
        %v1931 = vpop.f32.mrf.mxu0
        %v1932 = vadd.f32 %v1767, %v1931
        %v1933 = vand.u32 %v1201, 4294901760
        %1934 = vmatmul.f32.gmra.mxu0 %v1933
        %v1935 = vpop.f32.mrf.mxu0
        %v1936 = vadd.f32 %v1773, %v1935
        %v1937 = vand.u32 %v1204, 4294901760
        %1938 = vmatmul.f32.gmra.mxu0 %v1937
        %v1939 = vpop.f32.mrf.mxu0
        %v1940 = vadd.f32 %v1779, %v1939
        %v1941 = vand.u32 %v1207, 4294901760
        %1942 = vmatmul.f32.gmra.mxu0 %v1941
        %v1943 = vpop.f32.mrf.mxu0
        %v1944 = vadd.f32 %v1785, %v1943
        %v1945 = vand.u32 %v1210, 4294901760
        %1946 = vmatmul.f32.gmra.mxu0 %v1945
        %v1947 = vpop.f32.mrf.mxu0
        %v1948 = vadd.f32 %v1791, %v1947
        %v1949 = vand.u32 %v1213, 4294901760
        %1950 = vmatmul.f32.gmra.mxu0 %v1949
        %v1951 = vpop.f32.mrf.mxu0
        %v1952 = vadd.f32 %v1797, %v1951
        %v1953 = vand.u32 %v1216, 4294901760
        %1954 = vmatmul.f32.gmra.mxu0 %v1953
        %v1955 = vpop.f32.mrf.mxu0
        %v1956 = vadd.f32 %v1803, %v1955
        %v1957 = vand.u32 %v1219, 4294901760
        %1958 = vmatmul.f32.gmra.mxu0 %v1957
        %v1959 = vpop.f32.mrf.mxu0
        %v1960 = vadd.f32 %v1809, %v1959
        %v1961 = vand.u32 %v1222, 4294901760
        %1962 = vmatmul.f32.gmra.mxu0 %v1961
        %v1963 = vpop.f32.mrf.mxu0
        %v1964 = vadd.f32 %v1815, %v1963
        %v1965 = vand.u32 %v1225, 4294901760
        %1966 = vmatmul.f32.gmra.mxu0 %v1965
        %v1967 = vpop.f32.mrf.mxu0
        %v1968 = vadd.f32 %v1821, %v1967
        %v1969 = vand.u32 %v1228, 4294901760
        %1970 = vmatmul.f32.gmra.mxu0 %v1969
        %v1971 = vpop.f32.mrf.mxu0
        %v1972 = vadd.f32 %v1827, %v1971
        %v1973 = vand.u32 %v1231, 4294901760
        %1974 = vmatmul.f32.gmra.mxu0 %v1973
        %v1975 = vpop.f32.mrf.mxu0
        %v1976 = vadd.f32 %v1833, %v1975
        %v1977 = vand.u32 %v1234, 4294901760
        %1978 = vmatmul.f32.gmra.mxu0 %v1977
        %v1979 = vpop.f32.mrf.mxu0
        %v1980 = vadd.f32 %v1839, %v1979
        %v1981 = vand.u32 %v1237, 4294901760
        %1982 = vmatmul.f32.gmra.mxu0 %v1981
        %v1983 = vpop.f32.mrf.mxu0
        %v1984 = vadd.f32 %v1845, %v1983
        %v1985 = vand.u32 %v1240, 4294901760
        %1986 = vmatmul.f32.gmra.mxu0 %v1985
        %v1987 = vpop.f32.mrf.mxu0
        %v1988 = vadd.f32 %v1851, %v1987
        %v1989 = vand.u32 %v1243, 4294901760
        %1990 = vmatmul.f32.gmra.mxu0 %v1989
        %v1991 = vpop.f32.mrf.mxu0
        %v1992 = vadd.f32 %v1857, %v1991
        %v1993 = vand.u32 %v1246, 4294901760
        %1994 = vmatmul.f32.gmra.mxu0 %v1993
        %v1995 = vpop.f32.mrf.mxu0
        %v1996 = vadd.f32 %v1863, %v1995
        %v1997 = vand.u32 %v1249, 4294901760
        %1998 = vmatmul.f32.gmra.mxu0 %v1997
        %v1999 = vpop.f32.mrf.mxu0
        %v2000 = vadd.f32 %v1869, %v1999
        %v2001 = vand.u32 %v1252, 4294901760
        %2002 = vmatmul.f32.gmra.mxu0 %v2001
        %v2003 = vpop.f32.mrf.mxu0
        %v2004 = vadd.f32 %v1875, %v2003
        %v2005 = vand.u32 %v1255, 4294901760
        %2006 = vmatmul.f32.gmra.mxu0 %v2005
        %v2007 = vpop.f32.mrf.mxu0
        %v2008 = vadd.f32 %v1881, %v2007
        %v2009 = vand.u32 %v1258, 4294901760
        %2010 = vmatmul.f32.gmra.mxu0 %v2009
        %v2011 = vpop.f32.mrf.mxu0
        %v2012 = vadd.f32 %v1887, %v2011
        %v2013 = vand.u32 %v1261, 4294901760
        %2014 = vmatmul.f32.gmra.mxu0 %v2013
        %v2015 = vpop.f32.mrf.mxu0
        %v2016 = vadd.f32 %v1893, %v2015
        %v2017 = vand.u32 %v1264, 4294901760
        %2018 = vmatmul.f32.gmra.mxu0 %v2017
        %v2019 = vpop.f32.mrf.mxu0
        %v2020 = vadd.f32 %v1899, %v2019
        %v2021 = vand.u32 %v1267, 4294901760
        %2022 = vmatmul.f32.gmra.mxu0 %v2021
        %v2023 = vpop.f32.mrf.mxu0
        %v2024 = vadd.f32 %v1905, %v2023
        %2025 = vdwg.mxu0
        %2026 = vmatpush.msra.mxu0 0.0
        %2027 = vmatpush.msra.mxu0 0.0
        %2028 = vmatpush.msra.mxu0 0.0
        %2029 = vmatpush.msra.mxu0 0.0
        %2030 = vmatpush.msra.mxu0 0.0
        %2031 = vmatpush.msra.mxu0 0.0
        %2032 = vmatpush.msra.mxu0 0.0
        %2033 = vmatpush.msra.mxu0 0.0
        %2034 = vmatpush.msra.mxu0 0.0
        %2035 = vmatpush.msra.mxu0 0.0
        %2036 = vmatpush.msra.mxu0 0.0
        %2037 = vmatpush.msra.mxu0 0.0
        %2038 = vmatpush.msra.mxu0 0.0
        %2039 = vmatpush.msra.mxu0 0.0
        %v2040 = vand.u32 %v304, 4294901760
        %2041 = vmatpush.msra.mxu0 %v2040
        %v2042 = vand.u32 %v303, 4294901760
        %2043 = vmatpush.msra.mxu0 %v2042
        %v2044 = vand.u32 %v1198, 4294901760
        %2045 = vmatmul.f32.gmra.mxu0 %v2044
        %v2046 = vpop.f32.mrf.mxu0
        %v2047 = vadd.f32 %v1932, %v2046
        %v2048 = vand.u32 %v1201, 4294901760
        %2049 = vmatmul.f32.gmra.mxu0 %v2048
        %v2050 = vpop.f32.mrf.mxu0
        %v2051 = vadd.f32 %v1936, %v2050
        %v2052 = vand.u32 %v1204, 4294901760
        %2053 = vmatmul.f32.gmra.mxu0 %v2052
        %v2054 = vpop.f32.mrf.mxu0
        %v2055 = vadd.f32 %v1940, %v2054
        %v2056 = vand.u32 %v1207, 4294901760
        %2057 = vmatmul.f32.gmra.mxu0 %v2056
        %v2058 = vpop.f32.mrf.mxu0
        %v2059 = vadd.f32 %v1944, %v2058
        %v2060 = vand.u32 %v1210, 4294901760
        %2061 = vmatmul.f32.gmra.mxu0 %v2060
        %v2062 = vpop.f32.mrf.mxu0
        %v2063 = vadd.f32 %v1948, %v2062
        %v2064 = vand.u32 %v1213, 4294901760
        %2065 = vmatmul.f32.gmra.mxu0 %v2064
        %v2066 = vpop.f32.mrf.mxu0
        %v2067 = vadd.f32 %v1952, %v2066
        %v2068 = vand.u32 %v1216, 4294901760
        %2069 = vmatmul.f32.gmra.mxu0 %v2068
        %v2070 = vpop.f32.mrf.mxu0
        %v2071 = vadd.f32 %v1956, %v2070
        %v2072 = vand.u32 %v1219, 4294901760
        %2073 = vmatmul.f32.gmra.mxu0 %v2072
        %v2074 = vpop.f32.mrf.mxu0
        %v2075 = vadd.f32 %v1960, %v2074
        %v2076 = vand.u32 %v1222, 4294901760
        %2077 = vmatmul.f32.gmra.mxu0 %v2076
        %v2078 = vpop.f32.mrf.mxu0
        %v2079 = vadd.f32 %v1964, %v2078
        %v2080 = vand.u32 %v1225, 4294901760
        %2081 = vmatmul.f32.gmra.mxu0 %v2080
        %v2082 = vpop.f32.mrf.mxu0
        %v2083 = vadd.f32 %v1968, %v2082
        %v2084 = vand.u32 %v1228, 4294901760
        %2085 = vmatmul.f32.gmra.mxu0 %v2084
        %v2086 = vpop.f32.mrf.mxu0
        %v2087 = vadd.f32 %v1972, %v2086
        %v2088 = vand.u32 %v1231, 4294901760
        %2089 = vmatmul.f32.gmra.mxu0 %v2088
        %v2090 = vpop.f32.mrf.mxu0
        %v2091 = vadd.f32 %v1976, %v2090
        %v2092 = vand.u32 %v1234, 4294901760
        %2093 = vmatmul.f32.gmra.mxu0 %v2092
        %v2094 = vpop.f32.mrf.mxu0
        %v2095 = vadd.f32 %v1980, %v2094
        %v2096 = vand.u32 %v1237, 4294901760
        %2097 = vmatmul.f32.gmra.mxu0 %v2096
        %v2098 = vpop.f32.mrf.mxu0
        %v2099 = vadd.f32 %v1984, %v2098
        %v2100 = vand.u32 %v1240, 4294901760
        %2101 = vmatmul.f32.gmra.mxu0 %v2100
        %v2102 = vpop.f32.mrf.mxu0
        %v2103 = vadd.f32 %v1988, %v2102
        %v2104 = vand.u32 %v1243, 4294901760
        %2105 = vmatmul.f32.gmra.mxu0 %v2104
        %v2106 = vpop.f32.mrf.mxu0
        %v2107 = vadd.f32 %v1992, %v2106
        %v2108 = vand.u32 %v1246, 4294901760
        %2109 = vmatmul.f32.gmra.mxu0 %v2108
        %v2110 = vpop.f32.mrf.mxu0
        %v2111 = vadd.f32 %v1996, %v2110
        %v2112 = vand.u32 %v1249, 4294901760
        %2113 = vmatmul.f32.gmra.mxu0 %v2112
        %v2114 = vpop.f32.mrf.mxu0
        %v2115 = vadd.f32 %v2000, %v2114
        %v2116 = vand.u32 %v1252, 4294901760
        %2117 = vmatmul.f32.gmra.mxu0 %v2116
        %v2118 = vpop.f32.mrf.mxu0
        %v2119 = vadd.f32 %v2004, %v2118
        %v2120 = vand.u32 %v1255, 4294901760
        %2121 = vmatmul.f32.gmra.mxu0 %v2120
        %v2122 = vpop.f32.mrf.mxu0
        %v2123 = vadd.f32 %v2008, %v2122
        %v2124 = vand.u32 %v1258, 4294901760
        %2125 = vmatmul.f32.gmra.mxu0 %v2124
        %v2126 = vpop.f32.mrf.mxu0
        %v2127 = vadd.f32 %v2012, %v2126
        %v2128 = vand.u32 %v1261, 4294901760
        %2129 = vmatmul.f32.gmra.mxu0 %v2128
        %v2130 = vpop.f32.mrf.mxu0
        %v2131 = vadd.f32 %v2016, %v2130
        %v2132 = vand.u32 %v1264, 4294901760
        %2133 = vmatmul.f32.gmra.mxu0 %v2132
        %v2134 = vpop.f32.mrf.mxu0
        %v2135 = vadd.f32 %v2020, %v2134
        %v2136 = vand.u32 %v1267, 4294901760
        %2137 = vmatmul.f32.gmra.mxu0 %v2136
        %v2138 = vpop.f32.mrf.mxu0
        %v2139 = vadd.f32 %v2024, %v2138
        %2140 = vdwg.mxu0
        %vm2141 = vcmask 523264
        %v2143 = vsel %vm2141, %v305, 0
        %v2146 = vsel %vm2141, %v306, 0
        %v2149 = vsel %vm2141, %v307, 0
        %2151 = vmatpush.msra.mxu0 0.0
        %2152 = vmatpush.msra.mxu0 0.0
        %2153 = vmatpush.msra.mxu0 0.0
        %2154 = vmatpush.msra.mxu0 0.0
        %2155 = vmatpush.msra.mxu0 0.0
        %2156 = vmatpush.msra.mxu0 0.0
        %2157 = vmatpush.msra.mxu0 0.0
        %2158 = vmatpush.msra.mxu0 0.0
        %v2159 = vand.u32 %v771, 4294901760
        %2160 = vmatpush.msra.mxu0 %v2159
        %v2161 = vand.u32 %v767, 4294901760
        %2162 = vmatpush.msra.mxu0 %v2161
        %v2163 = vand.u32 %v763, 4294901760
        %2164 = vmatpush.msra.mxu0 %v2163
        %v2165 = vand.u32 %v759, 4294901760
        %2166 = vmatpush.msra.mxu0 %v2165
        %v2167 = vand.u32 %v755, 4294901760
        %2168 = vmatpush.msra.mxu0 %v2167
        %v2169 = vand.u32 %v751, 4294901760
        %2170 = vmatpush.msra.mxu0 %v2169
        %v2171 = vand.u32 %v747, 4294901760
        %2172 = vmatpush.msra.mxu0 %v2171
        %v2173 = vand.u32 %v743, 4294901760
        %2174 = vmatpush.msra.mxu0 %v2173
        %v2175 = vand.u32 %v2143, 4294901760
        %v2176 = vsub.f32 %v2143, %v2175
        %v2177 = vand.u32 %v2176, 4294901760
        %v2178 = vsub.f32 %v2176, %v2177
        %v2179 = vand.u32 %v2178, 4294901760
        %2180 = vmatmul.f32.gmra.mxu0 %v2179
        %v2181 = vpop.f32.mrf.mxu0
        %v2182 = vadd.f32 0.0, %v2181
        %v2183 = vand.u32 %v2146, 4294901760
        %v2184 = vsub.f32 %v2146, %v2183
        %v2185 = vand.u32 %v2184, 4294901760
        %v2186 = vsub.f32 %v2184, %v2185
        %v2187 = vand.u32 %v2186, 4294901760
        %2188 = vmatmul.f32.gmra.mxu0 %v2187
        %v2189 = vpop.f32.mrf.mxu0
        %v2190 = vadd.f32 0.0, %v2189
        %v2191 = vand.u32 %v2149, 4294901760
        %v2192 = vsub.f32 %v2149, %v2191
        %v2193 = vand.u32 %v2192, 4294901760
        %v2194 = vsub.f32 %v2192, %v2193
        %v2195 = vand.u32 %v2194, 4294901760
        %2196 = vmatmul.f32.gmra.mxu0 %v2195
        %v2197 = vpop.f32.mrf.mxu0
        %v2198 = vadd.f32 0.0, %v2197
        %2199 = vdwg.mxu0
        %2200 = vmatpush.msra.mxu0 0.0
        %2201 = vmatpush.msra.mxu0 0.0
        %2202 = vmatpush.msra.mxu0 0.0
        %2203 = vmatpush.msra.mxu0 0.0
        %2204 = vmatpush.msra.mxu0 0.0
        %2205 = vmatpush.msra.mxu0 0.0
        %2206 = vmatpush.msra.mxu0 0.0
        %2207 = vmatpush.msra.mxu0 0.0
        %v2208 = vand.u32 %v771, 4294901760
        %v2209 = vsub.f32 %v771, %v2208
        %v2210 = vand.u32 %v2209, 4294901760
        %v2211 = vsub.f32 %v2209, %v2210
        %v2212 = vand.u32 %v2211, 4294901760
        %2213 = vmatpush.msra.mxu0 %v2212
        %v2214 = vand.u32 %v767, 4294901760
        %v2215 = vsub.f32 %v767, %v2214
        %v2216 = vand.u32 %v2215, 4294901760
        %v2217 = vsub.f32 %v2215, %v2216
        %v2218 = vand.u32 %v2217, 4294901760
        %2219 = vmatpush.msra.mxu0 %v2218
        %v2220 = vand.u32 %v763, 4294901760
        %v2221 = vsub.f32 %v763, %v2220
        %v2222 = vand.u32 %v2221, 4294901760
        %v2223 = vsub.f32 %v2221, %v2222
        %v2224 = vand.u32 %v2223, 4294901760
        %2225 = vmatpush.msra.mxu0 %v2224
        %v2226 = vand.u32 %v759, 4294901760
        %v2227 = vsub.f32 %v759, %v2226
        %v2228 = vand.u32 %v2227, 4294901760
        %v2229 = vsub.f32 %v2227, %v2228
        %v2230 = vand.u32 %v2229, 4294901760
        %2231 = vmatpush.msra.mxu0 %v2230
        %v2232 = vand.u32 %v755, 4294901760
        %v2233 = vsub.f32 %v755, %v2232
        %v2234 = vand.u32 %v2233, 4294901760
        %v2235 = vsub.f32 %v2233, %v2234
        %v2236 = vand.u32 %v2235, 4294901760
        %2237 = vmatpush.msra.mxu0 %v2236
        %v2238 = vand.u32 %v751, 4294901760
        %v2239 = vsub.f32 %v751, %v2238
        %v2240 = vand.u32 %v2239, 4294901760
        %v2241 = vsub.f32 %v2239, %v2240
        %v2242 = vand.u32 %v2241, 4294901760
        %2243 = vmatpush.msra.mxu0 %v2242
        %v2244 = vand.u32 %v747, 4294901760
        %v2245 = vsub.f32 %v747, %v2244
        %v2246 = vand.u32 %v2245, 4294901760
        %v2247 = vsub.f32 %v2245, %v2246
        %v2248 = vand.u32 %v2247, 4294901760
        %2249 = vmatpush.msra.mxu0 %v2248
        %v2250 = vand.u32 %v743, 4294901760
        %v2251 = vsub.f32 %v743, %v2250
        %v2252 = vand.u32 %v2251, 4294901760
        %v2253 = vsub.f32 %v2251, %v2252
        %v2254 = vand.u32 %v2253, 4294901760
        %2255 = vmatpush.msra.mxu0 %v2254
        %v2256 = vand.u32 %v2143, 4294901760
        %2257 = vmatmul.f32.gmra.mxu0 %v2256
        %v2258 = vpop.f32.mrf.mxu0
        %v2259 = vadd.f32 %v2182, %v2258
        %v2260 = vand.u32 %v2146, 4294901760
        %2261 = vmatmul.f32.gmra.mxu0 %v2260
        %v2262 = vpop.f32.mrf.mxu0
        %v2263 = vadd.f32 %v2190, %v2262
        %v2264 = vand.u32 %v2149, 4294901760
        %2265 = vmatmul.f32.gmra.mxu0 %v2264
        %v2266 = vpop.f32.mrf.mxu0
        %v2267 = vadd.f32 %v2198, %v2266
        %2268 = vdwg.mxu0
        %2269 = vmatpush.msra.mxu0 0.0
        %2270 = vmatpush.msra.mxu0 0.0
        %2271 = vmatpush.msra.mxu0 0.0
        %2272 = vmatpush.msra.mxu0 0.0
        %2273 = vmatpush.msra.mxu0 0.0
        %2274 = vmatpush.msra.mxu0 0.0
        %2275 = vmatpush.msra.mxu0 0.0
        %2276 = vmatpush.msra.mxu0 0.0
        %v2277 = vand.u32 %v771, 4294901760
        %v2278 = vsub.f32 %v771, %v2277
        %2279 = vmatpush.msra.mxu0 %v2278
        %v2280 = vand.u32 %v767, 4294901760
        %v2281 = vsub.f32 %v767, %v2280
        %2282 = vmatpush.msra.mxu0 %v2281
        %v2283 = vand.u32 %v763, 4294901760
        %v2284 = vsub.f32 %v763, %v2283
        %2285 = vmatpush.msra.mxu0 %v2284
        %v2286 = vand.u32 %v759, 4294901760
        %v2287 = vsub.f32 %v759, %v2286
        %2288 = vmatpush.msra.mxu0 %v2287
        %v2289 = vand.u32 %v755, 4294901760
        %v2290 = vsub.f32 %v755, %v2289
        %2291 = vmatpush.msra.mxu0 %v2290
        %v2292 = vand.u32 %v751, 4294901760
        %v2293 = vsub.f32 %v751, %v2292
        %2294 = vmatpush.msra.mxu0 %v2293
        %v2295 = vand.u32 %v747, 4294901760
        %v2296 = vsub.f32 %v747, %v2295
        %2297 = vmatpush.msra.mxu0 %v2296
        %v2298 = vand.u32 %v743, 4294901760
        %v2299 = vsub.f32 %v743, %v2298
        %2300 = vmatpush.msra.mxu0 %v2299
        %v2301 = vand.u32 %v2143, 4294901760
        %v2302 = vsub.f32 %v2143, %v2301
        %2303 = vmatmul.f32.gmra.mxu0 %v2302
        %v2304 = vpop.f32.mrf.mxu0
        %v2305 = vadd.f32 %v2259, %v2304
        %v2306 = vand.u32 %v2146, 4294901760
        %v2307 = vsub.f32 %v2146, %v2306
        %2308 = vmatmul.f32.gmra.mxu0 %v2307
        %v2309 = vpop.f32.mrf.mxu0
        %v2310 = vadd.f32 %v2263, %v2309
        %v2311 = vand.u32 %v2149, 4294901760
        %v2312 = vsub.f32 %v2149, %v2311
        %2313 = vmatmul.f32.gmra.mxu0 %v2312
        %v2314 = vpop.f32.mrf.mxu0
        %v2315 = vadd.f32 %v2267, %v2314
        %2316 = vdwg.mxu0
        %2317 = vmatpush.msra.mxu0 0.0
        %2318 = vmatpush.msra.mxu0 0.0
        %2319 = vmatpush.msra.mxu0 0.0
        %2320 = vmatpush.msra.mxu0 0.0
        %2321 = vmatpush.msra.mxu0 0.0
        %2322 = vmatpush.msra.mxu0 0.0
        %2323 = vmatpush.msra.mxu0 0.0
        %2324 = vmatpush.msra.mxu0 0.0
        %v2325 = vand.u32 %v771, 4294901760
        %2326 = vmatpush.msra.mxu0 %v2325
        %v2327 = vand.u32 %v767, 4294901760
        %2328 = vmatpush.msra.mxu0 %v2327
        %v2329 = vand.u32 %v763, 4294901760
        %2330 = vmatpush.msra.mxu0 %v2329
        %v2331 = vand.u32 %v759, 4294901760
        %2332 = vmatpush.msra.mxu0 %v2331
        %v2333 = vand.u32 %v755, 4294901760
        %2334 = vmatpush.msra.mxu0 %v2333
        %v2335 = vand.u32 %v751, 4294901760
        %2336 = vmatpush.msra.mxu0 %v2335
        %v2337 = vand.u32 %v747, 4294901760
        %2338 = vmatpush.msra.mxu0 %v2337
        %v2339 = vand.u32 %v743, 4294901760
        %2340 = vmatpush.msra.mxu0 %v2339
        %v2341 = vand.u32 %v2143, 4294901760
        %v2342 = vsub.f32 %v2143, %v2341
        %v2343 = vand.u32 %v2342, 4294901760
        %2344 = vmatmul.f32.gmra.mxu0 %v2343
        %v2345 = vpop.f32.mrf.mxu0
        %v2346 = vadd.f32 %v2305, %v2345
        %v2347 = vand.u32 %v2146, 4294901760
        %v2348 = vsub.f32 %v2146, %v2347
        %v2349 = vand.u32 %v2348, 4294901760
        %2350 = vmatmul.f32.gmra.mxu0 %v2349
        %v2351 = vpop.f32.mrf.mxu0
        %v2352 = vadd.f32 %v2310, %v2351
        %v2353 = vand.u32 %v2149, 4294901760
        %v2354 = vsub.f32 %v2149, %v2353
        %v2355 = vand.u32 %v2354, 4294901760
        %2356 = vmatmul.f32.gmra.mxu0 %v2355
        %v2357 = vpop.f32.mrf.mxu0
        %v2358 = vadd.f32 %v2315, %v2357
        %2359 = vdwg.mxu0
        %2360 = vmatpush.msra.mxu0 0.0
        %2361 = vmatpush.msra.mxu0 0.0
        %2362 = vmatpush.msra.mxu0 0.0
        %2363 = vmatpush.msra.mxu0 0.0
        %2364 = vmatpush.msra.mxu0 0.0
        %2365 = vmatpush.msra.mxu0 0.0
        %2366 = vmatpush.msra.mxu0 0.0
        %2367 = vmatpush.msra.mxu0 0.0
        %v2368 = vand.u32 %v771, 4294901760
        %v2369 = vsub.f32 %v771, %v2368
        %v2370 = vand.u32 %v2369, 4294901760
        %2371 = vmatpush.msra.mxu0 %v2370
        %v2372 = vand.u32 %v767, 4294901760
        %v2373 = vsub.f32 %v767, %v2372
        %v2374 = vand.u32 %v2373, 4294901760
        %2375 = vmatpush.msra.mxu0 %v2374
        %v2376 = vand.u32 %v763, 4294901760
        %v2377 = vsub.f32 %v763, %v2376
        %v2378 = vand.u32 %v2377, 4294901760
        %2379 = vmatpush.msra.mxu0 %v2378
        %v2380 = vand.u32 %v759, 4294901760
        %v2381 = vsub.f32 %v759, %v2380
        %v2382 = vand.u32 %v2381, 4294901760
        %2383 = vmatpush.msra.mxu0 %v2382
        %v2384 = vand.u32 %v755, 4294901760
        %v2385 = vsub.f32 %v755, %v2384
        %v2386 = vand.u32 %v2385, 4294901760
        %2387 = vmatpush.msra.mxu0 %v2386
        %v2388 = vand.u32 %v751, 4294901760
        %v2389 = vsub.f32 %v751, %v2388
        %v2390 = vand.u32 %v2389, 4294901760
        %2391 = vmatpush.msra.mxu0 %v2390
        %v2392 = vand.u32 %v747, 4294901760
        %v2393 = vsub.f32 %v747, %v2392
        %v2394 = vand.u32 %v2393, 4294901760
        %2395 = vmatpush.msra.mxu0 %v2394
        %v2396 = vand.u32 %v743, 4294901760
        %v2397 = vsub.f32 %v743, %v2396
        %v2398 = vand.u32 %v2397, 4294901760
        %2399 = vmatpush.msra.mxu0 %v2398
        %v2400 = vand.u32 %v2143, 4294901760
        %2401 = vmatmul.f32.gmra.mxu0 %v2400
        %v2402 = vpop.f32.mrf.mxu0
        %v2403 = vadd.f32 %v2346, %v2402
        %v2404 = vand.u32 %v2146, 4294901760
        %2405 = vmatmul.f32.gmra.mxu0 %v2404
        %v2406 = vpop.f32.mrf.mxu0
        %v2407 = vadd.f32 %v2352, %v2406
        %v2408 = vand.u32 %v2149, 4294901760
        %2409 = vmatmul.f32.gmra.mxu0 %v2408
        %v2410 = vpop.f32.mrf.mxu0
        %v2411 = vadd.f32 %v2358, %v2410
        %2412 = vdwg.mxu0
        %2413 = vmatpush.msra.mxu0 0.0
        %2414 = vmatpush.msra.mxu0 0.0
        %2415 = vmatpush.msra.mxu0 0.0
        %2416 = vmatpush.msra.mxu0 0.0
        %2417 = vmatpush.msra.mxu0 0.0
        %2418 = vmatpush.msra.mxu0 0.0
        %2419 = vmatpush.msra.mxu0 0.0
        %2420 = vmatpush.msra.mxu0 0.0
        %v2421 = vand.u32 %v771, 4294901760
        %2422 = vmatpush.msra.mxu0 %v2421
        %v2423 = vand.u32 %v767, 4294901760
        %2424 = vmatpush.msra.mxu0 %v2423
        %v2425 = vand.u32 %v763, 4294901760
        %2426 = vmatpush.msra.mxu0 %v2425
        %v2427 = vand.u32 %v759, 4294901760
        %2428 = vmatpush.msra.mxu0 %v2427
        %v2429 = vand.u32 %v755, 4294901760
        %2430 = vmatpush.msra.mxu0 %v2429
        %v2431 = vand.u32 %v751, 4294901760
        %2432 = vmatpush.msra.mxu0 %v2431
        %v2433 = vand.u32 %v747, 4294901760
        %2434 = vmatpush.msra.mxu0 %v2433
        %v2435 = vand.u32 %v743, 4294901760
        %2436 = vmatpush.msra.mxu0 %v2435
        %v2437 = vand.u32 %v2143, 4294901760
        %2438 = vmatmul.f32.gmra.mxu0 %v2437
        %v2439 = vpop.f32.mrf.mxu0
        %v2440 = vadd.f32 %v2403, %v2439
        %v2441 = vand.u32 %v2146, 4294901760
        %2442 = vmatmul.f32.gmra.mxu0 %v2441
        %v2443 = vpop.f32.mrf.mxu0
        %v2444 = vadd.f32 %v2407, %v2443
        %v2445 = vand.u32 %v2149, 4294901760
        %2446 = vmatmul.f32.gmra.mxu0 %v2445
        %v2447 = vpop.f32.mrf.mxu0
        %v2448 = vadd.f32 %v2411, %v2447
        %2449 = vdwg.mxu0
        %2450 = vmatpush.msra.mxu0 0.0
        %2451 = vmatpush.msra.mxu0 0.0
        %2452 = vmatpush.msra.mxu0 0.0
        %2453 = vmatpush.msra.mxu0 0.0
        %2454 = vmatpush.msra.mxu0 0.0
        %2455 = vmatpush.msra.mxu0 0.0
        %2456 = vmatpush.msra.mxu0 0.0
        %2457 = vmatpush.msra.mxu0 0.0
        %v2458 = vand.u32 %v1171, 4294901760
        %2459 = vmatpush.msra.mxu0 %v2458
        %v2460 = vand.u32 %v1167, 4294901760
        %2461 = vmatpush.msra.mxu0 %v2460
        %v2462 = vand.u32 %v1163, 4294901760
        %2463 = vmatpush.msra.mxu0 %v2462
        %v2464 = vand.u32 %v1159, 4294901760
        %2465 = vmatpush.msra.mxu0 %v2464
        %v2466 = vand.u32 %v1155, 4294901760
        %2467 = vmatpush.msra.mxu0 %v2466
        %v2468 = vand.u32 %v1151, 4294901760
        %2469 = vmatpush.msra.mxu0 %v2468
        %v2470 = vand.u32 %v1147, 4294901760
        %2471 = vmatpush.msra.mxu0 %v2470
        %v2472 = vand.u32 %v1143, 4294901760
        %2473 = vmatpush.msra.mxu0 %v2472
        %v2474 = vand.u32 %v2143, 4294901760
        %v2475 = vsub.f32 %v2143, %v2474
        %v2476 = vand.u32 %v2475, 4294901760
        %v2477 = vsub.f32 %v2475, %v2476
        %v2478 = vand.u32 %v2477, 4294901760
        %2479 = vmatmul.f32.gmra.mxu0 %v2478
        %v2480 = vpop.f32.mrf.mxu0
        %v2481 = vadd.f32 0.0, %v2480
        %v2482 = vand.u32 %v2146, 4294901760
        %v2483 = vsub.f32 %v2146, %v2482
        %v2484 = vand.u32 %v2483, 4294901760
        %v2485 = vsub.f32 %v2483, %v2484
        %v2486 = vand.u32 %v2485, 4294901760
        %2487 = vmatmul.f32.gmra.mxu0 %v2486
        %v2488 = vpop.f32.mrf.mxu0
        %v2489 = vadd.f32 0.0, %v2488
        %v2490 = vand.u32 %v2149, 4294901760
        %v2491 = vsub.f32 %v2149, %v2490
        %v2492 = vand.u32 %v2491, 4294901760
        %v2493 = vsub.f32 %v2491, %v2492
        %v2494 = vand.u32 %v2493, 4294901760
        %2495 = vmatmul.f32.gmra.mxu0 %v2494
        %v2496 = vpop.f32.mrf.mxu0
        %v2497 = vadd.f32 0.0, %v2496
        %2498 = vdwg.mxu0
        %2499 = vmatpush.msra.mxu0 0.0
        %2500 = vmatpush.msra.mxu0 0.0
        %2501 = vmatpush.msra.mxu0 0.0
        %2502 = vmatpush.msra.mxu0 0.0
        %2503 = vmatpush.msra.mxu0 0.0
        %2504 = vmatpush.msra.mxu0 0.0
        %2505 = vmatpush.msra.mxu0 0.0
        %2506 = vmatpush.msra.mxu0 0.0
        %v2507 = vand.u32 %v1171, 4294901760
        %v2508 = vsub.f32 %v1171, %v2507
        %v2509 = vand.u32 %v2508, 4294901760
        %v2510 = vsub.f32 %v2508, %v2509
        %v2511 = vand.u32 %v2510, 4294901760
        %2512 = vmatpush.msra.mxu0 %v2511
        %v2513 = vand.u32 %v1167, 4294901760
        %v2514 = vsub.f32 %v1167, %v2513
        %v2515 = vand.u32 %v2514, 4294901760
        %v2516 = vsub.f32 %v2514, %v2515
        %v2517 = vand.u32 %v2516, 4294901760
        %2518 = vmatpush.msra.mxu0 %v2517
        %v2519 = vand.u32 %v1163, 4294901760
        %v2520 = vsub.f32 %v1163, %v2519
        %v2521 = vand.u32 %v2520, 4294901760
        %v2522 = vsub.f32 %v2520, %v2521
        %v2523 = vand.u32 %v2522, 4294901760
        %2524 = vmatpush.msra.mxu0 %v2523
        %v2525 = vand.u32 %v1159, 4294901760
        %v2526 = vsub.f32 %v1159, %v2525
        %v2527 = vand.u32 %v2526, 4294901760
        %v2528 = vsub.f32 %v2526, %v2527
        %v2529 = vand.u32 %v2528, 4294901760
        %2530 = vmatpush.msra.mxu0 %v2529
        %v2531 = vand.u32 %v1155, 4294901760
        %v2532 = vsub.f32 %v1155, %v2531
        %v2533 = vand.u32 %v2532, 4294901760
        %v2534 = vsub.f32 %v2532, %v2533
        %v2535 = vand.u32 %v2534, 4294901760
        %2536 = vmatpush.msra.mxu0 %v2535
        %v2537 = vand.u32 %v1151, 4294901760
        %v2538 = vsub.f32 %v1151, %v2537
        %v2539 = vand.u32 %v2538, 4294901760
        %v2540 = vsub.f32 %v2538, %v2539
        %v2541 = vand.u32 %v2540, 4294901760
        %2542 = vmatpush.msra.mxu0 %v2541
        %v2543 = vand.u32 %v1147, 4294901760
        %v2544 = vsub.f32 %v1147, %v2543
        %v2545 = vand.u32 %v2544, 4294901760
        %v2546 = vsub.f32 %v2544, %v2545
        %v2547 = vand.u32 %v2546, 4294901760
        %2548 = vmatpush.msra.mxu0 %v2547
        %v2549 = vand.u32 %v1143, 4294901760
        %v2550 = vsub.f32 %v1143, %v2549
        %v2551 = vand.u32 %v2550, 4294901760
        %v2552 = vsub.f32 %v2550, %v2551
        %v2553 = vand.u32 %v2552, 4294901760
        %2554 = vmatpush.msra.mxu0 %v2553
        %v2555 = vand.u32 %v2143, 4294901760
        %2556 = vmatmul.f32.gmra.mxu0 %v2555
        %v2557 = vpop.f32.mrf.mxu0
        %v2558 = vadd.f32 %v2481, %v2557
        %v2559 = vand.u32 %v2146, 4294901760
        %2560 = vmatmul.f32.gmra.mxu0 %v2559
        %v2561 = vpop.f32.mrf.mxu0
        %v2562 = vadd.f32 %v2489, %v2561
        %v2563 = vand.u32 %v2149, 4294901760
        %2564 = vmatmul.f32.gmra.mxu0 %v2563
        %v2565 = vpop.f32.mrf.mxu0
        %v2566 = vadd.f32 %v2497, %v2565
        %2567 = vdwg.mxu0
        %2568 = vmatpush.msra.mxu0 0.0
        %2569 = vmatpush.msra.mxu0 0.0
        %2570 = vmatpush.msra.mxu0 0.0
        %2571 = vmatpush.msra.mxu0 0.0
        %2572 = vmatpush.msra.mxu0 0.0
        %2573 = vmatpush.msra.mxu0 0.0
        %2574 = vmatpush.msra.mxu0 0.0
        %2575 = vmatpush.msra.mxu0 0.0
        %v2576 = vand.u32 %v1171, 4294901760
        %v2577 = vsub.f32 %v1171, %v2576
        %2578 = vmatpush.msra.mxu0 %v2577
        %v2579 = vand.u32 %v1167, 4294901760
        %v2580 = vsub.f32 %v1167, %v2579
        %2581 = vmatpush.msra.mxu0 %v2580
        %v2582 = vand.u32 %v1163, 4294901760
        %v2583 = vsub.f32 %v1163, %v2582
        %2584 = vmatpush.msra.mxu0 %v2583
        %v2585 = vand.u32 %v1159, 4294901760
        %v2586 = vsub.f32 %v1159, %v2585
        %2587 = vmatpush.msra.mxu0 %v2586
        %v2588 = vand.u32 %v1155, 4294901760
        %v2589 = vsub.f32 %v1155, %v2588
        %2590 = vmatpush.msra.mxu0 %v2589
        %v2591 = vand.u32 %v1151, 4294901760
        %v2592 = vsub.f32 %v1151, %v2591
        %2593 = vmatpush.msra.mxu0 %v2592
        %v2594 = vand.u32 %v1147, 4294901760
        %v2595 = vsub.f32 %v1147, %v2594
        %2596 = vmatpush.msra.mxu0 %v2595
        %v2597 = vand.u32 %v1143, 4294901760
        %v2598 = vsub.f32 %v1143, %v2597
        %2599 = vmatpush.msra.mxu0 %v2598
        %v2600 = vand.u32 %v2143, 4294901760
        %v2601 = vsub.f32 %v2143, %v2600
        %2602 = vmatmul.f32.gmra.mxu0 %v2601
        %v2603 = vpop.f32.mrf.mxu0
        %v2604 = vadd.f32 %v2558, %v2603
        %v2605 = vand.u32 %v2146, 4294901760
        %v2606 = vsub.f32 %v2146, %v2605
        %2607 = vmatmul.f32.gmra.mxu0 %v2606
        %v2608 = vpop.f32.mrf.mxu0
        %v2609 = vadd.f32 %v2562, %v2608
        %v2610 = vand.u32 %v2149, 4294901760
        %v2611 = vsub.f32 %v2149, %v2610
        %2612 = vmatmul.f32.gmra.mxu0 %v2611
        %v2613 = vpop.f32.mrf.mxu0
        %v2614 = vadd.f32 %v2566, %v2613
        %2615 = vdwg.mxu0
        %2616 = vmatpush.msra.mxu0 0.0
        %2617 = vmatpush.msra.mxu0 0.0
        %2618 = vmatpush.msra.mxu0 0.0
        %2619 = vmatpush.msra.mxu0 0.0
        %2620 = vmatpush.msra.mxu0 0.0
        %2621 = vmatpush.msra.mxu0 0.0
        %2622 = vmatpush.msra.mxu0 0.0
        %2623 = vmatpush.msra.mxu0 0.0
        %v2624 = vand.u32 %v1171, 4294901760
        %2625 = vmatpush.msra.mxu0 %v2624
        %v2626 = vand.u32 %v1167, 4294901760
        %2627 = vmatpush.msra.mxu0 %v2626
        %v2628 = vand.u32 %v1163, 4294901760
        %2629 = vmatpush.msra.mxu0 %v2628
        %v2630 = vand.u32 %v1159, 4294901760
        %2631 = vmatpush.msra.mxu0 %v2630
        %v2632 = vand.u32 %v1155, 4294901760
        %2633 = vmatpush.msra.mxu0 %v2632
        %v2634 = vand.u32 %v1151, 4294901760
        %2635 = vmatpush.msra.mxu0 %v2634
        %v2636 = vand.u32 %v1147, 4294901760
        %2637 = vmatpush.msra.mxu0 %v2636
        %v2638 = vand.u32 %v1143, 4294901760
        %2639 = vmatpush.msra.mxu0 %v2638
        %v2640 = vand.u32 %v2143, 4294901760
        %v2641 = vsub.f32 %v2143, %v2640
        %v2642 = vand.u32 %v2641, 4294901760
        %2643 = vmatmul.f32.gmra.mxu0 %v2642
        %v2644 = vpop.f32.mrf.mxu0
        %v2645 = vadd.f32 %v2604, %v2644
        %v2646 = vand.u32 %v2146, 4294901760
        %v2647 = vsub.f32 %v2146, %v2646
        %v2648 = vand.u32 %v2647, 4294901760
        %2649 = vmatmul.f32.gmra.mxu0 %v2648
        %v2650 = vpop.f32.mrf.mxu0
        %v2651 = vadd.f32 %v2609, %v2650
        %v2652 = vand.u32 %v2149, 4294901760
        %v2653 = vsub.f32 %v2149, %v2652
        %v2654 = vand.u32 %v2653, 4294901760
        %2655 = vmatmul.f32.gmra.mxu0 %v2654
        %v2656 = vpop.f32.mrf.mxu0
        %v2657 = vadd.f32 %v2614, %v2656
        %2658 = vdwg.mxu0
        %2659 = vmatpush.msra.mxu0 0.0
        %2660 = vmatpush.msra.mxu0 0.0
        %2661 = vmatpush.msra.mxu0 0.0
        %2662 = vmatpush.msra.mxu0 0.0
        %2663 = vmatpush.msra.mxu0 0.0
        %2664 = vmatpush.msra.mxu0 0.0
        %2665 = vmatpush.msra.mxu0 0.0
        %2666 = vmatpush.msra.mxu0 0.0
        %v2667 = vand.u32 %v1171, 4294901760
        %v2668 = vsub.f32 %v1171, %v2667
        %v2669 = vand.u32 %v2668, 4294901760
        %2670 = vmatpush.msra.mxu0 %v2669
        %v2671 = vand.u32 %v1167, 4294901760
        %v2672 = vsub.f32 %v1167, %v2671
        %v2673 = vand.u32 %v2672, 4294901760
        %2674 = vmatpush.msra.mxu0 %v2673
        %v2675 = vand.u32 %v1163, 4294901760
        %v2676 = vsub.f32 %v1163, %v2675
        %v2677 = vand.u32 %v2676, 4294901760
        %2678 = vmatpush.msra.mxu0 %v2677
        %v2679 = vand.u32 %v1159, 4294901760
        %v2680 = vsub.f32 %v1159, %v2679
        %v2681 = vand.u32 %v2680, 4294901760
        %2682 = vmatpush.msra.mxu0 %v2681
        %v2683 = vand.u32 %v1155, 4294901760
        %v2684 = vsub.f32 %v1155, %v2683
        %v2685 = vand.u32 %v2684, 4294901760
        %2686 = vmatpush.msra.mxu0 %v2685
        %v2687 = vand.u32 %v1151, 4294901760
        %v2688 = vsub.f32 %v1151, %v2687
        %v2689 = vand.u32 %v2688, 4294901760
        %2690 = vmatpush.msra.mxu0 %v2689
        %v2691 = vand.u32 %v1147, 4294901760
        %v2692 = vsub.f32 %v1147, %v2691
        %v2693 = vand.u32 %v2692, 4294901760
        %2694 = vmatpush.msra.mxu0 %v2693
        %v2695 = vand.u32 %v1143, 4294901760
        %v2696 = vsub.f32 %v1143, %v2695
        %v2697 = vand.u32 %v2696, 4294901760
        %2698 = vmatpush.msra.mxu0 %v2697
        %v2699 = vand.u32 %v2143, 4294901760
        %2700 = vmatmul.f32.gmra.mxu0 %v2699
        %v2701 = vpop.f32.mrf.mxu0
        %v2702 = vadd.f32 %v2645, %v2701
        %v2703 = vand.u32 %v2146, 4294901760
        %2704 = vmatmul.f32.gmra.mxu0 %v2703
        %v2705 = vpop.f32.mrf.mxu0
        %v2706 = vadd.f32 %v2651, %v2705
        %v2707 = vand.u32 %v2149, 4294901760
        %2708 = vmatmul.f32.gmra.mxu0 %v2707
        %v2709 = vpop.f32.mrf.mxu0
        %v2710 = vadd.f32 %v2657, %v2709
        %2711 = vdwg.mxu0
        %2712 = vmatpush.msra.mxu0 0.0
        %2713 = vmatpush.msra.mxu0 0.0
        %2714 = vmatpush.msra.mxu0 0.0
        %2715 = vmatpush.msra.mxu0 0.0
        %2716 = vmatpush.msra.mxu0 0.0
        %2717 = vmatpush.msra.mxu0 0.0
        %2718 = vmatpush.msra.mxu0 0.0
        %2719 = vmatpush.msra.mxu0 0.0
        %v2720 = vand.u32 %v1171, 4294901760
        %2721 = vmatpush.msra.mxu0 %v2720
        %v2722 = vand.u32 %v1167, 4294901760
        %2723 = vmatpush.msra.mxu0 %v2722
        %v2724 = vand.u32 %v1163, 4294901760
        %2725 = vmatpush.msra.mxu0 %v2724
        %v2726 = vand.u32 %v1159, 4294901760
        %2727 = vmatpush.msra.mxu0 %v2726
        %v2728 = vand.u32 %v1155, 4294901760
        %2729 = vmatpush.msra.mxu0 %v2728
        %v2730 = vand.u32 %v1151, 4294901760
        %2731 = vmatpush.msra.mxu0 %v2730
        %v2732 = vand.u32 %v1147, 4294901760
        %2733 = vmatpush.msra.mxu0 %v2732
        %v2734 = vand.u32 %v1143, 4294901760
        %2735 = vmatpush.msra.mxu0 %v2734
        %v2736 = vand.u32 %v2143, 4294901760
        %2737 = vmatmul.f32.gmra.mxu0 %v2736
        %v2738 = vpop.f32.mrf.mxu0
        %v2739 = vadd.f32 %v2702, %v2738
        %v2740 = vand.u32 %v2146, 4294901760
        %2741 = vmatmul.f32.gmra.mxu0 %v2740
        %v2742 = vpop.f32.mrf.mxu0
        %v2743 = vadd.f32 %v2706, %v2742
        %v2744 = vand.u32 %v2149, 4294901760
        %2745 = vmatmul.f32.gmra.mxu0 %v2744
        %v2746 = vpop.f32.mrf.mxu0
        %v2747 = vadd.f32 %v2710, %v2746
        %2748 = vdwg.mxu0
        %2749 = vmatpush.msra.mxu0 0.0
        %2750 = vmatpush.msra.mxu0 0.0
        %2751 = vmatpush.msra.mxu0 0.0
        %2752 = vmatpush.msra.mxu0 0.0
        %2753 = vmatpush.msra.mxu0 0.0
        %2754 = vmatpush.msra.mxu0 0.0
        %2755 = vmatpush.msra.mxu0 0.0
        %2756 = vmatpush.msra.mxu0 0.0
        %v2757 = vand.u32 %v2075, 4294901760
        %2758 = vmatpush.msra.mxu0 %v2757
        %v2759 = vand.u32 %v2071, 4294901760
        %2760 = vmatpush.msra.mxu0 %v2759
        %v2761 = vand.u32 %v2067, 4294901760
        %2762 = vmatpush.msra.mxu0 %v2761
        %v2763 = vand.u32 %v2063, 4294901760
        %2764 = vmatpush.msra.mxu0 %v2763
        %v2765 = vand.u32 %v2059, 4294901760
        %2766 = vmatpush.msra.mxu0 %v2765
        %v2767 = vand.u32 %v2055, 4294901760
        %2768 = vmatpush.msra.mxu0 %v2767
        %v2769 = vand.u32 %v2051, 4294901760
        %2770 = vmatpush.msra.mxu0 %v2769
        %v2771 = vand.u32 %v2047, 4294901760
        %2772 = vmatpush.msra.mxu0 %v2771
        %v2773 = vand.u32 %v2143, 4294901760
        %v2774 = vsub.f32 %v2143, %v2773
        %v2775 = vand.u32 %v2774, 4294901760
        %v2776 = vsub.f32 %v2774, %v2775
        %v2777 = vand.u32 %v2776, 4294901760
        %2778 = vmatmul.f32.gmra.mxu0 %v2777
        %v2779 = vpop.f32.mrf.mxu0
        %v2780 = vadd.f32 0.0, %v2779
        %v2781 = vand.u32 %v2146, 4294901760
        %v2782 = vsub.f32 %v2146, %v2781
        %v2783 = vand.u32 %v2782, 4294901760
        %v2784 = vsub.f32 %v2782, %v2783
        %v2785 = vand.u32 %v2784, 4294901760
        %2786 = vmatmul.f32.gmra.mxu0 %v2785
        %v2787 = vpop.f32.mrf.mxu0
        %v2788 = vadd.f32 0.0, %v2787
        %v2789 = vand.u32 %v2149, 4294901760
        %v2790 = vsub.f32 %v2149, %v2789
        %v2791 = vand.u32 %v2790, 4294901760
        %v2792 = vsub.f32 %v2790, %v2791
        %v2793 = vand.u32 %v2792, 4294901760
        %2794 = vmatmul.f32.gmra.mxu0 %v2793
        %v2795 = vpop.f32.mrf.mxu0
        %v2796 = vadd.f32 0.0, %v2795
        %2797 = vdwg.mxu0
        %2798 = vmatpush.msra.mxu0 0.0
        %2799 = vmatpush.msra.mxu0 0.0
        %2800 = vmatpush.msra.mxu0 0.0
        %2801 = vmatpush.msra.mxu0 0.0
        %2802 = vmatpush.msra.mxu0 0.0
        %2803 = vmatpush.msra.mxu0 0.0
        %2804 = vmatpush.msra.mxu0 0.0
        %2805 = vmatpush.msra.mxu0 0.0
        %v2806 = vand.u32 %v2075, 4294901760
        %v2807 = vsub.f32 %v2075, %v2806
        %v2808 = vand.u32 %v2807, 4294901760
        %v2809 = vsub.f32 %v2807, %v2808
        %v2810 = vand.u32 %v2809, 4294901760
        %2811 = vmatpush.msra.mxu0 %v2810
        %v2812 = vand.u32 %v2071, 4294901760
        %v2813 = vsub.f32 %v2071, %v2812
        %v2814 = vand.u32 %v2813, 4294901760
        %v2815 = vsub.f32 %v2813, %v2814
        %v2816 = vand.u32 %v2815, 4294901760
        %2817 = vmatpush.msra.mxu0 %v2816
        %v2818 = vand.u32 %v2067, 4294901760
        %v2819 = vsub.f32 %v2067, %v2818
        %v2820 = vand.u32 %v2819, 4294901760
        %v2821 = vsub.f32 %v2819, %v2820
        %v2822 = vand.u32 %v2821, 4294901760
        %2823 = vmatpush.msra.mxu0 %v2822
        %v2824 = vand.u32 %v2063, 4294901760
        %v2825 = vsub.f32 %v2063, %v2824
        %v2826 = vand.u32 %v2825, 4294901760
        %v2827 = vsub.f32 %v2825, %v2826
        %v2828 = vand.u32 %v2827, 4294901760
        %2829 = vmatpush.msra.mxu0 %v2828
        %v2830 = vand.u32 %v2059, 4294901760
        %v2831 = vsub.f32 %v2059, %v2830
        %v2832 = vand.u32 %v2831, 4294901760
        %v2833 = vsub.f32 %v2831, %v2832
        %v2834 = vand.u32 %v2833, 4294901760
        %2835 = vmatpush.msra.mxu0 %v2834
        %v2836 = vand.u32 %v2055, 4294901760
        %v2837 = vsub.f32 %v2055, %v2836
        %v2838 = vand.u32 %v2837, 4294901760
        %v2839 = vsub.f32 %v2837, %v2838
        %v2840 = vand.u32 %v2839, 4294901760
        %2841 = vmatpush.msra.mxu0 %v2840
        %v2842 = vand.u32 %v2051, 4294901760
        %v2843 = vsub.f32 %v2051, %v2842
        %v2844 = vand.u32 %v2843, 4294901760
        %v2845 = vsub.f32 %v2843, %v2844
        %v2846 = vand.u32 %v2845, 4294901760
        %2847 = vmatpush.msra.mxu0 %v2846
        %v2848 = vand.u32 %v2047, 4294901760
        %v2849 = vsub.f32 %v2047, %v2848
        %v2850 = vand.u32 %v2849, 4294901760
        %v2851 = vsub.f32 %v2849, %v2850
        %v2852 = vand.u32 %v2851, 4294901760
        %2853 = vmatpush.msra.mxu0 %v2852
        %v2854 = vand.u32 %v2143, 4294901760
        %2855 = vmatmul.f32.gmra.mxu0 %v2854
        %v2856 = vpop.f32.mrf.mxu0
        %v2857 = vadd.f32 %v2780, %v2856
        %v2858 = vand.u32 %v2146, 4294901760
        %2859 = vmatmul.f32.gmra.mxu0 %v2858
        %v2860 = vpop.f32.mrf.mxu0
        %v2861 = vadd.f32 %v2788, %v2860
        %v2862 = vand.u32 %v2149, 4294901760
        %2863 = vmatmul.f32.gmra.mxu0 %v2862
        %v2864 = vpop.f32.mrf.mxu0
        %v2865 = vadd.f32 %v2796, %v2864
        %2866 = vdwg.mxu0
        %2867 = vmatpush.msra.mxu0 0.0
        %2868 = vmatpush.msra.mxu0 0.0
        %2869 = vmatpush.msra.mxu0 0.0
        %2870 = vmatpush.msra.mxu0 0.0
        %2871 = vmatpush.msra.mxu0 0.0
        %2872 = vmatpush.msra.mxu0 0.0
        %2873 = vmatpush.msra.mxu0 0.0
        %2874 = vmatpush.msra.mxu0 0.0
        %v2875 = vand.u32 %v2075, 4294901760
        %v2876 = vsub.f32 %v2075, %v2875
        %2877 = vmatpush.msra.mxu0 %v2876
        %v2878 = vand.u32 %v2071, 4294901760
        %v2879 = vsub.f32 %v2071, %v2878
        %2880 = vmatpush.msra.mxu0 %v2879
        %v2881 = vand.u32 %v2067, 4294901760
        %v2882 = vsub.f32 %v2067, %v2881
        %2883 = vmatpush.msra.mxu0 %v2882
        %v2884 = vand.u32 %v2063, 4294901760
        %v2885 = vsub.f32 %v2063, %v2884
        %2886 = vmatpush.msra.mxu0 %v2885
        %v2887 = vand.u32 %v2059, 4294901760
        %v2888 = vsub.f32 %v2059, %v2887
        %2889 = vmatpush.msra.mxu0 %v2888
        %v2890 = vand.u32 %v2055, 4294901760
        %v2891 = vsub.f32 %v2055, %v2890
        %2892 = vmatpush.msra.mxu0 %v2891
        %v2893 = vand.u32 %v2051, 4294901760
        %v2894 = vsub.f32 %v2051, %v2893
        %2895 = vmatpush.msra.mxu0 %v2894
        %v2896 = vand.u32 %v2047, 4294901760
        %v2897 = vsub.f32 %v2047, %v2896
        %2898 = vmatpush.msra.mxu0 %v2897
        %v2899 = vand.u32 %v2143, 4294901760
        %v2900 = vsub.f32 %v2143, %v2899
        %2901 = vmatmul.f32.gmra.mxu0 %v2900
        %v2902 = vpop.f32.mrf.mxu0
        %v2903 = vadd.f32 %v2857, %v2902
        %v2904 = vand.u32 %v2146, 4294901760
        %v2905 = vsub.f32 %v2146, %v2904
        %2906 = vmatmul.f32.gmra.mxu0 %v2905
        %v2907 = vpop.f32.mrf.mxu0
        %v2908 = vadd.f32 %v2861, %v2907
        %v2909 = vand.u32 %v2149, 4294901760
        %v2910 = vsub.f32 %v2149, %v2909
        %2911 = vmatmul.f32.gmra.mxu0 %v2910
        %v2912 = vpop.f32.mrf.mxu0
        %v2913 = vadd.f32 %v2865, %v2912
        %2914 = vdwg.mxu0
        %2915 = vmatpush.msra.mxu0 0.0
        %2916 = vmatpush.msra.mxu0 0.0
        %2917 = vmatpush.msra.mxu0 0.0
        %2918 = vmatpush.msra.mxu0 0.0
        %2919 = vmatpush.msra.mxu0 0.0
        %2920 = vmatpush.msra.mxu0 0.0
        %2921 = vmatpush.msra.mxu0 0.0
        %2922 = vmatpush.msra.mxu0 0.0
        %v2923 = vand.u32 %v2075, 4294901760
        %2924 = vmatpush.msra.mxu0 %v2923
        %v2925 = vand.u32 %v2071, 4294901760
        %2926 = vmatpush.msra.mxu0 %v2925
        %v2927 = vand.u32 %v2067, 4294901760
        %2928 = vmatpush.msra.mxu0 %v2927
        %v2929 = vand.u32 %v2063, 4294901760
        %2930 = vmatpush.msra.mxu0 %v2929
        %v2931 = vand.u32 %v2059, 4294901760
        %2932 = vmatpush.msra.mxu0 %v2931
        %v2933 = vand.u32 %v2055, 4294901760
        %2934 = vmatpush.msra.mxu0 %v2933
        %v2935 = vand.u32 %v2051, 4294901760
        %2936 = vmatpush.msra.mxu0 %v2935
        %v2937 = vand.u32 %v2047, 4294901760
        %2938 = vmatpush.msra.mxu0 %v2937
        %v2939 = vand.u32 %v2143, 4294901760
        %v2940 = vsub.f32 %v2143, %v2939
        %v2941 = vand.u32 %v2940, 4294901760
        %2942 = vmatmul.f32.gmra.mxu0 %v2941
        %v2943 = vpop.f32.mrf.mxu0
        %v2944 = vadd.f32 %v2903, %v2943
        %v2945 = vand.u32 %v2146, 4294901760
        %v2946 = vsub.f32 %v2146, %v2945
        %v2947 = vand.u32 %v2946, 4294901760
        %2948 = vmatmul.f32.gmra.mxu0 %v2947
        %v2949 = vpop.f32.mrf.mxu0
        %v2950 = vadd.f32 %v2908, %v2949
        %v2951 = vand.u32 %v2149, 4294901760
        %v2952 = vsub.f32 %v2149, %v2951
        %v2953 = vand.u32 %v2952, 4294901760
        %2954 = vmatmul.f32.gmra.mxu0 %v2953
        %v2955 = vpop.f32.mrf.mxu0
        %v2956 = vadd.f32 %v2913, %v2955
        %2957 = vdwg.mxu0
        %2958 = vmatpush.msra.mxu0 0.0
        %2959 = vmatpush.msra.mxu0 0.0
        %2960 = vmatpush.msra.mxu0 0.0
        %2961 = vmatpush.msra.mxu0 0.0
        %2962 = vmatpush.msra.mxu0 0.0
        %2963 = vmatpush.msra.mxu0 0.0
        %2964 = vmatpush.msra.mxu0 0.0
        %2965 = vmatpush.msra.mxu0 0.0
        %v2966 = vand.u32 %v2075, 4294901760
        %v2967 = vsub.f32 %v2075, %v2966
        %v2968 = vand.u32 %v2967, 4294901760
        %2969 = vmatpush.msra.mxu0 %v2968
        %v2970 = vand.u32 %v2071, 4294901760
        %v2971 = vsub.f32 %v2071, %v2970
        %v2972 = vand.u32 %v2971, 4294901760
        %2973 = vmatpush.msra.mxu0 %v2972
        %v2974 = vand.u32 %v2067, 4294901760
        %v2975 = vsub.f32 %v2067, %v2974
        %v2976 = vand.u32 %v2975, 4294901760
        %2977 = vmatpush.msra.mxu0 %v2976
        %v2978 = vand.u32 %v2063, 4294901760
        %v2979 = vsub.f32 %v2063, %v2978
        %v2980 = vand.u32 %v2979, 4294901760
        %2981 = vmatpush.msra.mxu0 %v2980
        %v2982 = vand.u32 %v2059, 4294901760
        %v2983 = vsub.f32 %v2059, %v2982
        %v2984 = vand.u32 %v2983, 4294901760
        %2985 = vmatpush.msra.mxu0 %v2984
        %v2986 = vand.u32 %v2055, 4294901760
        %v2987 = vsub.f32 %v2055, %v2986
        %v2988 = vand.u32 %v2987, 4294901760
        %2989 = vmatpush.msra.mxu0 %v2988
        %v2990 = vand.u32 %v2051, 4294901760
        %v2991 = vsub.f32 %v2051, %v2990
        %v2992 = vand.u32 %v2991, 4294901760
        %2993 = vmatpush.msra.mxu0 %v2992
        %v2994 = vand.u32 %v2047, 4294901760
        %v2995 = vsub.f32 %v2047, %v2994
        %v2996 = vand.u32 %v2995, 4294901760
        %2997 = vmatpush.msra.mxu0 %v2996
        %v2998 = vand.u32 %v2143, 4294901760
        %2999 = vmatmul.f32.gmra.mxu0 %v2998
        %v3000 = vpop.f32.mrf.mxu0
        %v3001 = vadd.f32 %v2944, %v3000
        %v3002 = vand.u32 %v2146, 4294901760
        %3003 = vmatmul.f32.gmra.mxu0 %v3002
        %v3004 = vpop.f32.mrf.mxu0
        %v3005 = vadd.f32 %v2950, %v3004
        %v3006 = vand.u32 %v2149, 4294901760
        %3007 = vmatmul.f32.gmra.mxu0 %v3006
        %v3008 = vpop.f32.mrf.mxu0
        %v3009 = vadd.f32 %v2956, %v3008
        %3010 = vdwg.mxu0
        %3011 = vmatpush.msra.mxu0 0.0
        %3012 = vmatpush.msra.mxu0 0.0
        %3013 = vmatpush.msra.mxu0 0.0
        %3014 = vmatpush.msra.mxu0 0.0
        %3015 = vmatpush.msra.mxu0 0.0
        %3016 = vmatpush.msra.mxu0 0.0
        %3017 = vmatpush.msra.mxu0 0.0
        %3018 = vmatpush.msra.mxu0 0.0
        %v3019 = vand.u32 %v2075, 4294901760
        %3020 = vmatpush.msra.mxu0 %v3019
        %v3021 = vand.u32 %v2071, 4294901760
        %3022 = vmatpush.msra.mxu0 %v3021
        %v3023 = vand.u32 %v2067, 4294901760
        %3024 = vmatpush.msra.mxu0 %v3023
        %v3025 = vand.u32 %v2063, 4294901760
        %3026 = vmatpush.msra.mxu0 %v3025
        %v3027 = vand.u32 %v2059, 4294901760
        %3028 = vmatpush.msra.mxu0 %v3027
        %v3029 = vand.u32 %v2055, 4294901760
        %3030 = vmatpush.msra.mxu0 %v3029
        %v3031 = vand.u32 %v2051, 4294901760
        %3032 = vmatpush.msra.mxu0 %v3031
        %v3033 = vand.u32 %v2047, 4294901760
        %3034 = vmatpush.msra.mxu0 %v3033
        %v3035 = vand.u32 %v2143, 4294901760
        %3036 = vmatmul.f32.gmra.mxu0 %v3035
        %v3037 = vpop.f32.mrf.mxu0
        %v3038 = vadd.f32 %v3001, %v3037
        %v3039 = vand.u32 %v2146, 4294901760
        %3040 = vmatmul.f32.gmra.mxu0 %v3039
        %v3041 = vpop.f32.mrf.mxu0
        %v3042 = vadd.f32 %v3005, %v3041
        %v3043 = vand.u32 %v2149, 4294901760
        %3044 = vmatmul.f32.gmra.mxu0 %v3043
        %v3045 = vpop.f32.mrf.mxu0
        %v3046 = vadd.f32 %v3009, %v3045
        %3047 = vdwg.mxu0
        %3048 = vmatpush.msra.mxu0 0.0
        %3049 = vmatpush.msra.mxu0 0.0
        %3050 = vmatpush.msra.mxu0 0.0
        %3051 = vmatpush.msra.mxu0 0.0
        %3052 = vmatpush.msra.mxu0 0.0
        %3053 = vmatpush.msra.mxu0 0.0
        %3054 = vmatpush.msra.mxu0 0.0
        %3055 = vmatpush.msra.mxu0 0.0
        %v3056 = vand.u32 %v2107, 4294901760
        %3057 = vmatpush.msra.mxu0 %v3056
        %v3058 = vand.u32 %v2103, 4294901760
        %3059 = vmatpush.msra.mxu0 %v3058
        %v3060 = vand.u32 %v2099, 4294901760
        %3061 = vmatpush.msra.mxu0 %v3060
        %v3062 = vand.u32 %v2095, 4294901760
        %3063 = vmatpush.msra.mxu0 %v3062
        %v3064 = vand.u32 %v2091, 4294901760
        %3065 = vmatpush.msra.mxu0 %v3064
        %v3066 = vand.u32 %v2087, 4294901760
        %3067 = vmatpush.msra.mxu0 %v3066
        %v3068 = vand.u32 %v2083, 4294901760
        %3069 = vmatpush.msra.mxu0 %v3068
        %v3070 = vand.u32 %v2079, 4294901760
        %3071 = vmatpush.msra.mxu0 %v3070
        %v3072 = vand.u32 %v2143, 4294901760
        %v3073 = vsub.f32 %v2143, %v3072
        %v3074 = vand.u32 %v3073, 4294901760
        %v3075 = vsub.f32 %v3073, %v3074
        %v3076 = vand.u32 %v3075, 4294901760
        %3077 = vmatmul.f32.gmra.mxu0 %v3076
        %v3078 = vpop.f32.mrf.mxu0
        %v3079 = vadd.f32 0.0, %v3078
        %v3080 = vand.u32 %v2146, 4294901760
        %v3081 = vsub.f32 %v2146, %v3080
        %v3082 = vand.u32 %v3081, 4294901760
        %v3083 = vsub.f32 %v3081, %v3082
        %v3084 = vand.u32 %v3083, 4294901760
        %3085 = vmatmul.f32.gmra.mxu0 %v3084
        %v3086 = vpop.f32.mrf.mxu0
        %v3087 = vadd.f32 0.0, %v3086
        %v3088 = vand.u32 %v2149, 4294901760
        %v3089 = vsub.f32 %v2149, %v3088
        %v3090 = vand.u32 %v3089, 4294901760
        %v3091 = vsub.f32 %v3089, %v3090
        %v3092 = vand.u32 %v3091, 4294901760
        %3093 = vmatmul.f32.gmra.mxu0 %v3092
        %v3094 = vpop.f32.mrf.mxu0
        %v3095 = vadd.f32 0.0, %v3094
        %3096 = vdwg.mxu0
        %3097 = vmatpush.msra.mxu0 0.0
        %3098 = vmatpush.msra.mxu0 0.0
        %3099 = vmatpush.msra.mxu0 0.0
        %3100 = vmatpush.msra.mxu0 0.0
        %3101 = vmatpush.msra.mxu0 0.0
        %3102 = vmatpush.msra.mxu0 0.0
        %3103 = vmatpush.msra.mxu0 0.0
        %3104 = vmatpush.msra.mxu0 0.0
        %v3105 = vand.u32 %v2107, 4294901760
        %v3106 = vsub.f32 %v2107, %v3105
        %v3107 = vand.u32 %v3106, 4294901760
        %v3108 = vsub.f32 %v3106, %v3107
        %v3109 = vand.u32 %v3108, 4294901760
        %3110 = vmatpush.msra.mxu0 %v3109
        %v3111 = vand.u32 %v2103, 4294901760
        %v3112 = vsub.f32 %v2103, %v3111
        %v3113 = vand.u32 %v3112, 4294901760
        %v3114 = vsub.f32 %v3112, %v3113
        %v3115 = vand.u32 %v3114, 4294901760
        %3116 = vmatpush.msra.mxu0 %v3115
        %v3117 = vand.u32 %v2099, 4294901760
        %v3118 = vsub.f32 %v2099, %v3117
        %v3119 = vand.u32 %v3118, 4294901760
        %v3120 = vsub.f32 %v3118, %v3119
        %v3121 = vand.u32 %v3120, 4294901760
        %3122 = vmatpush.msra.mxu0 %v3121
        %v3123 = vand.u32 %v2095, 4294901760
        %v3124 = vsub.f32 %v2095, %v3123
        %v3125 = vand.u32 %v3124, 4294901760
        %v3126 = vsub.f32 %v3124, %v3125
        %v3127 = vand.u32 %v3126, 4294901760
        %3128 = vmatpush.msra.mxu0 %v3127
        %v3129 = vand.u32 %v2091, 4294901760
        %v3130 = vsub.f32 %v2091, %v3129
        %v3131 = vand.u32 %v3130, 4294901760
        %v3132 = vsub.f32 %v3130, %v3131
        %v3133 = vand.u32 %v3132, 4294901760
        %3134 = vmatpush.msra.mxu0 %v3133
        %v3135 = vand.u32 %v2087, 4294901760
        %v3136 = vsub.f32 %v2087, %v3135
        %v3137 = vand.u32 %v3136, 4294901760
        %v3138 = vsub.f32 %v3136, %v3137
        %v3139 = vand.u32 %v3138, 4294901760
        %3140 = vmatpush.msra.mxu0 %v3139
        %v3141 = vand.u32 %v2083, 4294901760
        %v3142 = vsub.f32 %v2083, %v3141
        %v3143 = vand.u32 %v3142, 4294901760
        %v3144 = vsub.f32 %v3142, %v3143
        %v3145 = vand.u32 %v3144, 4294901760
        %3146 = vmatpush.msra.mxu0 %v3145
        %v3147 = vand.u32 %v2079, 4294901760
        %v3148 = vsub.f32 %v2079, %v3147
        %v3149 = vand.u32 %v3148, 4294901760
        %v3150 = vsub.f32 %v3148, %v3149
        %v3151 = vand.u32 %v3150, 4294901760
        %3152 = vmatpush.msra.mxu0 %v3151
        %v3153 = vand.u32 %v2143, 4294901760
        %3154 = vmatmul.f32.gmra.mxu0 %v3153
        %v3155 = vpop.f32.mrf.mxu0
        %v3156 = vadd.f32 %v3079, %v3155
        %v3157 = vand.u32 %v2146, 4294901760
        %3158 = vmatmul.f32.gmra.mxu0 %v3157
        %v3159 = vpop.f32.mrf.mxu0
        %v3160 = vadd.f32 %v3087, %v3159
        %v3161 = vand.u32 %v2149, 4294901760
        %3162 = vmatmul.f32.gmra.mxu0 %v3161
        %v3163 = vpop.f32.mrf.mxu0
        %v3164 = vadd.f32 %v3095, %v3163
        %3165 = vdwg.mxu0
        %3166 = vmatpush.msra.mxu0 0.0
        %3167 = vmatpush.msra.mxu0 0.0
        %3168 = vmatpush.msra.mxu0 0.0
        %3169 = vmatpush.msra.mxu0 0.0
        %3170 = vmatpush.msra.mxu0 0.0
        %3171 = vmatpush.msra.mxu0 0.0
        %3172 = vmatpush.msra.mxu0 0.0
        %3173 = vmatpush.msra.mxu0 0.0
        %v3174 = vand.u32 %v2107, 4294901760
        %v3175 = vsub.f32 %v2107, %v3174
        %3176 = vmatpush.msra.mxu0 %v3175
        %v3177 = vand.u32 %v2103, 4294901760
        %v3178 = vsub.f32 %v2103, %v3177
        %3179 = vmatpush.msra.mxu0 %v3178
        %v3180 = vand.u32 %v2099, 4294901760
        %v3181 = vsub.f32 %v2099, %v3180
        %3182 = vmatpush.msra.mxu0 %v3181
        %v3183 = vand.u32 %v2095, 4294901760
        %v3184 = vsub.f32 %v2095, %v3183
        %3185 = vmatpush.msra.mxu0 %v3184
        %v3186 = vand.u32 %v2091, 4294901760
        %v3187 = vsub.f32 %v2091, %v3186
        %3188 = vmatpush.msra.mxu0 %v3187
        %v3189 = vand.u32 %v2087, 4294901760
        %v3190 = vsub.f32 %v2087, %v3189
        %3191 = vmatpush.msra.mxu0 %v3190
        %v3192 = vand.u32 %v2083, 4294901760
        %v3193 = vsub.f32 %v2083, %v3192
        %3194 = vmatpush.msra.mxu0 %v3193
        %v3195 = vand.u32 %v2079, 4294901760
        %v3196 = vsub.f32 %v2079, %v3195
        %3197 = vmatpush.msra.mxu0 %v3196
        %v3198 = vand.u32 %v2143, 4294901760
        %v3199 = vsub.f32 %v2143, %v3198
        %3200 = vmatmul.f32.gmra.mxu0 %v3199
        %v3201 = vpop.f32.mrf.mxu0
        %v3202 = vadd.f32 %v3156, %v3201
        %v3203 = vand.u32 %v2146, 4294901760
        %v3204 = vsub.f32 %v2146, %v3203
        %3205 = vmatmul.f32.gmra.mxu0 %v3204
        %v3206 = vpop.f32.mrf.mxu0
        %v3207 = vadd.f32 %v3160, %v3206
        %v3208 = vand.u32 %v2149, 4294901760
        %v3209 = vsub.f32 %v2149, %v3208
        %3210 = vmatmul.f32.gmra.mxu0 %v3209
        %v3211 = vpop.f32.mrf.mxu0
        %v3212 = vadd.f32 %v3164, %v3211
        %3213 = vdwg.mxu0
        %3214 = vmatpush.msra.mxu0 0.0
        %3215 = vmatpush.msra.mxu0 0.0
        %3216 = vmatpush.msra.mxu0 0.0
        %3217 = vmatpush.msra.mxu0 0.0
        %3218 = vmatpush.msra.mxu0 0.0
        %3219 = vmatpush.msra.mxu0 0.0
        %3220 = vmatpush.msra.mxu0 0.0
        %3221 = vmatpush.msra.mxu0 0.0
        %v3222 = vand.u32 %v2107, 4294901760
        %3223 = vmatpush.msra.mxu0 %v3222
        %v3224 = vand.u32 %v2103, 4294901760
        %3225 = vmatpush.msra.mxu0 %v3224
        %v3226 = vand.u32 %v2099, 4294901760
        %3227 = vmatpush.msra.mxu0 %v3226
        %v3228 = vand.u32 %v2095, 4294901760
        %3229 = vmatpush.msra.mxu0 %v3228
        %v3230 = vand.u32 %v2091, 4294901760
        %3231 = vmatpush.msra.mxu0 %v3230
        %v3232 = vand.u32 %v2087, 4294901760
        %3233 = vmatpush.msra.mxu0 %v3232
        %v3234 = vand.u32 %v2083, 4294901760
        %3235 = vmatpush.msra.mxu0 %v3234
        %v3236 = vand.u32 %v2079, 4294901760
        %3237 = vmatpush.msra.mxu0 %v3236
        %v3238 = vand.u32 %v2143, 4294901760
        %v3239 = vsub.f32 %v2143, %v3238
        %v3240 = vand.u32 %v3239, 4294901760
        %3241 = vmatmul.f32.gmra.mxu0 %v3240
        %v3242 = vpop.f32.mrf.mxu0
        %v3243 = vadd.f32 %v3202, %v3242
        %v3244 = vand.u32 %v2146, 4294901760
        %v3245 = vsub.f32 %v2146, %v3244
        %v3246 = vand.u32 %v3245, 4294901760
        %3247 = vmatmul.f32.gmra.mxu0 %v3246
        %v3248 = vpop.f32.mrf.mxu0
        %v3249 = vadd.f32 %v3207, %v3248
        %v3250 = vand.u32 %v2149, 4294901760
        %v3251 = vsub.f32 %v2149, %v3250
        %v3252 = vand.u32 %v3251, 4294901760
        %3253 = vmatmul.f32.gmra.mxu0 %v3252
        %v3254 = vpop.f32.mrf.mxu0
        %v3255 = vadd.f32 %v3212, %v3254
        %3256 = vdwg.mxu0
        %3257 = vmatpush.msra.mxu0 0.0
        %3258 = vmatpush.msra.mxu0 0.0
        %3259 = vmatpush.msra.mxu0 0.0
        %3260 = vmatpush.msra.mxu0 0.0
        %3261 = vmatpush.msra.mxu0 0.0
        %3262 = vmatpush.msra.mxu0 0.0
        %3263 = vmatpush.msra.mxu0 0.0
        %3264 = vmatpush.msra.mxu0 0.0
        %v3265 = vand.u32 %v2107, 4294901760
        %v3266 = vsub.f32 %v2107, %v3265
        %v3267 = vand.u32 %v3266, 4294901760
        %3268 = vmatpush.msra.mxu0 %v3267
        %v3269 = vand.u32 %v2103, 4294901760
        %v3270 = vsub.f32 %v2103, %v3269
        %v3271 = vand.u32 %v3270, 4294901760
        %3272 = vmatpush.msra.mxu0 %v3271
        %v3273 = vand.u32 %v2099, 4294901760
        %v3274 = vsub.f32 %v2099, %v3273
        %v3275 = vand.u32 %v3274, 4294901760
        %3276 = vmatpush.msra.mxu0 %v3275
        %v3277 = vand.u32 %v2095, 4294901760
        %v3278 = vsub.f32 %v2095, %v3277
        %v3279 = vand.u32 %v3278, 4294901760
        %3280 = vmatpush.msra.mxu0 %v3279
        %v3281 = vand.u32 %v2091, 4294901760
        %v3282 = vsub.f32 %v2091, %v3281
        %v3283 = vand.u32 %v3282, 4294901760
        %3284 = vmatpush.msra.mxu0 %v3283
        %v3285 = vand.u32 %v2087, 4294901760
        %v3286 = vsub.f32 %v2087, %v3285
        %v3287 = vand.u32 %v3286, 4294901760
        %3288 = vmatpush.msra.mxu0 %v3287
        %v3289 = vand.u32 %v2083, 4294901760
        %v3290 = vsub.f32 %v2083, %v3289
        %v3291 = vand.u32 %v3290, 4294901760
        %3292 = vmatpush.msra.mxu0 %v3291
        %v3293 = vand.u32 %v2079, 4294901760
        %v3294 = vsub.f32 %v2079, %v3293
        %v3295 = vand.u32 %v3294, 4294901760
        %3296 = vmatpush.msra.mxu0 %v3295
        %v3297 = vand.u32 %v2143, 4294901760
        %3298 = vmatmul.f32.gmra.mxu0 %v3297
        %v3299 = vpop.f32.mrf.mxu0
        %v3300 = vadd.f32 %v3243, %v3299
        %v3301 = vand.u32 %v2146, 4294901760
        %3302 = vmatmul.f32.gmra.mxu0 %v3301
        %v3303 = vpop.f32.mrf.mxu0
        %v3304 = vadd.f32 %v3249, %v3303
        %v3305 = vand.u32 %v2149, 4294901760
        %3306 = vmatmul.f32.gmra.mxu0 %v3305
        %v3307 = vpop.f32.mrf.mxu0
        %v3308 = vadd.f32 %v3255, %v3307
        %3309 = vdwg.mxu0
        %3310 = vmatpush.msra.mxu0 0.0
        %3311 = vmatpush.msra.mxu0 0.0
        %3312 = vmatpush.msra.mxu0 0.0
        %3313 = vmatpush.msra.mxu0 0.0
        %3314 = vmatpush.msra.mxu0 0.0
        %3315 = vmatpush.msra.mxu0 0.0
        %3316 = vmatpush.msra.mxu0 0.0
        %3317 = vmatpush.msra.mxu0 0.0
        %v3318 = vand.u32 %v2107, 4294901760
        %3319 = vmatpush.msra.mxu0 %v3318
        %v3320 = vand.u32 %v2103, 4294901760
        %3321 = vmatpush.msra.mxu0 %v3320
        %v3322 = vand.u32 %v2099, 4294901760
        %3323 = vmatpush.msra.mxu0 %v3322
        %v3324 = vand.u32 %v2095, 4294901760
        %3325 = vmatpush.msra.mxu0 %v3324
        %v3326 = vand.u32 %v2091, 4294901760
        %3327 = vmatpush.msra.mxu0 %v3326
        %v3328 = vand.u32 %v2087, 4294901760
        %3329 = vmatpush.msra.mxu0 %v3328
        %v3330 = vand.u32 %v2083, 4294901760
        %3331 = vmatpush.msra.mxu0 %v3330
        %v3332 = vand.u32 %v2079, 4294901760
        %3333 = vmatpush.msra.mxu0 %v3332
        %v3334 = vand.u32 %v2143, 4294901760
        %3335 = vmatmul.f32.gmra.mxu0 %v3334
        %v3336 = vpop.f32.mrf.mxu0
        %v3337 = vadd.f32 %v3300, %v3336
        %v3338 = vand.u32 %v2146, 4294901760
        %3339 = vmatmul.f32.gmra.mxu0 %v3338
        %v3340 = vpop.f32.mrf.mxu0
        %v3341 = vadd.f32 %v3304, %v3340
        %v3342 = vand.u32 %v2149, 4294901760
        %3343 = vmatmul.f32.gmra.mxu0 %v3342
        %v3344 = vpop.f32.mrf.mxu0
        %v3345 = vadd.f32 %v3308, %v3344
        %3346 = vdwg.mxu0
        %3347 = vmatpush.msra.mxu0 0.0
        %3348 = vmatpush.msra.mxu0 0.0
        %3349 = vmatpush.msra.mxu0 0.0
        %3350 = vmatpush.msra.mxu0 0.0
        %3351 = vmatpush.msra.mxu0 0.0
        %3352 = vmatpush.msra.mxu0 0.0
        %3353 = vmatpush.msra.mxu0 0.0
        %3354 = vmatpush.msra.mxu0 0.0
        %v3355 = vand.u32 %v2139, 4294901760
        %3356 = vmatpush.msra.mxu0 %v3355
        %v3357 = vand.u32 %v2135, 4294901760
        %3358 = vmatpush.msra.mxu0 %v3357
        %v3359 = vand.u32 %v2131, 4294901760
        %3360 = vmatpush.msra.mxu0 %v3359
        %v3361 = vand.u32 %v2127, 4294901760
        %3362 = vmatpush.msra.mxu0 %v3361
        %v3363 = vand.u32 %v2123, 4294901760
        %3364 = vmatpush.msra.mxu0 %v3363
        %v3365 = vand.u32 %v2119, 4294901760
        %3366 = vmatpush.msra.mxu0 %v3365
        %v3367 = vand.u32 %v2115, 4294901760
        %3368 = vmatpush.msra.mxu0 %v3367
        %v3369 = vand.u32 %v2111, 4294901760
        %3370 = vmatpush.msra.mxu0 %v3369
        %v3371 = vand.u32 %v2143, 4294901760
        %v3372 = vsub.f32 %v2143, %v3371
        %v3373 = vand.u32 %v3372, 4294901760
        %v3374 = vsub.f32 %v3372, %v3373
        %v3375 = vand.u32 %v3374, 4294901760
        %3376 = vmatmul.f32.gmra.mxu0 %v3375
        %v3377 = vpop.f32.mrf.mxu0
        %v3378 = vadd.f32 0.0, %v3377
        %v3379 = vand.u32 %v2146, 4294901760
        %v3380 = vsub.f32 %v2146, %v3379
        %v3381 = vand.u32 %v3380, 4294901760
        %v3382 = vsub.f32 %v3380, %v3381
        %v3383 = vand.u32 %v3382, 4294901760
        %3384 = vmatmul.f32.gmra.mxu0 %v3383
        %v3385 = vpop.f32.mrf.mxu0
        %v3386 = vadd.f32 0.0, %v3385
        %v3387 = vand.u32 %v2149, 4294901760
        %v3388 = vsub.f32 %v2149, %v3387
        %v3389 = vand.u32 %v3388, 4294901760
        %v3390 = vsub.f32 %v3388, %v3389
        %v3391 = vand.u32 %v3390, 4294901760
        %3392 = vmatmul.f32.gmra.mxu0 %v3391
        %v3393 = vpop.f32.mrf.mxu0
        %v3394 = vadd.f32 0.0, %v3393
        %3395 = vdwg.mxu0
        %3396 = vmatpush.msra.mxu0 0.0
        %3397 = vmatpush.msra.mxu0 0.0
        %3398 = vmatpush.msra.mxu0 0.0
        %3399 = vmatpush.msra.mxu0 0.0
        %3400 = vmatpush.msra.mxu0 0.0
        %3401 = vmatpush.msra.mxu0 0.0
        %3402 = vmatpush.msra.mxu0 0.0
        %3403 = vmatpush.msra.mxu0 0.0
        %v3404 = vand.u32 %v2139, 4294901760
        %v3405 = vsub.f32 %v2139, %v3404
        %v3406 = vand.u32 %v3405, 4294901760
        %v3407 = vsub.f32 %v3405, %v3406
        %v3408 = vand.u32 %v3407, 4294901760
        %3409 = vmatpush.msra.mxu0 %v3408
        %v3410 = vand.u32 %v2135, 4294901760
        %v3411 = vsub.f32 %v2135, %v3410
        %v3412 = vand.u32 %v3411, 4294901760
        %v3413 = vsub.f32 %v3411, %v3412
        %v3414 = vand.u32 %v3413, 4294901760
        %3415 = vmatpush.msra.mxu0 %v3414
        %v3416 = vand.u32 %v2131, 4294901760
        %v3417 = vsub.f32 %v2131, %v3416
        %v3418 = vand.u32 %v3417, 4294901760
        %v3419 = vsub.f32 %v3417, %v3418
        %v3420 = vand.u32 %v3419, 4294901760
        %3421 = vmatpush.msra.mxu0 %v3420
        %v3422 = vand.u32 %v2127, 4294901760
        %v3423 = vsub.f32 %v2127, %v3422
        %v3424 = vand.u32 %v3423, 4294901760
        %v3425 = vsub.f32 %v3423, %v3424
        %v3426 = vand.u32 %v3425, 4294901760
        %3427 = vmatpush.msra.mxu0 %v3426
        %v3428 = vand.u32 %v2123, 4294901760
        %v3429 = vsub.f32 %v2123, %v3428
        %v3430 = vand.u32 %v3429, 4294901760
        %v3431 = vsub.f32 %v3429, %v3430
        %v3432 = vand.u32 %v3431, 4294901760
        %3433 = vmatpush.msra.mxu0 %v3432
        %v3434 = vand.u32 %v2119, 4294901760
        %v3435 = vsub.f32 %v2119, %v3434
        %v3436 = vand.u32 %v3435, 4294901760
        %v3437 = vsub.f32 %v3435, %v3436
        %v3438 = vand.u32 %v3437, 4294901760
        %3439 = vmatpush.msra.mxu0 %v3438
        %v3440 = vand.u32 %v2115, 4294901760
        %v3441 = vsub.f32 %v2115, %v3440
        %v3442 = vand.u32 %v3441, 4294901760
        %v3443 = vsub.f32 %v3441, %v3442
        %v3444 = vand.u32 %v3443, 4294901760
        %3445 = vmatpush.msra.mxu0 %v3444
        %v3446 = vand.u32 %v2111, 4294901760
        %v3447 = vsub.f32 %v2111, %v3446
        %v3448 = vand.u32 %v3447, 4294901760
        %v3449 = vsub.f32 %v3447, %v3448
        %v3450 = vand.u32 %v3449, 4294901760
        %3451 = vmatpush.msra.mxu0 %v3450
        %v3452 = vand.u32 %v2143, 4294901760
        %3453 = vmatmul.f32.gmra.mxu0 %v3452
        %v3454 = vpop.f32.mrf.mxu0
        %v3455 = vadd.f32 %v3378, %v3454
        %v3456 = vand.u32 %v2146, 4294901760
        %3457 = vmatmul.f32.gmra.mxu0 %v3456
        %v3458 = vpop.f32.mrf.mxu0
        %v3459 = vadd.f32 %v3386, %v3458
        %v3460 = vand.u32 %v2149, 4294901760
        %3461 = vmatmul.f32.gmra.mxu0 %v3460
        %v3462 = vpop.f32.mrf.mxu0
        %v3463 = vadd.f32 %v3394, %v3462
        %3464 = vdwg.mxu0
        %3465 = vmatpush.msra.mxu0 0.0
        %3466 = vmatpush.msra.mxu0 0.0
        %3467 = vmatpush.msra.mxu0 0.0
        %3468 = vmatpush.msra.mxu0 0.0
        %3469 = vmatpush.msra.mxu0 0.0
        %3470 = vmatpush.msra.mxu0 0.0
        %3471 = vmatpush.msra.mxu0 0.0
        %3472 = vmatpush.msra.mxu0 0.0
        %v3473 = vand.u32 %v2139, 4294901760
        %v3474 = vsub.f32 %v2139, %v3473
        %3475 = vmatpush.msra.mxu0 %v3474
        %v3476 = vand.u32 %v2135, 4294901760
        %v3477 = vsub.f32 %v2135, %v3476
        %3478 = vmatpush.msra.mxu0 %v3477
        %v3479 = vand.u32 %v2131, 4294901760
        %v3480 = vsub.f32 %v2131, %v3479
        %3481 = vmatpush.msra.mxu0 %v3480
        %v3482 = vand.u32 %v2127, 4294901760
        %v3483 = vsub.f32 %v2127, %v3482
        %3484 = vmatpush.msra.mxu0 %v3483
        %v3485 = vand.u32 %v2123, 4294901760
        %v3486 = vsub.f32 %v2123, %v3485
        %3487 = vmatpush.msra.mxu0 %v3486
        %v3488 = vand.u32 %v2119, 4294901760
        %v3489 = vsub.f32 %v2119, %v3488
        %3490 = vmatpush.msra.mxu0 %v3489
        %v3491 = vand.u32 %v2115, 4294901760
        %v3492 = vsub.f32 %v2115, %v3491
        %3493 = vmatpush.msra.mxu0 %v3492
        %v3494 = vand.u32 %v2111, 4294901760
        %v3495 = vsub.f32 %v2111, %v3494
        %3496 = vmatpush.msra.mxu0 %v3495
        %v3497 = vand.u32 %v2143, 4294901760
        %v3498 = vsub.f32 %v2143, %v3497
        %3499 = vmatmul.f32.gmra.mxu0 %v3498
        %v3500 = vpop.f32.mrf.mxu0
        %v3501 = vadd.f32 %v3455, %v3500
        %v3502 = vand.u32 %v2146, 4294901760
        %v3503 = vsub.f32 %v2146, %v3502
        %3504 = vmatmul.f32.gmra.mxu0 %v3503
        %v3505 = vpop.f32.mrf.mxu0
        %v3506 = vadd.f32 %v3459, %v3505
        %v3507 = vand.u32 %v2149, 4294901760
        %v3508 = vsub.f32 %v2149, %v3507
        %3509 = vmatmul.f32.gmra.mxu0 %v3508
        %v3510 = vpop.f32.mrf.mxu0
        %v3511 = vadd.f32 %v3463, %v3510
        %3512 = vdwg.mxu0
        %3513 = vmatpush.msra.mxu0 0.0
        %3514 = vmatpush.msra.mxu0 0.0
        %3515 = vmatpush.msra.mxu0 0.0
        %3516 = vmatpush.msra.mxu0 0.0
        %3517 = vmatpush.msra.mxu0 0.0
        %3518 = vmatpush.msra.mxu0 0.0
        %3519 = vmatpush.msra.mxu0 0.0
        %3520 = vmatpush.msra.mxu0 0.0
        %v3521 = vand.u32 %v2139, 4294901760
        %3522 = vmatpush.msra.mxu0 %v3521
        %v3523 = vand.u32 %v2135, 4294901760
        %3524 = vmatpush.msra.mxu0 %v3523
        %v3525 = vand.u32 %v2131, 4294901760
        %3526 = vmatpush.msra.mxu0 %v3525
        %v3527 = vand.u32 %v2127, 4294901760
        %3528 = vmatpush.msra.mxu0 %v3527
        %v3529 = vand.u32 %v2123, 4294901760
        %3530 = vmatpush.msra.mxu0 %v3529
        %v3531 = vand.u32 %v2119, 4294901760
        %3532 = vmatpush.msra.mxu0 %v3531
        %v3533 = vand.u32 %v2115, 4294901760
        %3534 = vmatpush.msra.mxu0 %v3533
        %v3535 = vand.u32 %v2111, 4294901760
        %3536 = vmatpush.msra.mxu0 %v3535
        %v3537 = vand.u32 %v2143, 4294901760
        %v3538 = vsub.f32 %v2143, %v3537
        %v3539 = vand.u32 %v3538, 4294901760
        %3540 = vmatmul.f32.gmra.mxu0 %v3539
        %v3541 = vpop.f32.mrf.mxu0
        %v3542 = vadd.f32 %v3501, %v3541
        %v3543 = vand.u32 %v2146, 4294901760
        %v3544 = vsub.f32 %v2146, %v3543
        %v3545 = vand.u32 %v3544, 4294901760
        %3546 = vmatmul.f32.gmra.mxu0 %v3545
        %v3547 = vpop.f32.mrf.mxu0
        %v3548 = vadd.f32 %v3506, %v3547
        %v3549 = vand.u32 %v2149, 4294901760
        %v3550 = vsub.f32 %v2149, %v3549
        %v3551 = vand.u32 %v3550, 4294901760
        %3552 = vmatmul.f32.gmra.mxu0 %v3551
        %v3553 = vpop.f32.mrf.mxu0
        %v3554 = vadd.f32 %v3511, %v3553
        %3555 = vdwg.mxu0
        %3556 = vmatpush.msra.mxu0 0.0
        %3557 = vmatpush.msra.mxu0 0.0
        %3558 = vmatpush.msra.mxu0 0.0
        %3559 = vmatpush.msra.mxu0 0.0
        %3560 = vmatpush.msra.mxu0 0.0
        %3561 = vmatpush.msra.mxu0 0.0
        %3562 = vmatpush.msra.mxu0 0.0
        %3563 = vmatpush.msra.mxu0 0.0
        %v3564 = vand.u32 %v2139, 4294901760
        %v3565 = vsub.f32 %v2139, %v3564
        %v3566 = vand.u32 %v3565, 4294901760
        %3567 = vmatpush.msra.mxu0 %v3566
        %v3568 = vand.u32 %v2135, 4294901760
        %v3569 = vsub.f32 %v2135, %v3568
        %v3570 = vand.u32 %v3569, 4294901760
        %3571 = vmatpush.msra.mxu0 %v3570
        %v3572 = vand.u32 %v2131, 4294901760
        %v3573 = vsub.f32 %v2131, %v3572
        %v3574 = vand.u32 %v3573, 4294901760
        %3575 = vmatpush.msra.mxu0 %v3574
        %v3576 = vand.u32 %v2127, 4294901760
        %v3577 = vsub.f32 %v2127, %v3576
        %v3578 = vand.u32 %v3577, 4294901760
        %3579 = vmatpush.msra.mxu0 %v3578
        %v3580 = vand.u32 %v2123, 4294901760
        %v3581 = vsub.f32 %v2123, %v3580
        %v3582 = vand.u32 %v3581, 4294901760
        %3583 = vmatpush.msra.mxu0 %v3582
        %v3584 = vand.u32 %v2119, 4294901760
        %v3585 = vsub.f32 %v2119, %v3584
        %v3586 = vand.u32 %v3585, 4294901760
        %3587 = vmatpush.msra.mxu0 %v3586
        %v3588 = vand.u32 %v2115, 4294901760
        %v3589 = vsub.f32 %v2115, %v3588
        %v3590 = vand.u32 %v3589, 4294901760
        %3591 = vmatpush.msra.mxu0 %v3590
        %v3592 = vand.u32 %v2111, 4294901760
        %v3593 = vsub.f32 %v2111, %v3592
        %v3594 = vand.u32 %v3593, 4294901760
        %3595 = vmatpush.msra.mxu0 %v3594
        %v3596 = vand.u32 %v2143, 4294901760
        %3597 = vmatmul.f32.gmra.mxu0 %v3596
        %v3598 = vpop.f32.mrf.mxu0
        %v3599 = vadd.f32 %v3542, %v3598
        %v3600 = vand.u32 %v2146, 4294901760
        %3601 = vmatmul.f32.gmra.mxu0 %v3600
        %v3602 = vpop.f32.mrf.mxu0
        %v3603 = vadd.f32 %v3548, %v3602
        %v3604 = vand.u32 %v2149, 4294901760
        %3605 = vmatmul.f32.gmra.mxu0 %v3604
        %v3606 = vpop.f32.mrf.mxu0
        %v3607 = vadd.f32 %v3554, %v3606
        %3608 = vdwg.mxu0
        %3609 = vmatpush.msra.mxu0 0.0
        %3610 = vmatpush.msra.mxu0 0.0
        %3611 = vmatpush.msra.mxu0 0.0
        %3612 = vmatpush.msra.mxu0 0.0
        %3613 = vmatpush.msra.mxu0 0.0
        %3614 = vmatpush.msra.mxu0 0.0
        %3615 = vmatpush.msra.mxu0 0.0
        %3616 = vmatpush.msra.mxu0 0.0
        %v3617 = vand.u32 %v2139, 4294901760
        %3618 = vmatpush.msra.mxu0 %v3617
        %v3619 = vand.u32 %v2135, 4294901760
        %3620 = vmatpush.msra.mxu0 %v3619
        %v3621 = vand.u32 %v2131, 4294901760
        %3622 = vmatpush.msra.mxu0 %v3621
        %v3623 = vand.u32 %v2127, 4294901760
        %3624 = vmatpush.msra.mxu0 %v3623
        %v3625 = vand.u32 %v2123, 4294901760
        %3626 = vmatpush.msra.mxu0 %v3625
        %v3627 = vand.u32 %v2119, 4294901760
        %3628 = vmatpush.msra.mxu0 %v3627
        %v3629 = vand.u32 %v2115, 4294901760
        %3630 = vmatpush.msra.mxu0 %v3629
        %v3631 = vand.u32 %v2111, 4294901760
        %3632 = vmatpush.msra.mxu0 %v3631
        %v3633 = vand.u32 %v2143, 4294901760
        %3634 = vmatmul.f32.gmra.mxu0 %v3633
        %v3635 = vpop.f32.mrf.mxu0
        %v3636 = vadd.f32 %v3599, %v3635
        %v3637 = vand.u32 %v2146, 4294901760
        %3638 = vmatmul.f32.gmra.mxu0 %v3637
        %v3639 = vpop.f32.mrf.mxu0
        %v3640 = vadd.f32 %v3603, %v3639
        %v3641 = vand.u32 %v2149, 4294901760
        %3642 = vmatmul.f32.gmra.mxu0 %v3641
        %v3643 = vpop.f32.mrf.mxu0
        %v3644 = vadd.f32 %v3607, %v3643
        %3645 = vdwg.mxu0
        %v3646 = vmul.f32 %v2440, %v2440
        %v3647 = vmul.f32 %v2444, %v2444
        %v3648 = vmul.f32 %v2448, %v2448
        %v3649 = vmul.f32 %v2739, %v2739
        %v3650 = vmul.f32 %v2743, %v2743
        %v3651 = vmul.f32 %v2747, %v2747
        %v3652 = vmul.f32 %v2440, %v2739
        %v3653 = vmul.f32 %v2444, %v2743
        %v3654 = vmul.f32 %v2448, %v2747
        %v3655 = vsub.f32 %v3636, %v3652
        %v3656 = vsub.f32 %v3640, %v3653
        %v3657 = vsub.f32 %v3644, %v3654
        %v3658 = vmul.f32 %v3655, 2.0
        %v3659 = vmul.f32 %v3656, 2.0
        %v3660 = vmul.f32 %v3657, 2.0
        %v3661 = vstv %s302
        %v3662 = vadd.f32 %v3658, %v3661
        %v3663 = vadd.f32 %v3659, %v3661
        %v3664 = vadd.f32 %v3660, %v3661
        %v3665 = vsub.f32 %v3038, %v3646
        %v3666 = vsub.f32 %v3042, %v3647
        %v3667 = vsub.f32 %v3046, %v3648
        %v3668 = vsub.f32 %v3337, %v3649
        %v3669 = vsub.f32 %v3341, %v3650
        %v3670 = vsub.f32 %v3345, %v3651
        %v3671 = vadd.f32 %v3665, %v3668
        %v3672 = vadd.f32 %v3666, %v3669
        %v3673 = vadd.f32 %v3667, %v3670
        %v3674 = vadd.f32 %v3671, %v3661
        %v3675 = vadd.f32 %v3672, %v3661
        %v3676 = vadd.f32 %v3673, %v3661
        %v3677 = vmul.f32 %v3652, 2.0
        %v3678 = vmul.f32 %v3653, 2.0
        %v3679 = vmul.f32 %v3654, 2.0
        %v3680 = vstv %s301
        %v3681 = vadd.f32 %v3677, %v3680
        %v3682 = vadd.f32 %v3678, %v3680
        %v3683 = vadd.f32 %v3679, %v3680
        %v3684 = vmul.f32 %v3681, %v3662
        %v3685 = vmul.f32 %v3682, %v3663
        %v3686 = vmul.f32 %v3683, %v3664
        %v3687 = vadd.f32 %v3646, %v3649
        %v3688 = vadd.f32 %v3647, %v3650
        %v3689 = vadd.f32 %v3648, %v3651
        %v3690 = vadd.f32 %v3687, %v3680
        %v3691 = vadd.f32 %v3688, %v3680
        %v3692 = vadd.f32 %v3689, %v3680
        %v3693 = vmul.f32 %v3690, %v3674
        %v3694 = vmul.f32 %v3691, %v3675
        %v3695 = vmul.f32 %v3692, %v3676
        %v3696 = vrcp.pop %v3693
        %v3697 = vmul.f32 %v3693, %v3696
        %v3698 = vsub.f32 1.0, %v3697
        %v3699 = vmul.f32 %v3696, %v3698
        %v3700 = vadd.f32 %v3696, %v3699
        %vm3701 = vweird.f32 %v3693
        %vm3702 = vweird.f32 %v3696
        %vm3703 = vmor %vm3701, %vm3702
        %v3704 = vsel %vm3703, %v3696, %v3700
        %v3705 = vand.u32 2147483647, %v3693
        %vm3706 = vcmp.eq.f32.partialorder %v3705, 8.507059e+37
        %v3707 = vand.u32 %v3693, 2147483648
        %v3708 = vor.u32 1.1754944e-38, %v3707
        %v3709 = vsel %vm3706, %v3708, %v3704
        %v3710 = vmul.f32 %v3684, %v3709
        %v3711 = vrcp.pop %v3694
        %v3712 = vmul.f32 %v3694, %v3711
        %v3713 = vsub.f32 1.0, %v3712
        %v3714 = vmul.f32 %v3711, %v3713
        %v3715 = vadd.f32 %v3711, %v3714
        %vm3716 = vweird.f32 %v3694
        %vm3717 = vweird.f32 %v3711
        %vm3718 = vmor %vm3716, %vm3717
        %v3719 = vsel %vm3718, %v3711, %v3715
        %v3720 = vand.u32 2147483647, %v3694
        %vm3721 = vcmp.eq.f32.partialorder %v3720, 8.507059e+37
        %v3722 = vand.u32 %v3694, 2147483648
        %v3723 = vor.u32 1.1754944e-38, %v3722
        %v3724 = vsel %vm3721, %v3723, %v3719
        %v3725 = vmul.f32 %v3685, %v3724
        %v3726 = vrcp.pop %v3695
        %v3727 = vmul.f32 %v3695, %v3726
        %v3728 = vsub.f32 1.0, %v3727
        %v3729 = vmul.f32 %v3726, %v3728
        %v3730 = vadd.f32 %v3726, %v3729
        %vm3731 = vweird.f32 %v3695
        %vm3732 = vweird.f32 %v3726
        %vm3733 = vmor %vm3731, %vm3732
        %v3734 = vsel %vm3733, %v3726, %v3730
        %v3735 = vand.u32 2147483647, %v3695
        %vm3736 = vcmp.eq.f32.partialorder %v3735, 8.507059e+37
        %v3737 = vand.u32 %v3695, 2147483648
        %v3738 = vor.u32 1.1754944e-38, %v3737
        %v3739 = vsel %vm3736, %v3738, %v3734
        %v3740 = vmul.f32 %v3686, %v3739
        %v3741 = vlaneseq
        %v3742 = vand.u32 %v3741, 127
        %vm3743 = vcmp.lt.s32.totalorder %v3742, 6
        %v3744 = vsel %vm3743, %v3710, 0.0
        %v3745 = vsel %vm3743, %v3725, 0.0
        %v3746 = vsel %vm3743, %v3740, 0.0
        %v3747 = vadd.f32 %v3744, %v3745
        %v3748 = vadd.f32 %v3747, %v3746
        %3749 = vadd.xlane.f32.xlu0 %v3748
        %v3750 = vpop.xlane.xlu0 %3749
        %v3751 = vrot.slane %v3750, 4
        %v3752 = vadd.f32 %v3750, %v3751
        %v3753 = vrot.slane %v3752, 2
        %v3754 = vadd.f32 %v3752, %v3753
        %v3755 = vrot.slane %v3754, 1
        %v3756 = vadd.f32 %v3754, %v3755
        %s3757 = vtos %v3756
        %v3758 = vstv %s3757
        %vm3759 = vcmask 0
        %3760 = vst.msk [vmem:[%s300] sm:$0x1] %vm3759, %v3758
        %p3761 = scmp.lt.s32.totalorder %s21, 1
        %s3762 = scalar_select %p3761, %s21, 1
        %s3763 = scalar_lea.vmem %s5, %s3762
        // Predicated region
        $region53: #{ssim_pallas.1} parent=39 // pred_check
          %p3764 = pneg %p154
        $region54: #{ssim_pallas.1} parent=39 // pred_check_branch
          %3766 = sbr.rel (%p3764) target = $region56
        $region55: #{ssim_pallas.1} parent=39 // pred_region
          _
        $region56: #{ssim_pallas.1} parent=39 // pred_fallthru
          _
      $region40: #{ssim_pallas.1} parent=5 // pred_fallthru
        _
      %p3767 = scmp.le.s32.totalorder 2, %s16
      // Predicated region
      $region57: #{ssim_pallas.1} parent=5 // pred_check
        %p3768 = pneg %p3767
      $region58: #{ssim_pallas.1} parent=5 // pred_check_branch
        %3770 = sbr.rel (%p3768) target = $region60
      $region59: #{ssim_pallas.1} parent=5 // pred_region
        %s3771 = ssub.s32 %s16, 2
        // Predicated region
        $region61: #{ssim_pallas.1} parent=59 // pred_check
          %p3772 = pneg %p160
        $region62: #{ssim_pallas.1} parent=59 // pred_check_branch
          %3774 = sbr.rel (%p3772) target = $region64
        $region63: #{ssim_pallas.1} parent=59 // pred_region
          %p3775 = scmp.lt.s32.totalorder %s22, 1
          %s3776 = scalar_select %p3775, %s22, 1
          %s3777 = scalar_lea.vmem %s5, %s3776
        $region64: #{ssim_pallas.1} parent=59 // pred_fallthru
          _
      $region60: #{ssim_pallas.1} parent=5 // pred_fallthru
        _
    $region6: #{ssim_pallas.1} parent=1 // loop_footer
      %s20 = sadd.s32 1, %s16
    $region7: #{ssim_pallas.1} parent=1 // loop_footer_branch
      %15 = sbr.rel target = $region3
    $region8: #{ssim_pallas.1} parent=1 // loop_exit
      _
    %3778 = vsyncpa [#allocation4], 1
    %s3779 = scalar_lea.sflag [#allocation4], 1
    %3780 = vsyncpa %s3779, 1
    %3781 = vsyncpa [#allocation8], 1
    %s3782 = scalar_lea.sflag [#allocation8], 1
    %3783 = vsyncpa %s3782, 1
    %3784 = vsyncpa [#allocation5], 1
    %s3785 = scalar_lea.sflag [#allocation5], 1
    %3786 = vsyncpa %s3785, 1

</llo_original>
